<compile_context>
chip_gen: v7x
topology: tpu7x:2x2x1
jax: 0.10.0
libtpu: 0.0.40
codegen_flags: <defaults>
</compile_context>

<pallas_src>
import jax
import jax.numpy as jnp
import numpy as np
from jax.experimental import pallas as pl
from jax.experimental.pallas import tpu as pltpu

# Per-layer output widths, in kernel execution order:
#   CNNblock conv0 (256), CNNblock conv1 (64), fused 1x1 entry convs (64),
#   level-1 block (48), level-2 block (32), level-3 conv (16).
# All per-channel offsets (conv bias + BN beta/mean folded) are packed into a
# single (1, 480) f32 vector per stream and sliced in-kernel at these splits.
_WIDTHS = (256, 64, 64, 48, 32, 16)
_SPLITS = tuple(int(v) for v in np.cumsum((0,) + _WIDTHS))   # 0..480


# -----------------------------------------------------------------------------
# In-kernel helpers
# -----------------------------------------------------------------------------
def _shift_rows(y, d):
    """out[:, l, :] = y[:, l + d, :] for valid rows, zero outside [0, L)."""
    if d == 0:
        return y
    n, l, c = y.shape
    z = jnp.zeros((n, abs(d), c), y.dtype)
    if d > 0:
        return jnp.concatenate([y[:, d:, :], z], axis=1)
    return jnp.concatenate([z, y[:, :l + d, :]], axis=1)


def _conv_taps(x2d, w_ref, k_size, n, l, offset):
    """Conv1d('same') + folded bias/BN + ReLU via per-tap MXU accumulation.

    x2d: (n*l, cin) bf16.  w_ref: (1, k_size*cin, cout) bf16 (BN scale folded).
    The 'same' boundary is handled by shifting the small per-tap OUTPUT with a
    zero-pad concat — no im2col slab of the wide input is ever materialized.
    """
    cin = x2d.shape[-1]
    cout = w_ref.shape[-1]
    pad = (k_size - 1) // 2
    acc = jnp.zeros((n, l, cout), jnp.float32)
    for k in range(k_size):
        y = jnp.dot(x2d, w_ref[0, k * cin:(k + 1) * cin, :],
                    preferred_element_type=jnp.float32)
        acc = acc + _shift_rows(y.reshape(n, l, cout), k - pad)
    return jnp.maximum(acc + offset, 0.0)


def _conv_level(branches, w_ref, offset):
    """Several independent 16-ch Conv1d('same') fused into ONE block-diagonal
    MXU matmul.  branches: [(x (n,l,cb) f32, K), ...];
    w_ref: (1, sum_b K_b*cb, sum_b cout_b) bf16.  The im2col operand is built
    in registers (shift + lane concat), cast to bf16 once, one dot."""
    n, l, _ = branches[0][0].shape
    cols = []
    for xb, k_size in branches:
        pad = (k_size - 1) // 2
        cols.extend(_shift_rows(xb, k - pad) for k in range(k_size))
    xi = jnp.concatenate(cols, axis=-1).astype(jnp.bfloat16).reshape(n * l, -1)
    y = jnp.dot(xi, w_ref[0], preferred_element_type=jnp.float32)
    return jnp.maximum(y.reshape(n, l, -1) + offset, 0.0)


# -----------------------------------------------------------------------------
# Fused Pallas kernel: whole Net3 forward for ONE stream per grid step.
# -----------------------------------------------------------------------------
def _net3_kernel(x_ref, w0_ref, w1_ref, w2_ref, wl1_ref, wl2_ref, wl3_ref,
                 off_ref, o_ref):
    _, n, l, _ = x_ref.shape
    x = x_ref[0]                                   # (N, L, 1024) bf16
    off = off_ref[0]                               # (1, 480) f32
    s0, s1, s2, s3, s4, s5, s6 = _SPLITS

    # ---- CNNblock ----  (dropout == identity at inference)
    h = _conv_taps(x.reshape(n * l, 1024), w0_ref, 3, n, l, off[:, s0:s1])
    h = _conv_taps(h.astype(jnp.bfloat16).reshape(n * l, 256), w1_ref, 3, n, l,
                   off[:, s1:s2])                  # (N, L, 64) f32, residual src

    # ---- multiscale: conv0 | conv1[0] | conv2[0] | conv3[0] fused 1x1 ----
    hb = h.astype(jnp.bfloat16).reshape(n * l, 64)
    e = jnp.dot(hb, w2_ref[0], preferred_element_type=jnp.float32)
    e = jnp.maximum(e.reshape(n, l, 64) + off[:, s2:s3], 0.0)

    # Branch chains fused by depth level (block-diagonal weights):
    #   lvl1 cols: [conv1[1] | conv2[1] | conv3[1]]  (K = 3, 5, 7)
    #   lvl2 cols: [conv2[2] | conv3[2]]             (K = 5, 7)
    #   lvl3     :  conv3[3]                          (K = 7)
    lvl1 = _conv_level([(e[:, :, 16:32], 3), (e[:, :, 32:48], 5),
                        (e[:, :, 48:64], 7)], wl1_ref, off[:, s3:s4])
    lvl2 = _conv_level([(lvl1[:, :, 16:32], 5), (lvl1[:, :, 32:48], 7)],
                       wl2_ref, off[:, s4:s5])
    lvl3 = _conv_level([(lvl2[:, :, 16:32], 7)], wl3_ref, off[:, s5:s6])

    # torch.cat([x0, x1, x2, x3], ch) + residual; ONE lane-dense store.
    o_ref[0] = jnp.concatenate(
        [e[:, :, 0:16], lvl1[:, :, 0:16], lvl2[:, :, 0:16], lvl3], axis=-1) + h


# -----------------------------------------------------------------------------
# Deterministic synthetic parameters (bias/BN pre-folded, BN scale in weights)
# -----------------------------------------------------------------------------
def _init_conv(key, cin, cout, k_size, has_bias, has_bn):
    kw, kb, kg, kbe, km, kv = jax.random.split(key, 6)
    w = jax.random.normal(kw, (k_size, cin, cout), jnp.float32)
    w = w / jnp.sqrt(float(cin * k_size))
    bias = (0.01 * jax.random.normal(kb, (cout,), jnp.float32)
            if has_bias else jnp.zeros((cout,), jnp.float32))
    if has_bn:
        gamma = 1.0 + 0.1 * jax.random.normal(kg, (cout,), jnp.float32)
        beta = 0.1 * jax.random.normal(kbe, (cout,), jnp.float32)
        mean = 0.05 * jax.random.normal(km, (cout,), jnp.float32)
        var = 1.0 + 0.1 * jnp.abs(jax.random.normal(kv, (cout,), jnp.float32))
        scale = gamma / jnp.sqrt(var + 1e-5)
        offset = beta + (bias - mean) * scale
    else:
        scale = jnp.ones((cout,), jnp.float32)
        offset = bias
    w_folded = (w * scale).reshape(k_size * cin, cout)   # im2col layout, scale folded
    return w_folded, offset, k_size


def _block_diag(convs):
    """Block-diagonal weight / concatenated offsets for independent convs."""
    ws = [c[0] for c in convs]
    rows = sum(w.shape[0] for w in ws)
    cols = sum(w.shape[1] for w in ws)
    bw = jnp.zeros((rows, cols), jnp.float32)
    r = c = 0
    for w in ws:
        bw = bw.at[r:r + w.shape[0], c:c + w.shape[1]].set(w)
        r += w.shape[0]
        c += w.shape[1]
    return bw, jnp.concatenate([cv[1] for cv in convs])


def _init_stream(key):
    ks = jax.random.split(key, 12)
    raw = {
        "c0":  _init_conv(ks[0], 1024, 256, 3, True, True),   # CNNblock conv0
        "c1":  _init_conv(ks[1], 256, 64, 3, True, True),     # CNNblock conv1
        "m0":  _init_conv(ks[2], 64, 16, 1, False, True),     # multiscale conv0
        "m1a": _init_conv(ks[3], 64, 16, 1, False, False),    # conv1[0] (bn=False)
        "m1b": _init_conv(ks[4], 16, 16, 3, False, True),     # conv1[1]
        "m2a": _init_conv(ks[5], 64, 16, 1, False, True),     # conv2[0]
        "m2b": _init_conv(ks[6], 16, 16, 5, False, True),     # conv2[1]
        "m2c": _init_conv(ks[7], 16, 16, 5, False, True),     # conv2[2]
        "m3a": _init_conv(ks[8], 64, 16, 1, False, True),     # conv3[0]
        "m3b": _init_conv(ks[9], 16, 16, 7, False, True),     # conv3[1]
        "m3c": _init_conv(ks[10], 16, 16, 7, False, True),    # conv3[2]
        "m3d": _init_conv(ks[11], 16, 16, 7, False, True),    # conv3[3]
    }
    # Fuse the four 1x1 branch-entry convs (same 64-ch input) into one matmul.
    w2 = jnp.concatenate([raw[k][0] for k in ("m0", "m1a", "m2a", "m3a")], axis=1)
    o2 = jnp.concatenate([raw[k][1] for k in ("m0", "m1a", "m2a", "m3a")])
    # Fuse the independent 16-ch branch convs by depth level (block-diagonal).
    wl1, ol1 = _block_diag([raw["m1b"], raw["m2b"], raw["m3b"]])
    wl2, ol2 = _block_diag([raw["m2c"], raw["m3c"]])
    wl3, ol3 = raw["m3d"][0], raw["m3d"][1]
    off = jnp.concatenate([raw["c0"][1], raw["c1"][1], o2, ol1, ol2, ol3])
    fused = dict(w0=raw["c0"][0], w1=raw["c1"][0], w2=w2,
                 wl1=wl1, wl2=wl2, wl3=wl3, off=off.reshape(1, -1))
    return fused, raw


def init_net3(key):
    """Stacked (s2v, lm) params: bf16 scale-folded weights + packed f32 offsets.
    Also returns the raw per-conv params for the pure-JAX reference."""
    k_s2v, k_lm = jax.random.split(key)
    f0, raw0 = _init_stream(k_s2v)
    f1, raw1 = _init_stream(k_lm)
    params = {k: jnp.stack([f0[k], f1[k]]).astype(jnp.bfloat16)
              for k in ("w0", "w1", "w2", "wl1", "wl2", "wl3")}
    params["off"] = jnp.stack([f0["off"], f1["off"]])        # (2, 1, 480) f32
    return params, (raw0, raw1)


# -----------------------------------------------------------------------------
# Forward pass: one fused pallas_call for the whole CNN (both streams)
# -----------------------------------------------------------------------------
def net3_forward(params, s2v_embedding, lm_embedding):
    """Inputs in PyTorch NCL layout (N, 1024, L); returns (N, 128, L) f32."""
    x = jnp.stack([s2v_embedding, lm_embedding], axis=0)        # (2, N, 1024, L)
    x = jnp.transpose(x, (0, 1, 3, 2)).astype(jnp.bfloat16)     # (2, N, L, 1024)
    _, n, l, c = x.shape

    w_names = ("w0", "w1", "w2", "wl1", "wl2", "wl3", "off")
    weights = [params[k] for k in w_names]

    # v7x has 2 TensorCores: put the two independent streams on the two cores.
    kind = jax.devices()[0].device_kind.lower()
    is_v7 = ("v7" in kind) or ("7x" in kind)
    stream_sem = pltpu.CORE_PARALLEL if is_v7 else "parallel"

    out = pl.pallas_call(
        _net3_kernel,
        out_shape=jax.ShapeDtypeStruct((2, n, l, 64), jnp.float32),
        grid=(2,),                                   # one grid step per stream
        in_specs=[pl.BlockSpec((1, n, l, c), lambda s: (s, 0, 0, 0))] +
                 [pl.BlockSpec((1,) + w.shape[1:], lambda s: (s, 0, 0))
                  for w in weights],
        out_specs=pl.BlockSpec((1, n, l, 64), lambda s: (s, 0, 0, 0)),
        compiler_params=pltpu.CompilerParams(
            dimension_semantics=(stream_sem,),
            # ~3.5 MiB live per step at these shapes; explicit headroom while
            # staying under v7x's 64 MiB physical VMEM.
            vmem_limit_bytes=(48 if is_v7 else 64) * 1024 * 1024),
    )(x, *weights)

    # torch.cat([s2v_out, lm_out], dim=1), back to NCL layout.
    y = jnp.concatenate([out[0], out[1]], axis=-1)               # (N, L, 128)
    return jnp.transpose(y, (0, 2, 1))                           # (N, 128, L)


# -----------------------------------------------------------------------------
# Pure-JAX reference (bf16-rounded operands, f32 accumulation) for validation
# -----------------------------------------------------------------------------
def _conv_same_ref(x, w, off, k_size):
    x = x.astype(jnp.bfloat16).astype(jnp.float32)
    w = w.astype(jnp.bfloat16).astype(jnp.float32)
    n, l, cin = x.shape
    pad = (k_size - 1) // 2
    xp = jnp.pad(x, ((0, 0), (pad, pad), (0, 0)))
    acc = jnp.zeros((n, l, w.shape[1]), jnp.float32)
    for k in range(k_size):
        acc = acc + jnp.einsum("nlc,co->nlo", xp[:, k:k + l, :],
                               w[k * cin:(k + 1) * cin],
                               precision=jax.lax.Precision.HIGHEST)
    return jnp.maximum(acc + off, 0.0)


def _stream_ref(raw, x):
    h = _conv_same_ref(x, *raw["c0"])
    h = _conv_same_ref(h, *raw["c1"])
    x0 = _conv_same_ref(h, *raw["m0"])
    x1 = _conv_same_ref(_conv_same_ref(h, *raw["m1a"]), *raw["m1b"])
    t = _conv_same_ref(_conv_same_ref(h, *raw["m2a"]), *raw["m2b"])
    x2 = _conv_same_ref(t, *raw["m2c"])
    t = _conv_same_ref(_conv_same_ref(h, *raw["m3a"]), *raw["m3b"])
    t = _conv_same_ref(t, *raw["m3c"])
    x3 = _conv_same_ref(t, *raw["m3d"])
    return jnp.concatenate([x0, x1, x2, x3], axis=-1) + h


def net3_ref(raw_streams, s2v_embedding, lm_embedding):
    x = jnp.stack([s2v_embedding, lm_embedding], axis=0)
    x = jnp.transpose(x, (0, 1, 3, 2))
    y = jnp.concatenate([_stream_ref(raw_streams[0], x[0]),
                         _stream_ref(raw_streams[1], x[1])], axis=-1)
    return jnp.transpose(y, (0, 2, 1))


# -----------------------------------------------------------------------------
if __name__ == "__main__":
    key = jax.random.PRNGKey(0)
    kp, kx0, kx1 = jax.random.split(key, 3)

    N, C_IN, L = 2, 1024, 16          # C_IN=1024 is fixed by CNNblock.conv0
    params, raw = init_net3(kp)
    s2v = jax.random.normal(kx0, (N, C_IN, L), jnp.float32)
    lm = jax.random.normal(kx1, (N, C_IN, L), jnp.float32)

    fwd = jax.jit(net3_forward)
    out = jax.block_until_ready(fwd(params, s2v, lm))
    assert out.shape == (N, 128, L), out.shape
    assert bool(jnp.isfinite(out).all())

    # Tolerance-based check against a pure-JAX reference (same bf16 operand
    # rounding, f32 accumulation -> only summation-order differences remain).
    ref = net3_ref(raw, s2v, lm)
    np.testing.assert_allclose(np.asarray(out), np.asarray(ref),
                               atol=2e-2, rtol=2e-2)

    print("KERNEL_OK")
</pallas_src>

<mosaic_0001>
module attributes {stable_mosaic.version = 11 : i64} {
  func.func @_net3_kernel(%arg0: i32, %arg1: memref<1x2x16x1024xbf16, #tpu.memory_space<vmem>>, %arg2: memref<1x3072x256xbf16, #tpu.memory_space<vmem>>, %arg3: memref<1x768x64xbf16, #tpu.memory_space<vmem>>, %arg4: memref<1x64x64xbf16, #tpu.memory_space<vmem>>, %arg5: memref<1x240x48xbf16, #tpu.memory_space<vmem>>, %arg6: memref<1x192x32xbf16, #tpu.memory_space<vmem>>, %arg7: memref<1x112x16xbf16, #tpu.memory_space<vmem>>, %arg8: memref<1x1x480xf32, #tpu.memory_space<vmem>>, %arg9: memref<1x2x16x64xf32, #tpu.memory_space<vmem>>) attributes {dimension_semantics = [#tpu.dimension_semantics<parallel>], iteration_bounds = array<i64: 2>, scalar_prefetch = 0 : i64, scratch_operands = 0 : i64, tpu.core_type = #tpu.core_type<tc>, window_params = [{transform_indices = @transform_0, window_bounds = array<i64: 1, 2, 16, 1024>}, {transform_indices = @transform_1, window_bounds = array<i64: 1, 3072, 256>}, {transform_indices = @transform_2, window_bounds = array<i64: 1, 768, 64>}, {transform_indices = @transform_3, window_bounds = array<i64: 1, 64, 64>}, {transform_indices = @transform_4, window_bounds = array<i64: 1, 240, 48>}, {transform_indices = @transform_5, window_bounds = array<i64: 1, 192, 32>}, {transform_indices = @transform_6, window_bounds = array<i64: 1, 112, 16>}, {transform_indices = @transform_7, window_bounds = array<i64: 1, 1, 480>}, {transform_indices = @transform_8, window_bounds = array<i64: 1, 2, 16, 64>}]} {
    %c0 = arith.constant 0 : index
    %c0_0 = arith.constant 0 : index
    %c0_1 = arith.constant 0 : index
    %c0_2 = arith.constant 0 : index
    %0 = vector.load %arg1[%c0, %c0_0, %c0_1, %c0_2] : memref<1x2x16x1024xbf16, #tpu.memory_space<vmem>>, vector<1x2x16x1024xbf16>
    %1 = vector.shape_cast %0 : vector<1x2x16x1024xbf16> to vector<2x16x1024xbf16>
    %c0_3 = arith.constant 0 : index
    %c0_4 = arith.constant 0 : index
    %c0_5 = arith.constant 0 : index
    %2 = vector.load %arg8[%c0_3, %c0_4, %c0_5] : memref<1x1x480xf32, #tpu.memory_space<vmem>>, vector<1x1x480xf32>
    %3 = vector.shape_cast %2 : vector<1x1x480xf32> to vector<1x480xf32>
    %4 = vector.shape_cast %1 : vector<2x16x1024xbf16> to vector<32x1024xbf16>
    %5 = vector.extract_strided_slice %3 {offsets = [0, 0], sizes = [1, 256], strides = [1, 1]} : vector<1x480xf32> to vector<1x256xf32>
    %cst = arith.constant 0.000000e+00 : f32
    %6 = vector.broadcast %cst : f32 to vector<2x16x256xf32>
    %c0_6 = arith.constant 0 : index
    %c0_7 = arith.constant 0 : index
    %c0_8 = arith.constant 0 : index
    %7 = vector.load %arg2[%c0_6, %c0_7, %c0_8] : memref<1x3072x256xbf16, #tpu.memory_space<vmem>>, vector<1x1024x256xbf16>
    %8 = vector.shape_cast %7 : vector<1x1024x256xbf16> to vector<1024x256xbf16>
    %cst_9 = arith.constant dense<0.000000e+00> : vector<32x256xf32>
    %9 = tpu.matmul %4, %8, %cst_9 {dimension_numbers = #tpu.dot_dimension_numbers<[1], [0], [0], [1], [0, 0, 1, 1], [], []>} : vector<32x1024xbf16>, vector<1024x256xbf16>, vector<32x256xf32> -> vector<32x256xf32>
    %10 = vector.shape_cast %9 : vector<32x256xf32> to vector<2x16x256xf32>
    %cst_10 = arith.constant 0.000000e+00 : f32
    %11 = vector.broadcast %cst_10 : f32 to vector<2x1x256xf32>
    %12 = vector.extract_strided_slice %10 {offsets = [0, 0, 0], sizes = [2, 15, 256], strides = [1, 1, 1]} : vector<2x16x256xf32> to vector<2x15x256xf32>
    %13 = tpu.concatenate %11, %12 in 1 : vector<2x1x256xf32>, vector<2x15x256xf32> -> vector<2x16x256xf32>
    %14 = arith.addf %6, %13 : vector<2x16x256xf32>
    %c0_11 = arith.constant 0 : index
    %c1024 = arith.constant 1024 : index
    %c0_12 = arith.constant 0 : index
    %15 = vector.load %arg2[%c0_11, %c1024, %c0_12] : memref<1x3072x256xbf16, #tpu.memory_space<vmem>>, vector<1x1024x256xbf16>
    %16 = vector.shape_cast %15 : vector<1x1024x256xbf16> to vector<1024x256xbf16>
    %cst_13 = arith.constant dense<0.000000e+00> : vector<32x256xf32>
    %17 = tpu.matmul %4, %16, %cst_13 {dimension_numbers = #tpu.dot_dimension_numbers<[1], [0], [0], [1], [0, 0, 1, 1], [], []>} : vector<32x1024xbf16>, vector<1024x256xbf16>, vector<32x256xf32> -> vector<32x256xf32>
    %18 = vector.shape_cast %17 : vector<32x256xf32> to vector<2x16x256xf32>
    %19 = arith.addf %14, %18 : vector<2x16x256xf32>
    %c0_14 = arith.constant 0 : index
    %c2048 = arith.constant 2048 : index
    %c0_15 = arith.constant 0 : index
    %20 = vector.load %arg2[%c0_14, %c2048, %c0_15] : memref<1x3072x256xbf16, #tpu.memory_space<vmem>>, vector<1x1024x256xbf16>
    %21 = vector.shape_cast %20 : vector<1x1024x256xbf16> to vector<1024x256xbf16>
    %cst_16 = arith.constant dense<0.000000e+00> : vector<32x256xf32>
    %22 = tpu.matmul %4, %21, %cst_16 {dimension_numbers = #tpu.dot_dimension_numbers<[1], [0], [0], [1], [0, 0, 1, 1], [], []>} : vector<32x1024xbf16>, vector<1024x256xbf16>, vector<32x256xf32> -> vector<32x256xf32>
    %23 = vector.shape_cast %22 : vector<32x256xf32> to vector<2x16x256xf32>
    %cst_17 = arith.constant 0.000000e+00 : f32
    %24 = vector.broadcast %cst_17 : f32 to vector<2x1x256xf32>
    %25 = vector.extract_strided_slice %23 {offsets = [0, 1, 0], sizes = [2, 15, 256], strides = [1, 1, 1]} : vector<2x16x256xf32> to vector<2x15x256xf32>
    %26 = tpu.concatenate %25, %24 in 1 : vector<2x15x256xf32>, vector<2x1x256xf32> -> vector<2x16x256xf32>
    %27 = arith.addf %19, %26 : vector<2x16x256xf32>
    %28 = vector.shape_cast %5 : vector<1x256xf32> to vector<1x1x256xf32>
    %29 = vector.broadcast %28 : vector<1x1x256xf32> to vector<2x16x256xf32>
    %30 = arith.addf %27, %29 : vector<2x16x256xf32>
    %cst_18 = arith.constant 0.000000e+00 : f32
    %31 = vector.broadcast %cst_18 : f32 to vector<2x16x256xf32>
    %32 = arith.maximumf %30, %31 : vector<2x16x256xf32>
    %33 = arith.truncf %32 : vector<2x16x256xf32> to vector<2x16x256xbf16>
    %34 = vector.shape_cast %33 : vector<2x16x256xbf16> to vector<32x256xbf16>
    %35 = vector.extract_strided_slice %3 {offsets = [0, 256], sizes = [1, 64], strides = [1, 1]} : vector<1x480xf32> to vector<1x64xf32>
    %cst_19 = arith.constant 0.000000e+00 : f32
    %36 = vector.broadcast %cst_19 : f32 to vector<2x16x64xf32>
    %c0_20 = arith.constant 0 : index
    %c0_21 = arith.constant 0 : index
    %c0_22 = arith.constant 0 : index
    %37 = vector.load %arg3[%c0_20, %c0_21, %c0_22] : memref<1x768x64xbf16, #tpu.memory_space<vmem>>, vector<1x256x64xbf16>
    %38 = vector.shape_cast %37 : vector<1x256x64xbf16> to vector<256x64xbf16>
    %cst_23 = arith.constant dense<0.000000e+00> : vector<32x64xf32>
    %39 = tpu.matmul %34, %38, %cst_23 {dimension_numbers = #tpu.dot_dimension_numbers<[1], [0], [0], [1], [0, 0, 1, 1], [], []>} : vector<32x256xbf16>, vector<256x64xbf16>, vector<32x64xf32> -> vector<32x64xf32>
    %40 = vector.shape_cast %39 : vector<32x64xf32> to vector<2x16x64xf32>
    %cst_24 = arith.constant 0.000000e+00 : f32
    %41 = vector.broadcast %cst_24 : f32 to vector<2x1x64xf32>
    %42 = vector.extract_strided_slice %40 {offsets = [0, 0, 0], sizes = [2, 15, 64], strides = [1, 1, 1]} : vector<2x16x64xf32> to vector<2x15x64xf32>
    %43 = tpu.concatenate %41, %42 in 1 : vector<2x1x64xf32>, vector<2x15x64xf32> -> vector<2x16x64xf32>
    %44 = arith.addf %36, %43 : vector<2x16x64xf32>
    %c0_25 = arith.constant 0 : index
    %c256 = arith.constant 256 : index
    %c0_26 = arith.constant 0 : index
    %45 = vector.load %arg3[%c0_25, %c256, %c0_26] : memref<1x768x64xbf16, #tpu.memory_space<vmem>>, vector<1x256x64xbf16>
    %46 = vector.shape_cast %45 : vector<1x256x64xbf16> to vector<256x64xbf16>
    %cst_27 = arith.constant dense<0.000000e+00> : vector<32x64xf32>
    %47 = tpu.matmul %34, %46, %cst_27 {dimension_numbers = #tpu.dot_dimension_numbers<[1], [0], [0], [1], [0, 0, 1, 1], [], []>} : vector<32x256xbf16>, vector<256x64xbf16>, vector<32x64xf32> -> vector<32x64xf32>
    %48 = vector.shape_cast %47 : vector<32x64xf32> to vector<2x16x64xf32>
    %49 = arith.addf %44, %48 : vector<2x16x64xf32>
    %c0_28 = arith.constant 0 : index
    %c512 = arith.constant 512 : index
    %c0_29 = arith.constant 0 : index
    %50 = vector.load %arg3[%c0_28, %c512, %c0_29] : memref<1x768x64xbf16, #tpu.memory_space<vmem>>, vector<1x256x64xbf16>
    %51 = vector.shape_cast %50 : vector<1x256x64xbf16> to vector<256x64xbf16>
    %cst_30 = arith.constant dense<0.000000e+00> : vector<32x64xf32>
    %52 = tpu.matmul %34, %51, %cst_30 {dimension_numbers = #tpu.dot_dimension_numbers<[1], [0], [0], [1], [0, 0, 1, 1], [], []>} : vector<32x256xbf16>, vector<256x64xbf16>, vector<32x64xf32> -> vector<32x64xf32>
    %53 = vector.shape_cast %52 : vector<32x64xf32> to vector<2x16x64xf32>
    %cst_31 = arith.constant 0.000000e+00 : f32
    %54 = vector.broadcast %cst_31 : f32 to vector<2x1x64xf32>
    %55 = vector.extract_strided_slice %53 {offsets = [0, 1, 0], sizes = [2, 15, 64], strides = [1, 1, 1]} : vector<2x16x64xf32> to vector<2x15x64xf32>
    %56 = tpu.concatenate %55, %54 in 1 : vector<2x15x64xf32>, vector<2x1x64xf32> -> vector<2x16x64xf32>
    %57 = arith.addf %49, %56 : vector<2x16x64xf32>
    %58 = vector.shape_cast %35 : vector<1x64xf32> to vector<1x1x64xf32>
    %59 = vector.broadcast %58 : vector<1x1x64xf32> to vector<2x16x64xf32>
    %60 = arith.addf %57, %59 : vector<2x16x64xf32>
    %cst_32 = arith.constant 0.000000e+00 : f32
    %61 = vector.broadcast %cst_32 : f32 to vector<2x16x64xf32>
    %62 = arith.maximumf %60, %61 : vector<2x16x64xf32>
    %63 = arith.truncf %62 : vector<2x16x64xf32> to vector<2x16x64xbf16>
    %64 = vector.shape_cast %63 : vector<2x16x64xbf16> to vector<32x64xbf16>
    %c0_33 = arith.constant 0 : index
    %c0_34 = arith.constant 0 : index
    %c0_35 = arith.constant 0 : index
    %65 = vector.load %arg4[%c0_33, %c0_34, %c0_35] : memref<1x64x64xbf16, #tpu.memory_space<vmem>>, vector<1x64x64xbf16>
    %66 = vector.shape_cast %65 : vector<1x64x64xbf16> to vector<64x64xbf16>
    %cst_36 = arith.constant dense<0.000000e+00> : vector<32x64xf32>
    %67 = tpu.matmul %64, %66, %cst_36 {dimension_numbers = #tpu.dot_dimension_numbers<[1], [0], [0], [1], [0, 0, 1, 1], [], []>} : vector<32x64xbf16>, vector<64x64xbf16>, vector<32x64xf32> -> vector<32x64xf32>
    %68 = vector.shape_cast %67 : vector<32x64xf32> to vector<2x16x64xf32>
    %69 = vector.extract_strided_slice %3 {offsets = [0, 320], sizes = [1, 64], strides = [1, 1]} : vector<1x480xf32> to vector<1x64xf32>
    %70 = vector.shape_cast %69 : vector<1x64xf32> to vector<1x1x64xf32>
    %71 = vector.broadcast %70 : vector<1x1x64xf32> to vector<2x16x64xf32>
    %72 = arith.addf %68, %71 : vector<2x16x64xf32>
    %cst_37 = arith.constant 0.000000e+00 : f32
    %73 = vector.broadcast %cst_37 : f32 to vector<2x16x64xf32>
    %74 = arith.maximumf %72, %73 : vector<2x16x64xf32>
    %75 = vector.extract_strided_slice %74 {offsets = [0, 0, 16], sizes = [2, 16, 16], strides = [1, 1, 1]} : vector<2x16x64xf32> to vector<2x16x16xf32>
    %76 = vector.extract_strided_slice %74 {offsets = [0, 0, 32], sizes = [2, 16, 16], strides = [1, 1, 1]} : vector<2x16x64xf32> to vector<2x16x16xf32>
    %77 = vector.extract_strided_slice %74 {offsets = [0, 0, 48], sizes = [2, 16, 16], strides = [1, 1, 1]} : vector<2x16x64xf32> to vector<2x16x16xf32>
    %78 = vector.extract_strided_slice %3 {offsets = [0, 384], sizes = [1, 48], strides = [1, 1]} : vector<1x480xf32> to vector<1x48xf32>
    %cst_38 = arith.constant 0.000000e+00 : f32
    %79 = vector.broadcast %cst_38 : f32 to vector<2x1x16xf32>
    %80 = vector.extract_strided_slice %75 {offsets = [0, 0, 0], sizes = [2, 15, 16], strides = [1, 1, 1]} : vector<2x16x16xf32> to vector<2x15x16xf32>
    %81 = tpu.concatenate %79, %80 in 1 : vector<2x1x16xf32>, vector<2x15x16xf32> -> vector<2x16x16xf32>
    %cst_39 = arith.constant 0.000000e+00 : f32
    %82 = vector.broadcast %cst_39 : f32 to vector<2x1x16xf32>
    %83 = vector.extract_strided_slice %75 {offsets = [0, 1, 0], sizes = [2, 15, 16], strides = [1, 1, 1]} : vector<2x16x16xf32> to vector<2x15x16xf32>
    %84 = tpu.concatenate %83, %82 in 1 : vector<2x15x16xf32>, vector<2x1x16xf32> -> vector<2x16x16xf32>
    %cst_40 = arith.constant 0.000000e+00 : f32
    %85 = vector.broadcast %cst_40 : f32 to vector<2x2x16xf32>
    %86 = vector.extract_strided_slice %76 {offsets = [0, 0, 0], sizes = [2, 14, 16], strides = [1, 1, 1]} : vector<2x16x16xf32> to vector<2x14x16xf32>
    %87 = tpu.concatenate %85, %86 in 1 : vector<2x2x16xf32>, vector<2x14x16xf32> -> vector<2x16x16xf32>
    %cst_41 = arith.constant 0.000000e+00 : f32
    %88 = vector.broadcast %cst_41 : f32 to vector<2x1x16xf32>
    %89 = vector.extract_strided_slice %76 {offsets = [0, 0, 0], sizes = [2, 15, 16], strides = [1, 1, 1]} : vector<2x16x16xf32> to vector<2x15x16xf32>
    %90 = tpu.concatenate %88, %89 in 1 : vector<2x1x16xf32>, vector<2x15x16xf32> -> vector<2x16x16xf32>
    %cst_42 = arith.constant 0.000000e+00 : f32
    %91 = vector.broadcast %cst_42 : f32 to vector<2x1x16xf32>
    %92 = vector.extract_strided_slice %76 {offsets = [0, 1, 0], sizes = [2, 15, 16], strides = [1, 1, 1]} : vector<2x16x16xf32> to vector<2x15x16xf32>
    %93 = tpu.concatenate %92, %91 in 1 : vector<2x15x16xf32>, vector<2x1x16xf32> -> vector<2x16x16xf32>
    %cst_43 = arith.constant 0.000000e+00 : f32
    %94 = vector.broadcast %cst_43 : f32 to vector<2x2x16xf32>
    %95 = vector.extract_strided_slice %76 {offsets = [0, 2, 0], sizes = [2, 14, 16], strides = [1, 1, 1]} : vector<2x16x16xf32> to vector<2x14x16xf32>
    %96 = tpu.concatenate %95, %94 in 1 : vector<2x14x16xf32>, vector<2x2x16xf32> -> vector<2x16x16xf32>
    %cst_44 = arith.constant 0.000000e+00 : f32
    %97 = vector.broadcast %cst_44 : f32 to vector<2x3x16xf32>
    %98 = vector.extract_strided_slice %77 {offsets = [0, 0, 0], sizes = [2, 13, 16], strides = [1, 1, 1]} : vector<2x16x16xf32> to vector<2x13x16xf32>
    %99 = tpu.concatenate %97, %98 in 1 : vector<2x3x16xf32>, vector<2x13x16xf32> -> vector<2x16x16xf32>
    %cst_45 = arith.constant 0.000000e+00 : f32
    %100 = vector.broadcast %cst_45 : f32 to vector<2x2x16xf32>
    %101 = vector.extract_strided_slice %77 {offsets = [0, 0, 0], sizes = [2, 14, 16], strides = [1, 1, 1]} : vector<2x16x16xf32> to vector<2x14x16xf32>
    %102 = tpu.concatenate %100, %101 in 1 : vector<2x2x16xf32>, vector<2x14x16xf32> -> vector<2x16x16xf32>
    %cst_46 = arith.constant 0.000000e+00 : f32
    %103 = vector.broadcast %cst_46 : f32 to vector<2x1x16xf32>
    %104 = vector.extract_strided_slice %77 {offsets = [0, 0, 0], sizes = [2, 15, 16], strides = [1, 1, 1]} : vector<2x16x16xf32> to vector<2x15x16xf32>
    %105 = tpu.concatenate %103, %104 in 1 : vector<2x1x16xf32>, vector<2x15x16xf32> -> vector<2x16x16xf32>
    %cst_47 = arith.constant 0.000000e+00 : f32
    %106 = vector.broadcast %cst_47 : f32 to vector<2x1x16xf32>
    %107 = vector.extract_strided_slice %77 {offsets = [0, 1, 0], sizes = [2, 15, 16], strides = [1, 1, 1]} : vector<2x16x16xf32> to vector<2x15x16xf32>
    %108 = tpu.concatenate %107, %106 in 1 : vector<2x15x16xf32>, vector<2x1x16xf32> -> vector<2x16x16xf32>
    %cst_48 = arith.constant 0.000000e+00 : f32
    %109 = vector.broadcast %cst_48 : f32 to vector<2x2x16xf32>
    %110 = vector.extract_strided_slice %77 {offsets = [0, 2, 0], sizes = [2, 14, 16], strides = [1, 1, 1]} : vector<2x16x16xf32> to vector<2x14x16xf32>
    %111 = tpu.concatenate %110, %109 in 1 : vector<2x14x16xf32>, vector<2x2x16xf32> -> vector<2x16x16xf32>
    %cst_49 = arith.constant 0.000000e+00 : f32
    %112 = vector.broadcast %cst_49 : f32 to vector<2x3x16xf32>
    %113 = vector.extract_strided_slice %77 {offsets = [0, 3, 0], sizes = [2, 13, 16], strides = [1, 1, 1]} : vector<2x16x16xf32> to vector<2x13x16xf32>
    %114 = tpu.concatenate %113, %112 in 1 : vector<2x13x16xf32>, vector<2x3x16xf32> -> vector<2x16x16xf32>
    %115 = tpu.concatenate %81, %75, %84, %87, %90, %76, %93, %96, %99, %102, %105, %77, %108, %111, %114 in 2 : vector<2x16x16xf32>, vector<2x16x16xf32>, vector<2x16x16xf32>, vector<2x16x16xf32>, vector<2x16x16xf32>, vector<2x16x16xf32>, vector<2x16x16xf32>, vector<2x16x16xf32>, vector<2x16x16xf32>, vector<2x16x16xf32>, vector<2x16x16xf32>, vector<2x16x16xf32>, vector<2x16x16xf32>, vector<2x16x16xf32>, vector<2x16x16xf32> -> vector<2x16x240xf32>
    %116 = arith.truncf %115 : vector<2x16x240xf32> to vector<2x16x240xbf16>
    %117 = vector.shape_cast %116 : vector<2x16x240xbf16> to vector<32x240xbf16>
    %c0_50 = arith.constant 0 : index
    %c0_51 = arith.constant 0 : index
    %c0_52 = arith.constant 0 : index
    %118 = vector.load %arg5[%c0_50, %c0_51, %c0_52] : memref<1x240x48xbf16, #tpu.memory_space<vmem>>, vector<1x240x48xbf16>
    %119 = vector.shape_cast %118 : vector<1x240x48xbf16> to vector<240x48xbf16>
    %cst_53 = arith.constant dense<0.000000e+00> : vector<32x48xf32>
    %120 = tpu.matmul %117, %119, %cst_53 {dimension_numbers = #tpu.dot_dimension_numbers<[1], [0], [0], [1], [0, 0, 1, 1], [], []>} : vector<32x240xbf16>, vector<240x48xbf16>, vector<32x48xf32> -> vector<32x48xf32>
    %121 = vector.shape_cast %120 : vector<32x48xf32> to vector<2x16x48xf32>
    %122 = vector.shape_cast %78 : vector<1x48xf32> to vector<1x1x48xf32>
    %123 = vector.broadcast %122 : vector<1x1x48xf32> to vector<2x16x48xf32>
    %124 = arith.addf %121, %123 : vector<2x16x48xf32>
    %cst_54 = arith.constant 0.000000e+00 : f32
    %125 = vector.broadcast %cst_54 : f32 to vector<2x16x48xf32>
    %126 = arith.maximumf %124, %125 : vector<2x16x48xf32>
    %127 = vector.extract_strided_slice %126 {offsets = [0, 0, 16], sizes = [2, 16, 16], strides = [1, 1, 1]} : vector<2x16x48xf32> to vector<2x16x16xf32>
    %128 = vector.extract_strided_slice %126 {offsets = [0, 0, 32], sizes = [2, 16, 16], strides = [1, 1, 1]} : vector<2x16x48xf32> to vector<2x16x16xf32>
    %129 = vector.extract_strided_slice %3 {offsets = [0, 432], sizes = [1, 32], strides = [1, 1]} : vector<1x480xf32> to vector<1x32xf32>
    %cst_55 = arith.constant 0.000000e+00 : f32
    %130 = vector.broadcast %cst_55 : f32 to vector<2x2x16xf32>
    %131 = vector.extract_strided_slice %127 {offsets = [0, 0, 0], sizes = [2, 14, 16], strides = [1, 1, 1]} : vector<2x16x16xf32> to vector<2x14x16xf32>
    %132 = tpu.concatenate %130, %131 in 1 : vector<2x2x16xf32>, vector<2x14x16xf32> -> vector<2x16x16xf32>
    %cst_56 = arith.constant 0.000000e+00 : f32
    %133 = vector.broadcast %cst_56 : f32 to vector<2x1x16xf32>
    %134 = vector.extract_strided_slice %127 {offsets = [0, 0, 0], sizes = [2, 15, 16], strides = [1, 1, 1]} : vector<2x16x16xf32> to vector<2x15x16xf32>
    %135 = tpu.concatenate %133, %134 in 1 : vector<2x1x16xf32>, vector<2x15x16xf32> -> vector<2x16x16xf32>
    %cst_57 = arith.constant 0.000000e+00 : f32
    %136 = vector.broadcast %cst_57 : f32 to vector<2x1x16xf32>
    %137 = vector.extract_strided_slice %127 {offsets = [0, 1, 0], sizes = [2, 15, 16], strides = [1, 1, 1]} : vector<2x16x16xf32> to vector<2x15x16xf32>
    %138 = tpu.concatenate %137, %136 in 1 : vector<2x15x16xf32>, vector<2x1x16xf32> -> vector<2x16x16xf32>
    %cst_58 = arith.constant 0.000000e+00 : f32
    %139 = vector.broadcast %cst_58 : f32 to vector<2x2x16xf32>
    %140 = vector.extract_strided_slice %127 {offsets = [0, 2, 0], sizes = [2, 14, 16], strides = [1, 1, 1]} : vector<2x16x16xf32> to vector<2x14x16xf32>
    %141 = tpu.concatenate %140, %139 in 1 : vector<2x14x16xf32>, vector<2x2x16xf32> -> vector<2x16x16xf32>
    %cst_59 = arith.constant 0.000000e+00 : f32
    %142 = vector.broadcast %cst_59 : f32 to vector<2x3x16xf32>
    %143 = vector.extract_strided_slice %128 {offsets = [0, 0, 0], sizes = [2, 13, 16], strides = [1, 1, 1]} : vector<2x16x16xf32> to vector<2x13x16xf32>
    %144 = tpu.concatenate %142, %143 in 1 : vector<2x3x16xf32>, vector<2x13x16xf32> -> vector<2x16x16xf32>
    %cst_60 = arith.constant 0.000000e+00 : f32
    %145 = vector.broadcast %cst_60 : f32 to vector<2x2x16xf32>
    %146 = vector.extract_strided_slice %128 {offsets = [0, 0, 0], sizes = [2, 14, 16], strides = [1, 1, 1]} : vector<2x16x16xf32> to vector<2x14x16xf32>
    %147 = tpu.concatenate %145, %146 in 1 : vector<2x2x16xf32>, vector<2x14x16xf32> -> vector<2x16x16xf32>
    %cst_61 = arith.constant 0.000000e+00 : f32
    %148 = vector.broadcast %cst_61 : f32 to vector<2x1x16xf32>
    %149 = vector.extract_strided_slice %128 {offsets = [0, 0, 0], sizes = [2, 15, 16], strides = [1, 1, 1]} : vector<2x16x16xf32> to vector<2x15x16xf32>
    %150 = tpu.concatenate %148, %149 in 1 : vector<2x1x16xf32>, vector<2x15x16xf32> -> vector<2x16x16xf32>
    %cst_62 = arith.constant 0.000000e+00 : f32
    %151 = vector.broadcast %cst_62 : f32 to vector<2x1x16xf32>
    %152 = vector.extract_strided_slice %128 {offsets = [0, 1, 0], sizes = [2, 15, 16], strides = [1, 1, 1]} : vector<2x16x16xf32> to vector<2x15x16xf32>
    %153 = tpu.concatenate %152, %151 in 1 : vector<2x15x16xf32>, vector<2x1x16xf32> -> vector<2x16x16xf32>
    %cst_63 = arith.constant 0.000000e+00 : f32
    %154 = vector.broadcast %cst_63 : f32 to vector<2x2x16xf32>
    %155 = vector.extract_strided_slice %128 {offsets = [0, 2, 0], sizes = [2, 14, 16], strides = [1, 1, 1]} : vector<2x16x16xf32> to vector<2x14x16xf32>
    %156 = tpu.concatenate %155, %154 in 1 : vector<2x14x16xf32>, vector<2x2x16xf32> -> vector<2x16x16xf32>
    %cst_64 = arith.constant 0.000000e+00 : f32
    %157 = vector.broadcast %cst_64 : f32 to vector<2x3x16xf32>
    %158 = vector.extract_strided_slice %128 {offsets = [0, 3, 0], sizes = [2, 13, 16], strides = [1, 1, 1]} : vector<2x16x16xf32> to vector<2x13x16xf32>
    %159 = tpu.concatenate %158, %157 in 1 : vector<2x13x16xf32>, vector<2x3x16xf32> -> vector<2x16x16xf32>
    %160 = tpu.concatenate %132, %135, %127, %138, %141, %144, %147, %150, %128, %153, %156, %159 in 2 : vector<2x16x16xf32>, vector<2x16x16xf32>, vector<2x16x16xf32>, vector<2x16x16xf32>, vector<2x16x16xf32>, vector<2x16x16xf32>, vector<2x16x16xf32>, vector<2x16x16xf32>, vector<2x16x16xf32>, vector<2x16x16xf32>, vector<2x16x16xf32>, vector<2x16x16xf32> -> vector<2x16x192xf32>
    %161 = arith.truncf %160 : vector<2x16x192xf32> to vector<2x16x192xbf16>
    %162 = vector.shape_cast %161 : vector<2x16x192xbf16> to vector<32x192xbf16>
    %c0_65 = arith.constant 0 : index
    %c0_66 = arith.constant 0 : index
    %c0_67 = arith.constant 0 : index
    %163 = vector.load %arg6[%c0_65, %c0_66, %c0_67] : memref<1x192x32xbf16, #tpu.memory_space<vmem>>, vector<1x192x32xbf16>
    %164 = vector.shape_cast %163 : vector<1x192x32xbf16> to vector<192x32xbf16>
    %cst_68 = arith.constant dense<0.000000e+00> : vector<32x32xf32>
    %165 = tpu.matmul %162, %164, %cst_68 {dimension_numbers = #tpu.dot_dimension_numbers<[1], [0], [0], [1], [0, 0, 1, 1], [], []>} : vector<32x192xbf16>, vector<192x32xbf16>, vector<32x32xf32> -> vector<32x32xf32>
    %166 = vector.shape_cast %165 : vector<32x32xf32> to vector<2x16x32xf32>
    %167 = vector.shape_cast %129 : vector<1x32xf32> to vector<1x1x32xf32>
    %168 = vector.broadcast %167 : vector<1x1x32xf32> to vector<2x16x32xf32>
    %169 = arith.addf %166, %168 : vector<2x16x32xf32>
    %cst_69 = arith.constant 0.000000e+00 : f32
    %170 = vector.broadcast %cst_69 : f32 to vector<2x16x32xf32>
    %171 = arith.maximumf %169, %170 : vector<2x16x32xf32>
    %172 = vector.extract_strided_slice %171 {offsets = [0, 0, 16], sizes = [2, 16, 16], strides = [1, 1, 1]} : vector<2x16x32xf32> to vector<2x16x16xf32>
    %173 = vector.extract_strided_slice %3 {offsets = [0, 464], sizes = [1, 16], strides = [1, 1]} : vector<1x480xf32> to vector<1x16xf32>
    %cst_70 = arith.constant 0.000000e+00 : f32
    %174 = vector.broadcast %cst_70 : f32 to vector<2x3x16xf32>
    %175 = vector.extract_strided_slice %172 {offsets = [0, 0, 0], sizes = [2, 13, 16], strides = [1, 1, 1]} : vector<2x16x16xf32> to vector<2x13x16xf32>
    %176 = tpu.concatenate %174, %175 in 1 : vector<2x3x16xf32>, vector<2x13x16xf32> -> vector<2x16x16xf32>
    %cst_71 = arith.constant 0.000000e+00 : f32
    %177 = vector.broadcast %cst_71 : f32 to vector<2x2x16xf32>
    %178 = vector.extract_strided_slice %172 {offsets = [0, 0, 0], sizes = [2, 14, 16], strides = [1, 1, 1]} : vector<2x16x16xf32> to vector<2x14x16xf32>
    %179 = tpu.concatenate %177, %178 in 1 : vector<2x2x16xf32>, vector<2x14x16xf32> -> vector<2x16x16xf32>
    %cst_72 = arith.constant 0.000000e+00 : f32
    %180 = vector.broadcast %cst_72 : f32 to vector<2x1x16xf32>
    %181 = vector.extract_strided_slice %172 {offsets = [0, 0, 0], sizes = [2, 15, 16], strides = [1, 1, 1]} : vector<2x16x16xf32> to vector<2x15x16xf32>
    %182 = tpu.concatenate %180, %181 in 1 : vector<2x1x16xf32>, vector<2x15x16xf32> -> vector<2x16x16xf32>
    %cst_73 = arith.constant 0.000000e+00 : f32
    %183 = vector.broadcast %cst_73 : f32 to vector<2x1x16xf32>
    %184 = vector.extract_strided_slice %172 {offsets = [0, 1, 0], sizes = [2, 15, 16], strides = [1, 1, 1]} : vector<2x16x16xf32> to vector<2x15x16xf32>
    %185 = tpu.concatenate %184, %183 in 1 : vector<2x15x16xf32>, vector<2x1x16xf32> -> vector<2x16x16xf32>
    %cst_74 = arith.constant 0.000000e+00 : f32
    %186 = vector.broadcast %cst_74 : f32 to vector<2x2x16xf32>
    %187 = vector.extract_strided_slice %172 {offsets = [0, 2, 0], sizes = [2, 14, 16], strides = [1, 1, 1]} : vector<2x16x16xf32> to vector<2x14x16xf32>
    %188 = tpu.concatenate %187, %186 in 1 : vector<2x14x16xf32>, vector<2x2x16xf32> -> vector<2x16x16xf32>
    %cst_75 = arith.constant 0.000000e+00 : f32
    %189 = vector.broadcast %cst_75 : f32 to vector<2x3x16xf32>
    %190 = vector.extract_strided_slice %172 {offsets = [0, 3, 0], sizes = [2, 13, 16], strides = [1, 1, 1]} : vector<2x16x16xf32> to vector<2x13x16xf32>
    %191 = tpu.concatenate %190, %189 in 1 : vector<2x13x16xf32>, vector<2x3x16xf32> -> vector<2x16x16xf32>
    %192 = tpu.concatenate %176, %179, %182, %172, %185, %188, %191 in 2 : vector<2x16x16xf32>, vector<2x16x16xf32>, vector<2x16x16xf32>, vector<2x16x16xf32>, vector<2x16x16xf32>, vector<2x16x16xf32>, vector<2x16x16xf32> -> vector<2x16x112xf32>
    %193 = arith.truncf %192 : vector<2x16x112xf32> to vector<2x16x112xbf16>
    %194 = vector.shape_cast %193 : vector<2x16x112xbf16> to vector<32x112xbf16>
    %c0_76 = arith.constant 0 : index
    %c0_77 = arith.constant 0 : index
    %c0_78 = arith.constant 0 : index
    %195 = vector.load %arg7[%c0_76, %c0_77, %c0_78] : memref<1x112x16xbf16, #tpu.memory_space<vmem>>, vector<1x112x16xbf16>
    %196 = vector.shape_cast %195 : vector<1x112x16xbf16> to vector<112x16xbf16>
    %cst_79 = arith.constant dense<0.000000e+00> : vector<32x16xf32>
    %197 = tpu.matmul %194, %196, %cst_79 {dimension_numbers = #tpu.dot_dimension_numbers<[1], [0], [0], [1], [0, 0, 1, 1], [], []>} : vector<32x112xbf16>, vector<112x16xbf16>, vector<32x16xf32> -> vector<32x16xf32>
    %198 = vector.shape_cast %197 : vector<32x16xf32> to vector<2x16x16xf32>
    %199 = vector.shape_cast %173 : vector<1x16xf32> to vector<1x1x16xf32>
    %200 = vector.broadcast %199 : vector<1x1x16xf32> to vector<2x16x16xf32>
    %201 = arith.addf %198, %200 : vector<2x16x16xf32>
    %cst_80 = arith.constant 0.000000e+00 : f32
    %202 = vector.broadcast %cst_80 : f32 to vector<2x16x16xf32>
    %203 = arith.maximumf %201, %202 : vector<2x16x16xf32>
    %204 = vector.extract_strided_slice %74 {offsets = [0, 0, 0], sizes = [2, 16, 16], strides = [1, 1, 1]} : vector<2x16x64xf32> to vector<2x16x16xf32>
    %205 = vector.extract_strided_slice %126 {offsets = [0, 0, 0], sizes = [2, 16, 16], strides = [1, 1, 1]} : vector<2x16x48xf32> to vector<2x16x16xf32>
    %206 = vector.extract_strided_slice %171 {offsets = [0, 0, 0], sizes = [2, 16, 16], strides = [1, 1, 1]} : vector<2x16x32xf32> to vector<2x16x16xf32>
    %207 = tpu.concatenate %204, %205, %206, %203 in 2 : vector<2x16x16xf32>, vector<2x16x16xf32>, vector<2x16x16xf32>, vector<2x16x16xf32> -> vector<2x16x64xf32>
    %208 = arith.addf %207, %62 : vector<2x16x64xf32>
    %c0_81 = arith.constant 0 : index
    %c0_82 = arith.constant 0 : index
    %c0_83 = arith.constant 0 : index
    %c0_84 = arith.constant 0 : index
    %209 = vector.load %arg9[%c0_81, %c0_82, %c0_83, %c0_84] : memref<1x2x16x64xf32, #tpu.memory_space<vmem>>, vector<1x2x16x64xf32>
    %210 = vector.shape_cast %209 : vector<1x2x16x64xf32> to vector<2x16x64xf32>
    %211 = vector.shape_cast %208 : vector<2x16x64xf32> to vector<1x2x16x64xf32>
    tpu.vector_store %arg9[%c0_81, %c0_82, %c0_83, %c0_84], %211 {strides = array<i32>} : memref<1x2x16x64xf32, #tpu.memory_space<vmem>>, vector<1x2x16x64xf32>,
    return
  }
  func.func @transform_0(%arg0: i32) -> (i32, i32, i32, i32) {
    %c0_i32 = arith.constant 0 : i32
    %c0_i32_0 = arith.constant 0 : i32
    %c0_i32_1 = arith.constant 0 : i32
    %c0_i32_2 = arith.constant 0 : i32
    return %arg0, %c0_i32, %c0_i32_0, %c0_i32_1 : i32, i32, i32, i32
  }
  func.func @transform_1(%arg0: i32) -> (i32, i32, i32) {
    %c0_i32 = arith.constant 0 : i32
    %c0_i32_0 = arith.constant 0 : i32
    %c0_i32_1 = arith.constant 0 : i32
    return %arg0, %c0_i32, %c0_i32_0 : i32, i32, i32
  }
  func.func @transform_2(%arg0: i32) -> (i32, i32, i32) {
    %c0_i32 = arith.constant 0 : i32
    %c0_i32_0 = arith.constant 0 : i32
    %c0_i32_1 = arith.constant 0 : i32
    return %arg0, %c0_i32, %c0_i32_0 : i32, i32, i32
  }
  func.func @transform_3(%arg0: i32) -> (i32, i32, i32) {
    %c0_i32 = arith.constant 0 : i32
    %c0_i32_0 = arith.constant 0 : i32
    %c0_i32_1 = arith.constant 0 : i32
    return %arg0, %c0_i32, %c0_i32_0 : i32, i32, i32
  }
  func.func @transform_4(%arg0: i32) -> (i32, i32, i32) {
    %c0_i32 = arith.constant 0 : i32
    %c0_i32_0 = arith.constant 0 : i32
    %c0_i32_1 = arith.constant 0 : i32
    return %arg0, %c0_i32, %c0_i32_0 : i32, i32, i32
  }
  func.func @transform_5(%arg0: i32) -> (i32, i32, i32) {
    %c0_i32 = arith.constant 0 : i32
    %c0_i32_0 = arith.constant 0 : i32
    %c0_i32_1 = arith.constant 0 : i32
    return %arg0, %c0_i32, %c0_i32_0 : i32, i32, i32
  }
  func.func @transform_6(%arg0: i32) -> (i32, i32, i32) {
    %c0_i32 = arith.constant 0 : i32
    %c0_i32_0 = arith.constant 0 : i32
    %c0_i32_1 = arith.constant 0 : i32
    return %arg0, %c0_i32, %c0_i32_0 : i32, i32, i32
  }
  func.func @transform_7(%arg0: i32) -> (i32, i32, i32) {
    %c0_i32 = arith.constant 0 : i32
    %c0_i32_0 = arith.constant 0 : i32
    %c0_i32_1 = arith.constant 0 : i32
    return %arg0, %c0_i32, %c0_i32_0 : i32, i32, i32
  }
  func.func @transform_8(%arg0: i32) -> (i32, i32, i32, i32) {
    %c0_i32 = arith.constant 0 : i32
    %c0_i32_0 = arith.constant 0 : i32
    %c0_i32_1 = arith.constant 0 : i32
    %c0_i32_2 = arith.constant 0 : i32
    return %arg0, %c0_i32, %c0_i32_0, %c0_i32_1 : i32, i32, i32, i32
  }
}

</mosaic_0001>

<llo_original>
// kernel: net3_forward.1
$region0: #{net3_forward.1}
  #allocation0 [shape = 'u32[]', space=smem, size = 0x4, offset = 0x4, fixed_abs, tag = 'smem constant byte address 0x4 - core index']
  #allocation1 [shape = 'u32[144,128]{1,0:T(1,128)}', space=vmem, size = 0x12000, scoped, tag = 'internal scratch']
  %s0 = inlined_call_operand.hbm [shape: bf16[2,2,16,1024], index: 0, kind: input, shape index: {}]
  %s1 = inlined_call_operand.hbm [shape: bf16[2,3072,256], index: 1, kind: input, shape index: {}]
  %s2 = inlined_call_operand.hbm [shape: bf16[2,768,64], index: 2, kind: input, shape index: {}]
  %s3 = inlined_call_operand.hbm [shape: bf16[2,64,64], index: 3, kind: input, shape index: {}]
  %s4 = inlined_call_operand.hbm [shape: bf16[2,240,48], index: 4, kind: input, shape index: {}]
  %s5 = inlined_call_operand.hbm [shape: bf16[2,192,32], index: 5, kind: input, shape index: {}]
  %s6 = inlined_call_operand.hbm [shape: bf16[2,112,16], index: 6, kind: input, shape index: {}]
  %s7 = inlined_call_operand.hbm [shape: f32[2,1,480], index: 7, kind: input, shape index: {}]
  %s8 = inlined_call_operand.hbm [shape: f32[2,2,16,64], index: 8, kind: output, shape index: {}]
  %s9 = sld [smem:[#allocation0]]
  $region97: #{net3_forward.1} parent=0
    _
  %s11 = ssub.s32 1, %s9
  %s12 = scalar_select 0, %s11, %s9
  $region1: #{net3_forward.1} parent=0
    #allocation2 [shape = 'u8[131072]{0}', space=vmem, size = 0x20000, scoped, tag = 'input window, operand 0']
    #allocation3 [shape = 's32[2]{0}', space=sflag, size = 0x8, scoped, tag = 'scoped memory for net3_forward.1']
    #allocation4 [shape = 's32[2]{0}', space=sflag, size = 0x8, scoped, tag = 'scoped memory for net3_forward.1']
    #allocation5 [shape = 'u8[3145728]{0}', space=vmem, size = 0x300000, scoped, tag = 'input window, operand 1']
    #allocation6 [shape = 's32[2]{0}', space=sflag, size = 0x8, scoped, tag = 'scoped memory for net3_forward.1']
    #allocation7 [shape = 'u8[393216]{0}', space=vmem, size = 0x60000, scoped, tag = 'input window, operand 2']
    #allocation8 [shape = 'u8[32768]{0}', space=vmem, size = 0x8000, scoped, tag = 'input window, operand 3']
    #allocation9 [shape = 's32[2]{0}', space=sflag, size = 0x8, scoped, tag = 'scoped memory for net3_forward.1']
    #allocation10 [shape = 'u8[122880]{0}', space=vmem, size = 0x1e000, scoped, tag = 'input window, operand 4']
    #allocation11 [shape = 'u8[98304]{0}', space=vmem, size = 0x18000, scoped, tag = 'input window, operand 5']
    #allocation12 [shape = 's32[2]{0}', space=sflag, size = 0x8, scoped, tag = 'scoped memory for net3_forward.1']
    #allocation13 [shape = 'u8[57344]{0}', space=vmem, size = 0xe000, scoped, tag = 'input window, operand 6']
    #allocation14 [shape = 'u8[4096]{0}', space=vmem, size = 0x1000, scoped, tag = 'input window, operand 7']
    #allocation15 [shape = 's32[2]{0}', space=sflag, size = 0x8, scoped, tag = 'scoped memory for net3_forward.1']
    #allocation16 [shape = 'u8[32768]{0}', space=vmem, size = 0x8000, scoped, tag = 'output window, operand 0']
    %13 = vsyncpa [#allocation3], 0
    %s14 = scalar_lea.sflag [#allocation3], 1
    %15 = vsyncpa %s14, 0
    %16 = vsyncpa [#allocation6], 0
    %s17 = scalar_lea.sflag [#allocation6], 1
    %18 = vsyncpa %s17, 0
    %19 = vsyncpa [#allocation9], 0
    %s20 = scalar_lea.sflag [#allocation9], 1
    %21 = vsyncpa %s20, 0
    %22 = vsyncpa [#allocation12], 0
    %s23 = scalar_lea.sflag [#allocation12], 1
    %24 = vsyncpa %s23, 0
    %25 = vsyncpa [#allocation15], 0
    %s26 = scalar_lea.sflag [#allocation15], 1
    %27 = vsyncpa %s26, 0
    %28 = vsyncpa [#allocation4], 0
    %s29 = scalar_lea.sflag [#allocation4], 1
    %30 = vsyncpa %s29, 0
    loop: start=0, step=1, limit=4
    $region2: #{net3_forward.1} parent=1 // loop_pre_header
      _
    $region3: #{net3_forward.1} parent=1 // loop_header
      %s32 = sphi 0, %s36
      %p33 = scmp.ge.s32.totalorder %s32, 4
      %s42 = sphi 0, %s44
      %s45 = sphi 0, %s42
      %s46 = sphi 0, %s45
      %s62 = sphi 0, %s46
      %s68 = sphi 0, %s70
      %s71 = sphi 0, %s68
      %s72 = sphi 0, %s71
      %s88 = sphi 0, %s72
      %s94 = sphi 0, %s96
      %s97 = sphi 0, %s94
      %s98 = sphi 0, %s97
      %s114 = sphi 0, %s98
      %s120 = sphi 0, %s122
      %s123 = sphi 0, %s120
      %s124 = sphi 0, %s123
      %s140 = sphi 0, %s124
      %s146 = sphi 0, %s148
      %s149 = sphi 0, %s146
      %s150 = sphi 0, %s149
      %s166 = sphi 0, %s150
      %s172 = sphi 0, %s174
      %s175 = sphi 0, %s172
      %s176 = sphi 0, %s175
      %s192 = sphi 0, %s176
      %s198 = sphi 0, %s200
      %s201 = sphi 0, %s198
      %s202 = sphi 0, %s201
      %s218 = sphi 0, %s202
      %s224 = sphi 0, %s226
      %s227 = sphi 0, %s224
      %s228 = sphi 0, %s227
      %s244 = sphi 0, %s228
      %s250 = sphi 0, %s252
      %s253 = sphi 0, %s250
      %s254 = sphi 0, %s253
      %s270 = sphi 0, %s254
    $region4: #{net3_forward.1} parent=1 // loop_header_branch
      %35 = sbr.rel (%p33) target = $region8
    $region5: #{net3_forward.1} parent=1 // loop_body
      %s37 = ssub.s32 %s32, 1
      %s38 = ssub.s32 %s32, 2
      %s39 = sadd.s32 %s32, 1
      %s40 = ssub.s32 %s32, %s39
      %p41 = scmp.eq.s32.totalorder %s40, 0
      %s43 = sadd.s32 %s42, 1
      %s44 = scalar_select %p41, %s42, %s43
      %p47 = pneg %p41
      %p48 = scmp.eq.s32.totalorder %s32, 1
      %p49 = por %p47, %p48
      %p50 = scmp.ne.s32.totalorder %s42, %s45
      %p51 = scmp.eq.s32.totalorder %s32, 0
      %p52 = por %p50, %p51
      %p53 = scmp.ne.s32.totalorder %s42, %s45
      %p54 = scmp.eq.s32.totalorder %s37, 1
      %p55 = por %p53, %p54
      %p56 = scmp.ne.s32.totalorder %s45, %s46
      %p57 = scmp.eq.s32.totalorder %s37, 0
      %p58 = por %p56, %p57
      %p59 = scmp.ne.s32.totalorder %s45, %s46
      %p60 = scmp.eq.s32.totalorder %s38, 1
      %p61 = por %p59, %p60
      %p63 = scmp.ne.s32.totalorder %s46, %s62
      %p64 = scmp.eq.s32.totalorder %s38, 0
      %p65 = por %p63, %p64
      %s66 = ssub.s32 %s32, %s39
      %p67 = scmp.eq.s32.totalorder %s66, 0
      %s69 = sadd.s32 %s68, 1
      %s70 = scalar_select %p67, %s68, %s69
      %p73 = pneg %p67
      %p74 = scmp.eq.s32.totalorder %s32, 1
      %p75 = por %p73, %p74
      %p76 = scmp.ne.s32.totalorder %s68, %s71
      %p77 = scmp.eq.s32.totalorder %s32, 0
      %p78 = por %p76, %p77
      %p79 = scmp.ne.s32.totalorder %s68, %s71
      %p80 = scmp.eq.s32.totalorder %s37, 1
      %p81 = por %p79, %p80
      %p82 = scmp.ne.s32.totalorder %s71, %s72
      %p83 = scmp.eq.s32.totalorder %s37, 0
      %p84 = por %p82, %p83
      %p85 = scmp.ne.s32.totalorder %s71, %s72
      %p86 = scmp.eq.s32.totalorder %s38, 1
      %p87 = por %p85, %p86
      %p89 = scmp.ne.s32.totalorder %s72, %s88
      %p90 = scmp.eq.s32.totalorder %s38, 0
      %p91 = por %p89, %p90
      %s92 = ssub.s32 %s32, %s39
      %p93 = scmp.eq.s32.totalorder %s92, 0
      %s95 = sadd.s32 %s94, 1
      %s96 = scalar_select %p93, %s94, %s95
      %p99 = pneg %p93
      %p100 = scmp.eq.s32.totalorder %s32, 1
      %p101 = por %p99, %p100
      %p102 = scmp.ne.s32.totalorder %s94, %s97
      %p103 = scmp.eq.s32.totalorder %s32, 0
      %p104 = por %p102, %p103
      %p105 = scmp.ne.s32.totalorder %s94, %s97
      %p106 = scmp.eq.s32.totalorder %s37, 1
      %p107 = por %p105, %p106
      %p108 = scmp.ne.s32.totalorder %s97, %s98
      %p109 = scmp.eq.s32.totalorder %s37, 0
      %p110 = por %p108, %p109
      %p111 = scmp.ne.s32.totalorder %s97, %s98
      %p112 = scmp.eq.s32.totalorder %s38, 1
      %p113 = por %p111, %p112
      %p115 = scmp.ne.s32.totalorder %s98, %s114
      %p116 = scmp.eq.s32.totalorder %s38, 0
      %p117 = por %p115, %p116
      %s118 = ssub.s32 %s32, %s39
      %p119 = scmp.eq.s32.totalorder %s118, 0
      %s121 = sadd.s32 %s120, 1
      %s122 = scalar_select %p119, %s120, %s121
      %p125 = pneg %p119
      %p126 = scmp.eq.s32.totalorder %s32, 1
      %p127 = por %p125, %p126
      %p128 = scmp.ne.s32.totalorder %s120, %s123
      %p129 = scmp.eq.s32.totalorder %s32, 0
      %p130 = por %p128, %p129
      %p131 = scmp.ne.s32.totalorder %s120, %s123
      %p132 = scmp.eq.s32.totalorder %s37, 1
      %p133 = por %p131, %p132
      %p134 = scmp.ne.s32.totalorder %s123, %s124
      %p135 = scmp.eq.s32.totalorder %s37, 0
      %p136 = por %p134, %p135
      %p137 = scmp.ne.s32.totalorder %s123, %s124
      %p138 = scmp.eq.s32.totalorder %s38, 1
      %p139 = por %p137, %p138
      %p141 = scmp.ne.s32.totalorder %s124, %s140
      %p142 = scmp.eq.s32.totalorder %s38, 0
      %p143 = por %p141, %p142
      %s144 = ssub.s32 %s32, %s39
      %p145 = scmp.eq.s32.totalorder %s144, 0
      %s147 = sadd.s32 %s146, 1
      %s148 = scalar_select %p145, %s146, %s147
      %p151 = pneg %p145
      %p152 = scmp.eq.s32.totalorder %s32, 1
      %p153 = por %p151, %p152
      %p154 = scmp.ne.s32.totalorder %s146, %s149
      %p155 = scmp.eq.s32.totalorder %s32, 0
      %p156 = por %p154, %p155
      %p157 = scmp.ne.s32.totalorder %s146, %s149
      %p158 = scmp.eq.s32.totalorder %s37, 1
      %p159 = por %p157, %p158
      %p160 = scmp.ne.s32.totalorder %s149, %s150
      %p161 = scmp.eq.s32.totalorder %s37, 0
      %p162 = por %p160, %p161
      %p163 = scmp.ne.s32.totalorder %s149, %s150
      %p164 = scmp.eq.s32.totalorder %s38, 1
      %p165 = por %p163, %p164
      %p167 = scmp.ne.s32.totalorder %s150, %s166
      %p168 = scmp.eq.s32.totalorder %s38, 0
      %p169 = por %p167, %p168
      %s170 = ssub.s32 %s32, %s39
      %p171 = scmp.eq.s32.totalorder %s170, 0
      %s173 = sadd.s32 %s172, 1
      %s174 = scalar_select %p171, %s172, %s173
      %p177 = pneg %p171
      %p178 = scmp.eq.s32.totalorder %s32, 1
      %p179 = por %p177, %p178
      %p180 = scmp.ne.s32.totalorder %s172, %s175
      %p181 = scmp.eq.s32.totalorder %s32, 0
      %p182 = por %p180, %p181
      %p183 = scmp.ne.s32.totalorder %s172, %s175
      %p184 = scmp.eq.s32.totalorder %s37, 1
      %p185 = por %p183, %p184
      %p186 = scmp.ne.s32.totalorder %s175, %s176
      %p187 = scmp.eq.s32.totalorder %s37, 0
      %p188 = por %p186, %p187
      %p189 = scmp.ne.s32.totalorder %s175, %s176
      %p190 = scmp.eq.s32.totalorder %s38, 1
      %p191 = por %p189, %p190
      %p193 = scmp.ne.s32.totalorder %s176, %s192
      %p194 = scmp.eq.s32.totalorder %s38, 0
      %p195 = por %p193, %p194
      %s196 = ssub.s32 %s32, %s39
      %p197 = scmp.eq.s32.totalorder %s196, 0
      %s199 = sadd.s32 %s198, 1
      %s200 = scalar_select %p197, %s198, %s199
      %p203 = pneg %p197
      %p204 = scmp.eq.s32.totalorder %s32, 1
      %p205 = por %p203, %p204
      %p206 = scmp.ne.s32.totalorder %s198, %s201
      %p207 = scmp.eq.s32.totalorder %s32, 0
      %p208 = por %p206, %p207
      %p209 = scmp.ne.s32.totalorder %s198, %s201
      %p210 = scmp.eq.s32.totalorder %s37, 1
      %p211 = por %p209, %p210
      %p212 = scmp.ne.s32.totalorder %s201, %s202
      %p213 = scmp.eq.s32.totalorder %s37, 0
      %p214 = por %p212, %p213
      %p215 = scmp.ne.s32.totalorder %s201, %s202
      %p216 = scmp.eq.s32.totalorder %s38, 1
      %p217 = por %p215, %p216
      %p219 = scmp.ne.s32.totalorder %s202, %s218
      %p220 = scmp.eq.s32.totalorder %s38, 0
      %p221 = por %p219, %p220
      %s222 = ssub.s32 %s32, %s39
      %p223 = scmp.eq.s32.totalorder %s222, 0
      %s225 = sadd.s32 %s224, 1
      %s226 = scalar_select %p223, %s224, %s225
      %p229 = pneg %p223
      %p230 = scmp.eq.s32.totalorder %s32, 1
      %p231 = por %p229, %p230
      %p232 = scmp.ne.s32.totalorder %s224, %s227
      %p233 = scmp.eq.s32.totalorder %s32, 0
      %p234 = por %p232, %p233
      %p235 = scmp.ne.s32.totalorder %s224, %s227
      %p236 = scmp.eq.s32.totalorder %s37, 1
      %p237 = por %p235, %p236
      %p238 = scmp.ne.s32.totalorder %s227, %s228
      %p239 = scmp.eq.s32.totalorder %s37, 0
      %p240 = por %p238, %p239
      %p241 = scmp.ne.s32.totalorder %s227, %s228
      %p242 = scmp.eq.s32.totalorder %s38, 1
      %p243 = por %p241, %p242
      %p245 = scmp.ne.s32.totalorder %s228, %s244
      %p246 = scmp.eq.s32.totalorder %s38, 0
      %p247 = por %p245, %p246
      %s248 = ssub.s32 %s32, %s39
      %p249 = scmp.eq.s32.totalorder %s248, 0
      %s251 = sadd.s32 %s250, 1
      %s252 = scalar_select %p249, %s250, %s251
      %p255 = pneg %p249
      %p256 = scmp.eq.s32.totalorder %s32, 1
      %p257 = por %p255, %p256
      %p258 = scmp.ne.s32.totalorder %s250, %s253
      %p259 = scmp.eq.s32.totalorder %s32, 0
      %p260 = por %p258, %p259
      %p261 = scmp.ne.s32.totalorder %s250, %s253
      %p262 = scmp.eq.s32.totalorder %s37, 1
      %p263 = por %p261, %p262
      %p264 = scmp.ne.s32.totalorder %s253, %s254
      %p265 = scmp.eq.s32.totalorder %s37, 0
      %p266 = por %p264, %p265
      %p267 = scmp.ne.s32.totalorder %s253, %s254
      %p268 = scmp.eq.s32.totalorder %s38, 1
      %p269 = por %p267, %p268
      %p271 = scmp.ne.s32.totalorder %s254, %s270
      %p272 = scmp.eq.s32.totalorder %s38, 0
      %p273 = por %p271, %p272
      %p274 = scmp.le.s32.totalorder 1, %s32
      %p275 = scmp.lt.s32.totalorder %s32, 3
      %p276 = pnand %p274, %p275
      %p277 = pneg %p276
      // Predicated region
      $region9: #{net3_forward.1} parent=5 // pred_check
        _
      $region10: #{net3_forward.1} parent=5 // pred_check_branch
        %279 = sbr.rel (%p276) target = $region12
      $region11: #{net3_forward.1} parent=5 // pred_region
        %s280 = ssub.s32 %s32, 1
      $region12: #{net3_forward.1} parent=5 // pred_fallthru
        _
      %p281 = scmp.lt.s32.totalorder %s32, 2
      // Predicated region
      $region13: #{net3_forward.1} parent=5 // pred_check
        %p282 = pneg %p281
      $region14: #{net3_forward.1} parent=5 // pred_check_branch
        %284 = sbr.rel (%p282) target = $region16
      $region15: #{net3_forward.1} parent=5 // pred_region
        // Predicated region
        $region17: #{net3_forward.1} parent=15 // pred_check
          %p285 = pneg %p52
        $region18: #{net3_forward.1} parent=15 // pred_check_branch
          %287 = sbr.rel (%p285) target = $region20
        $region19: #{net3_forward.1} parent=15 // pred_region
          %s288 = sand.u32 %s42, 1
          %s289 = scalar_lea.sflag [#allocation3], %s288
          %s290 = sand.u32 %s42, 1
          %s291 = smul.addr %s290, 128
          %s292 = scalar_lea.vmem [#allocation2], %s291
          %s294 = ssub.s32 2048, 2048
          %295 = vsyncadd %s289, %s294
          %s296 = smul.addr %s32, 32
          %s297 = smul.addr %s296, 64
          %s298 = scalar_lea.hbm %s0, %s297
          %s299 = sshll.u32 %s292, 4
          %s300 = int_to_ptr.vmem [resolvable:$true] %s299
          %305 = dma.hbm_to_vmem [thread:$0]  %s298, 2048, %s300, %s289, 512, 512, 32
        $region20: #{net3_forward.1} parent=15 // pred_fallthru
          _
        // Predicated region
        $region21: #{net3_forward.1} parent=15 // pred_check
          %p306 = pneg %p78
        $region22: #{net3_forward.1} parent=15 // pred_check_branch
          %308 = sbr.rel (%p306) target = $region24
        $region23: #{net3_forward.1} parent=15 // pred_region
          %s309 = sand.u32 %s32, 1
          %s310 = scalar_lea.sflag [#allocation6], %s309
          %s311 = sand.u32 %s68, 1
          %s312 = smul.addr %s311, 3072
          %s313 = scalar_lea.vmem [#allocation5], %s312
          %s315 = ssub.s32 49152, 49152
          %316 = vsyncadd %s310, %s315
          %s317 = smul.addr %s32, 768
          %s318 = smul.addr %s317, 64
          %s319 = scalar_lea.hbm %s1, %s318
          %s320 = sshll.u32 %s313, 4
          %s321 = int_to_ptr.vmem [resolvable:$true] %s320
          %326 = dma.hbm_to_vmem [thread:$0]  %s319, 49152, %s321, %s310, 128, 128, 8
        $region24: #{net3_forward.1} parent=15 // pred_fallthru
          _
        // Predicated region
        $region25: #{net3_forward.1} parent=15 // pred_check
          %p327 = pneg %p104
        $region26: #{net3_forward.1} parent=15 // pred_check_branch
          %329 = sbr.rel (%p327) target = $region28
        $region27: #{net3_forward.1} parent=15 // pred_region
          %s330 = sand.u32 %s32, 1
          %s331 = scalar_lea.sflag [#allocation6], %s330
          %s332 = sand.u32 %s94, 1
          %s333 = smul.addr %s332, 384
          %s334 = scalar_lea.vmem [#allocation7], %s333
          %s336 = ssub.s32 6144, 6144
          %337 = vsyncadd %s331, %s336
          %s338 = smul.addr %s32, 96
          %s339 = smul.addr %s338, 64
          %s340 = scalar_lea.hbm %s2, %s339
          %s341 = sshll.u32 %s334, 4
          %s342 = int_to_ptr.vmem [resolvable:$true] %s341
          %347 = dma.hbm_to_vmem [thread:$0]  %s340, 6144, %s342, %s331, 64, 64, 4
        $region28: #{net3_forward.1} parent=15 // pred_fallthru
          _
        // Predicated region
        $region29: #{net3_forward.1} parent=15 // pred_check
          %p348 = pneg %p130
        $region30: #{net3_forward.1} parent=15 // pred_check_branch
          %350 = sbr.rel (%p348) target = $region32
        $region31: #{net3_forward.1} parent=15 // pred_region
          %s351 = sand.u32 %s32, 1
          %s352 = scalar_lea.sflag [#allocation9], %s351
          %s353 = sand.u32 %s120, 1
          %s354 = smul.addr %s353, 32
          %s355 = scalar_lea.vmem [#allocation8], %s354
          %s357 = ssub.s32 512, 512
          %358 = vsyncadd %s352, %s357
          %s359 = smul.addr %s32, 8
          %s360 = smul.addr %s359, 64
          %s361 = scalar_lea.hbm %s3, %s360
          %s362 = sshll.u32 %s355, 4
          %s363 = int_to_ptr.vmem [resolvable:$true] %s362
          %368 = dma.hbm_to_vmem [thread:$0]  %s361, 512, %s363, %s352, 64, 64, 4
        $region32: #{net3_forward.1} parent=15 // pred_fallthru
          _
        // Predicated region
        $region33: #{net3_forward.1} parent=15 // pred_check
          %p369 = pneg %p156
        $region34: #{net3_forward.1} parent=15 // pred_check_branch
          %371 = sbr.rel (%p369) target = $region36
        $region35: #{net3_forward.1} parent=15 // pred_region
          %s372 = sand.u32 %s32, 1
          %s373 = scalar_lea.sflag [#allocation9], %s372
          %s374 = sand.u32 %s146, 1
          %s375 = smul.addr %s374, 120
          %s376 = scalar_lea.vmem [#allocation10], %s375
          %s378 = ssub.s32 1920, 1920
          %379 = vsyncadd %s373, %s378
          %s380 = smul.addr %s32, 30
          %s381 = smul.addr %s380, 64
          %s382 = scalar_lea.hbm %s4, %s381
          %s383 = sshll.u32 %s376, 4
          %s384 = int_to_ptr.vmem [resolvable:$true] %s383
          %389 = dma.hbm_to_vmem [thread:$0]  %s382, 1920, %s384, %s373, 64, 64, 4
        $region36: #{net3_forward.1} parent=15 // pred_fallthru
          _
        // Predicated region
        $region37: #{net3_forward.1} parent=15 // pred_check
          %p390 = pneg %p182
        $region38: #{net3_forward.1} parent=15 // pred_check_branch
          %392 = sbr.rel (%p390) target = $region40
        $region39: #{net3_forward.1} parent=15 // pred_region
          %s393 = sand.u32 %s32, 1
          %s394 = scalar_lea.sflag [#allocation12], %s393
          %s395 = sand.u32 %s172, 1
          %s396 = smul.addr %s395, 96
          %s397 = scalar_lea.vmem [#allocation11], %s396
          %s399 = ssub.s32 1536, 1536
          %400 = vsyncadd %s394, %s399
          %s401 = smul.addr %s32, 24
          %s402 = smul.addr %s401, 64
          %s403 = scalar_lea.hbm %s5, %s402
          %s404 = sshll.u32 %s397, 4
          %s405 = int_to_ptr.vmem [resolvable:$true] %s404
          %410 = dma.hbm_to_vmem [thread:$0]  %s403, 1536, %s405, %s394, 64, 64, 4
        $region40: #{net3_forward.1} parent=15 // pred_fallthru
          _
        // Predicated region
        $region41: #{net3_forward.1} parent=15 // pred_check
          %p411 = pneg %p208
        $region42: #{net3_forward.1} parent=15 // pred_check_branch
          %413 = sbr.rel (%p411) target = $region44
        $region43: #{net3_forward.1} parent=15 // pred_region
          %s414 = sand.u32 %s32, 1
          %s415 = scalar_lea.sflag [#allocation12], %s414
          %s416 = sand.u32 %s198, 1
          %s417 = smul.addr %s416, 56
          %s418 = scalar_lea.vmem [#allocation13], %s417
          %s420 = ssub.s32 896, 896
          %421 = vsyncadd %s415, %s420
          %s422 = smul.addr %s32, 14
          %s423 = smul.addr %s422, 64
          %s424 = scalar_lea.hbm %s6, %s423
          %s425 = sshll.u32 %s418, 4
          %s426 = int_to_ptr.vmem [resolvable:$true] %s425
          %431 = dma.hbm_to_vmem [thread:$0]  %s424, 896, %s426, %s415, 64, 64, 4
        $region44: #{net3_forward.1} parent=15 // pred_fallthru
          _
        // Predicated region
        $region45: #{net3_forward.1} parent=15 // pred_check
          %p432 = pneg %p234
        $region46: #{net3_forward.1} parent=15 // pred_check_branch
          %434 = sbr.rel (%p432) target = $region48
        $region47: #{net3_forward.1} parent=15 // pred_region
          %s435 = sand.u32 %s224, 1
          %s436 = scalar_lea.sflag [#allocation15], %s435
          %s437 = sand.u32 %s224, 1
          %s438 = smul.addr %s437, 4
          %s439 = scalar_lea.vmem [#allocation14], %s438
          %s441 = ssub.s32 64, 64
          %442 = vsyncadd %s436, %s441
          %s443 = smul.addr %s32, 4
          %s444 = smul.addr %s443, 16
          %s445 = scalar_lea.hbm %s7, %s444
          %s447 = sshll.u32 %s439, 4
          %s448 = int_to_ptr.vmem [resolvable:$true] %s447
          %450 = dma.hbm_to_vmem [thread:$0]  %s445, 64, %s448, %s436
        $region48: #{net3_forward.1} parent=15 // pred_fallthru
          _
      $region16: #{net3_forward.1} parent=5 // pred_fallthru
        _
      %p451 = scmp.le.s32.totalorder 1, %s32
      %p452 = scmp.lt.s32.totalorder %s32, 3
      %p453 = pnand %p451, %p452
      %p454 = pneg %p453
      // Predicated region
      $region49: #{net3_forward.1} parent=5 // pred_check
        _
      $region50: #{net3_forward.1} parent=5 // pred_check_branch
        %456 = sbr.rel (%p453) target = $region52
      $region51: #{net3_forward.1} parent=5 // pred_region
        %s457 = ssub.s32 %s32, 1
        %s458 = sand.u32 %s45, 1
        %s459 = scalar_lea.sflag [#allocation3], %s458
        %s460 = sand.u32 %s45, 1
        %s461 = smul.addr %s460, 128
        %s462 = scalar_lea.vmem [#allocation2], %s461
        // Predicated region
        $region53: #{net3_forward.1} parent=51 // pred_check
          %p463 = pneg %p58
        $region54: #{net3_forward.1} parent=51 // pred_check_branch
          %465 = sbr.rel (%p463) target = $region56
        $region55: #{net3_forward.1} parent=51 // pred_region
          %466 = dma.done %s459, 2048
        $region56: #{net3_forward.1} parent=51 // pred_fallthru
          _
        %s467 = sand.u32 %s37, 1
        %s468 = scalar_lea.sflag [#allocation6], %s467
        %s469 = sand.u32 %s71, 1
        %s470 = smul.addr %s469, 3072
        %s471 = scalar_lea.vmem [#allocation5], %s470
        // Predicated region
        $region57: #{net3_forward.1} parent=51 // pred_check
          %p472 = pneg %p84
        $region58: #{net3_forward.1} parent=51 // pred_check_branch
          %474 = sbr.rel (%p472) target = $region60
        $region59: #{net3_forward.1} parent=51 // pred_region
          %475 = dma.done %s468, 49152
        $region60: #{net3_forward.1} parent=51 // pred_fallthru
          _
        %s476 = sand.u32 %s37, 1
        %s477 = scalar_lea.sflag [#allocation6], %s476
        %s478 = sand.u32 %s97, 1
        %s479 = smul.addr %s478, 384
        %s480 = scalar_lea.vmem [#allocation7], %s479
        // Predicated region
        $region61: #{net3_forward.1} parent=51 // pred_check
          %p481 = pneg %p110
        $region62: #{net3_forward.1} parent=51 // pred_check_branch
          %483 = sbr.rel (%p481) target = $region64
        $region63: #{net3_forward.1} parent=51 // pred_region
          %484 = dma.done %s477, 6144
        $region64: #{net3_forward.1} parent=51 // pred_fallthru
          _
        %s485 = sand.u32 %s37, 1
        %s486 = scalar_lea.sflag [#allocation9], %s485
        %s487 = sand.u32 %s123, 1
        %s488 = smul.addr %s487, 32
        %s489 = scalar_lea.vmem [#allocation8], %s488
        // Predicated region
        $region65: #{net3_forward.1} parent=51 // pred_check
          %p490 = pneg %p136
        $region66: #{net3_forward.1} parent=51 // pred_check_branch
          %492 = sbr.rel (%p490) target = $region68
        $region67: #{net3_forward.1} parent=51 // pred_region
          %493 = dma.done %s486, 512
        $region68: #{net3_forward.1} parent=51 // pred_fallthru
          _
        %s494 = sand.u32 %s37, 1
        %s495 = scalar_lea.sflag [#allocation9], %s494
        %s496 = sand.u32 %s149, 1
        %s497 = smul.addr %s496, 120
        %s498 = scalar_lea.vmem [#allocation10], %s497
        // Predicated region
        $region69: #{net3_forward.1} parent=51 // pred_check
          %p499 = pneg %p162
        $region70: #{net3_forward.1} parent=51 // pred_check_branch
          %501 = sbr.rel (%p499) target = $region72
        $region71: #{net3_forward.1} parent=51 // pred_region
          %502 = dma.done %s495, 1920
        $region72: #{net3_forward.1} parent=51 // pred_fallthru
          _
        %s503 = sand.u32 %s37, 1
        %s504 = scalar_lea.sflag [#allocation12], %s503
        %s505 = sand.u32 %s175, 1
        %s506 = smul.addr %s505, 96
        %s507 = scalar_lea.vmem [#allocation11], %s506
        // Predicated region
        $region73: #{net3_forward.1} parent=51 // pred_check
          %p508 = pneg %p188
        $region74: #{net3_forward.1} parent=51 // pred_check_branch
          %510 = sbr.rel (%p508) target = $region76
        $region75: #{net3_forward.1} parent=51 // pred_region
          %511 = dma.done %s504, 1536
        $region76: #{net3_forward.1} parent=51 // pred_fallthru
          _
        %s512 = sand.u32 %s37, 1
        %s513 = scalar_lea.sflag [#allocation12], %s512
        %s514 = sand.u32 %s201, 1
        %s515 = smul.addr %s514, 56
        %s516 = scalar_lea.vmem [#allocation13], %s515
        // Predicated region
        $region77: #{net3_forward.1} parent=51 // pred_check
          %p517 = pneg %p214
        $region78: #{net3_forward.1} parent=51 // pred_check_branch
          %519 = sbr.rel (%p517) target = $region80
        $region79: #{net3_forward.1} parent=51 // pred_region
          %520 = dma.done %s513, 896
        $region80: #{net3_forward.1} parent=51 // pred_fallthru
          _
        %s521 = sand.u32 %s227, 1
        %s522 = scalar_lea.sflag [#allocation15], %s521
        %s523 = sand.u32 %s227, 1
        %s524 = smul.addr %s523, 4
        %s525 = scalar_lea.vmem [#allocation14], %s524
        // Predicated region
        $region81: #{net3_forward.1} parent=51 // pred_check
          %p526 = pneg %p240
        $region82: #{net3_forward.1} parent=51 // pred_check_branch
          %528 = sbr.rel (%p526) target = $region84
        $region83: #{net3_forward.1} parent=51 // pred_region
          %529 = dma.done %s522, 64
        $region84: #{net3_forward.1} parent=51 // pred_fallthru
          _
        %s530 = sand.u32 %s45, 1
        %s531 = scalar_lea.sflag [#allocation3], %s530
        %s532 = sand.u32 %s45, 1
        %s533 = smul.addr %s532, 128
        %s534 = scalar_lea.vmem [#allocation2], %s533
        %p535 = pneg %p58
        %p536 = pneg %p55
        %s537 = sand.u32 %s37, 1
        %s538 = scalar_lea.sflag [#allocation6], %s537
        %s539 = sand.u32 %s71, 1
        %s540 = smul.addr %s539, 3072
        %s541 = scalar_lea.vmem [#allocation5], %s540
        %p542 = pneg %p84
        %p543 = pneg %p81
        %s544 = sand.u32 %s37, 1
        %s545 = scalar_lea.sflag [#allocation6], %s544
        %s546 = sand.u32 %s97, 1
        %s547 = smul.addr %s546, 384
        %s548 = scalar_lea.vmem [#allocation7], %s547
        %p549 = pneg %p110
        %p550 = pneg %p107
        %s551 = sand.u32 %s37, 1
        %s552 = scalar_lea.sflag [#allocation9], %s551
        %s553 = sand.u32 %s123, 1
        %s554 = smul.addr %s553, 32
        %s555 = scalar_lea.vmem [#allocation8], %s554
        %p556 = pneg %p136
        %p557 = pneg %p133
        %s558 = sand.u32 %s37, 1
        %s559 = scalar_lea.sflag [#allocation9], %s558
        %s560 = sand.u32 %s149, 1
        %s561 = smul.addr %s560, 120
        %s562 = scalar_lea.vmem [#allocation10], %s561
        %p563 = pneg %p162
        %p564 = pneg %p159
        %s565 = sand.u32 %s37, 1
        %s566 = scalar_lea.sflag [#allocation12], %s565
        %s567 = sand.u32 %s175, 1
        %s568 = smul.addr %s567, 96
        %s569 = scalar_lea.vmem [#allocation11], %s568
        %p570 = pneg %p188
        %p571 = pneg %p185
        %s572 = sand.u32 %s37, 1
        %s573 = scalar_lea.sflag [#allocation12], %s572
        %s574 = sand.u32 %s201, 1
        %s575 = smul.addr %s574, 56
        %s576 = scalar_lea.vmem [#allocation13], %s575
        %p577 = pneg %p214
        %p578 = pneg %p211
        %s579 = sand.u32 %s227, 1
        %s580 = scalar_lea.sflag [#allocation15], %s579
        %s581 = sand.u32 %s227, 1
        %s582 = smul.addr %s581, 4
        %s583 = scalar_lea.vmem [#allocation14], %s582
        %p584 = pneg %p240
        %p585 = pneg %p237
        %p586 = pneg %p266
        %p587 = pneg %p263
        %s588 = sand.u32 %s253, 1
        %s589 = scalar_lea.sflag [#allocation4], %s588
        %s590 = sand.u32 %s253, 1
        %s591 = smul.addr %s590, 32
        %s592 = scalar_lea.vmem [#allocation16], %s591
        %v594 = vld [vmem:[%s462] sm:$0xff]
        %v595 = vld [vmem:[%s462 + $0x8] sm:$0xff]
        %v596 = vld [vmem:[%s462 + $0x10] sm:$0xff]
        %v597 = vld [vmem:[%s462 + $0x18] sm:$0xff]
        %v598 = vld [vmem:[%s462 + $0x20] sm:$0xff]
        %v599 = vld [vmem:[%s462 + $0x28] sm:$0xff]
        %v600 = vld [vmem:[%s462 + $0x30] sm:$0xff]
        %v601 = vld [vmem:[%s462 + $0x38] sm:$0xff]
        %v602 = vld [vmem:[%s462 + $0x40] sm:$0xff]
        %v603 = vld [vmem:[%s462 + $0x48] sm:$0xff]
        %v604 = vld [vmem:[%s462 + $0x50] sm:$0xff]
        %v605 = vld [vmem:[%s462 + $0x58] sm:$0xff]
        %v606 = vld [vmem:[%s462 + $0x60] sm:$0xff]
        %v607 = vld [vmem:[%s462 + $0x68] sm:$0xff]
        %v608 = vld [vmem:[%s462 + $0x70] sm:$0xff]
        %v609 = vld [vmem:[%s462 + $0x78] sm:$0xff]
        %v610 = vld [vmem:[%s525] sm:$0xf]
        %v611 = vld [vmem:[%s471] sm:$0xff]
        %v612 = vld [vmem:[%s471 + $0x8] sm:$0xff]
        %v613 = vld [vmem:[%s471 + $0x10] sm:$0xff]
        %v614 = vld [vmem:[%s471 + $0x18] sm:$0xff]
        %v615 = vld [vmem:[%s471 + $0x20] sm:$0xff]
        %v616 = vld [vmem:[%s471 + $0x28] sm:$0xff]
        %v617 = vld [vmem:[%s471 + $0x30] sm:$0xff]
        %v618 = vld [vmem:[%s471 + $0x38] sm:$0xff]
        %v619 = vld [vmem:[%s471 + $0x40] sm:$0xff]
        %v620 = vld [vmem:[%s471 + $0x48] sm:$0xff]
        %v621 = vld [vmem:[%s471 + $0x50] sm:$0xff]
        %v622 = vld [vmem:[%s471 + $0x58] sm:$0xff]
        %v623 = vld [vmem:[%s471 + $0x60] sm:$0xff]
        %v624 = vld [vmem:[%s471 + $0x68] sm:$0xff]
        %v625 = vld [vmem:[%s471 + $0x70] sm:$0xff]
        %v626 = vld [vmem:[%s471 + $0x78] sm:$0xff]
        %v627 = vld [vmem:[%s471 + $0x80] sm:$0xff]
        %v628 = vld [vmem:[%s471 + $0x88] sm:$0xff]
        %v629 = vld [vmem:[%s471 + $0x90] sm:$0xff]
        %v630 = vld [vmem:[%s471 + $0x98] sm:$0xff]
        %v631 = vld [vmem:[%s471 + $0xa0] sm:$0xff]
        %v632 = vld [vmem:[%s471 + $0xa8] sm:$0xff]
        %v633 = vld [vmem:[%s471 + $0xb0] sm:$0xff]
        %v634 = vld [vmem:[%s471 + $0xb8] sm:$0xff]
        %v635 = vld [vmem:[%s471 + $0xc0] sm:$0xff]
        %v636 = vld [vmem:[%s471 + $0xc8] sm:$0xff]
        %v637 = vld [vmem:[%s471 + $0xd0] sm:$0xff]
        %v638 = vld [vmem:[%s471 + $0xd8] sm:$0xff]
        %v639 = vld [vmem:[%s471 + $0xe0] sm:$0xff]
        %v640 = vld [vmem:[%s471 + $0xe8] sm:$0xff]
        %v641 = vld [vmem:[%s471 + $0xf0] sm:$0xff]
        %v642 = vld [vmem:[%s471 + $0xf8] sm:$0xff]
        %v643 = vld [vmem:[%s471 + $0x100] sm:$0xff]
        %v644 = vld [vmem:[%s471 + $0x108] sm:$0xff]
        %v645 = vld [vmem:[%s471 + $0x110] sm:$0xff]
        %v646 = vld [vmem:[%s471 + $0x118] sm:$0xff]
        %v647 = vld [vmem:[%s471 + $0x120] sm:$0xff]
        %v648 = vld [vmem:[%s471 + $0x128] sm:$0xff]
        %v649 = vld [vmem:[%s471 + $0x130] sm:$0xff]
        %v650 = vld [vmem:[%s471 + $0x138] sm:$0xff]
        %v651 = vld [vmem:[%s471 + $0x140] sm:$0xff]
        %v652 = vld [vmem:[%s471 + $0x148] sm:$0xff]
        %v653 = vld [vmem:[%s471 + $0x150] sm:$0xff]
        %v654 = vld [vmem:[%s471 + $0x158] sm:$0xff]
        %v655 = vld [vmem:[%s471 + $0x160] sm:$0xff]
        %v656 = vld [vmem:[%s471 + $0x168] sm:$0xff]
        %v657 = vld [vmem:[%s471 + $0x170] sm:$0xff]
        %v658 = vld [vmem:[%s471 + $0x178] sm:$0xff]
        %v659 = vld [vmem:[%s471 + $0x180] sm:$0xff]
        %v660 = vld [vmem:[%s471 + $0x188] sm:$0xff]
        %v661 = vld [vmem:[%s471 + $0x190] sm:$0xff]
        %v662 = vld [vmem:[%s471 + $0x198] sm:$0xff]
        %v663 = vld [vmem:[%s471 + $0x1a0] sm:$0xff]
        %v664 = vld [vmem:[%s471 + $0x1a8] sm:$0xff]
        %v665 = vld [vmem:[%s471 + $0x1b0] sm:$0xff]
        %v666 = vld [vmem:[%s471 + $0x1b8] sm:$0xff]
        %v667 = vld [vmem:[%s471 + $0x1c0] sm:$0xff]
        %v668 = vld [vmem:[%s471 + $0x1c8] sm:$0xff]
        %v669 = vld [vmem:[%s471 + $0x1d0] sm:$0xff]
        %v670 = vld [vmem:[%s471 + $0x1d8] sm:$0xff]
        %v671 = vld [vmem:[%s471 + $0x1e0] sm:$0xff]
        %v672 = vld [vmem:[%s471 + $0x1e8] sm:$0xff]
        %v673 = vld [vmem:[%s471 + $0x1f0] sm:$0xff]
        %v674 = vld [vmem:[%s471 + $0x1f8] sm:$0xff]
        %v675 = vld [vmem:[%s471 + $0x200] sm:$0xff]
        %v676 = vld [vmem:[%s471 + $0x208] sm:$0xff]
        %v677 = vld [vmem:[%s471 + $0x210] sm:$0xff]
        %v678 = vld [vmem:[%s471 + $0x218] sm:$0xff]
        %v679 = vld [vmem:[%s471 + $0x220] sm:$0xff]
        %v680 = vld [vmem:[%s471 + $0x228] sm:$0xff]
        %v681 = vld [vmem:[%s471 + $0x230] sm:$0xff]
        %v682 = vld [vmem:[%s471 + $0x238] sm:$0xff]
        %v683 = vld [vmem:[%s471 + $0x240] sm:$0xff]
        %v684 = vld [vmem:[%s471 + $0x248] sm:$0xff]
        %v685 = vld [vmem:[%s471 + $0x250] sm:$0xff]
        %v686 = vld [vmem:[%s471 + $0x258] sm:$0xff]
        %v687 = vld [vmem:[%s471 + $0x260] sm:$0xff]
        %v688 = vld [vmem:[%s471 + $0x268] sm:$0xff]
        %v689 = vld [vmem:[%s471 + $0x270] sm:$0xff]
        %v690 = vld [vmem:[%s471 + $0x278] sm:$0xff]
        %v691 = vld [vmem:[%s471 + $0x280] sm:$0xff]
        %v692 = vld [vmem:[%s471 + $0x288] sm:$0xff]
        %v693 = vld [vmem:[%s471 + $0x290] sm:$0xff]
        %v694 = vld [vmem:[%s471 + $0x298] sm:$0xff]
        %v695 = vld [vmem:[%s471 + $0x2a0] sm:$0xff]
        %v696 = vld [vmem:[%s471 + $0x2a8] sm:$0xff]
        %v697 = vld [vmem:[%s471 + $0x2b0] sm:$0xff]
        %v698 = vld [vmem:[%s471 + $0x2b8] sm:$0xff]
        %v699 = vld [vmem:[%s471 + $0x2c0] sm:$0xff]
        %v700 = vld [vmem:[%s471 + $0x2c8] sm:$0xff]
        %v701 = vld [vmem:[%s471 + $0x2d0] sm:$0xff]
        %v702 = vld [vmem:[%s471 + $0x2d8] sm:$0xff]
        %v703 = vld [vmem:[%s471 + $0x2e0] sm:$0xff]
        %v704 = vld [vmem:[%s471 + $0x2e8] sm:$0xff]
        %v705 = vld [vmem:[%s471 + $0x2f0] sm:$0xff]
        %v706 = vld [vmem:[%s471 + $0x2f8] sm:$0xff]
        %v707 = vld [vmem:[%s471 + $0x300] sm:$0xff]
        %v708 = vld [vmem:[%s471 + $0x308] sm:$0xff]
        %v709 = vld [vmem:[%s471 + $0x310] sm:$0xff]
        %v710 = vld [vmem:[%s471 + $0x318] sm:$0xff]
        %v711 = vld [vmem:[%s471 + $0x320] sm:$0xff]
        %v712 = vld [vmem:[%s471 + $0x328] sm:$0xff]
        %v713 = vld [vmem:[%s471 + $0x330] sm:$0xff]
        %v714 = vld [vmem:[%s471 + $0x338] sm:$0xff]
        %v715 = vld [vmem:[%s471 + $0x340] sm:$0xff]
        %v716 = vld [vmem:[%s471 + $0x348] sm:$0xff]
        %v717 = vld [vmem:[%s471 + $0x350] sm:$0xff]
        %v718 = vld [vmem:[%s471 + $0x358] sm:$0xff]
        %v719 = vld [vmem:[%s471 + $0x360] sm:$0xff]
        %v720 = vld [vmem:[%s471 + $0x368] sm:$0xff]
        %v721 = vld [vmem:[%s471 + $0x370] sm:$0xff]
        %v722 = vld [vmem:[%s471 + $0x378] sm:$0xff]
        %v723 = vld [vmem:[%s471 + $0x380] sm:$0xff]
        %v724 = vld [vmem:[%s471 + $0x388] sm:$0xff]
        %v725 = vld [vmem:[%s471 + $0x390] sm:$0xff]
        %v726 = vld [vmem:[%s471 + $0x398] sm:$0xff]
        %v727 = vld [vmem:[%s471 + $0x3a0] sm:$0xff]
        %v728 = vld [vmem:[%s471 + $0x3a8] sm:$0xff]
        %v729 = vld [vmem:[%s471 + $0x3b0] sm:$0xff]
        %v730 = vld [vmem:[%s471 + $0x3b8] sm:$0xff]
        %v731 = vld [vmem:[%s471 + $0x3c0] sm:$0xff]
        %v732 = vld [vmem:[%s471 + $0x3c8] sm:$0xff]
        %v733 = vld [vmem:[%s471 + $0x3d0] sm:$0xff]
        %v734 = vld [vmem:[%s471 + $0x3d8] sm:$0xff]
        %v735 = vld [vmem:[%s471 + $0x3e0] sm:$0xff]
        %v736 = vld [vmem:[%s471 + $0x3e8] sm:$0xff]
        %v737 = vld [vmem:[%s471 + $0x3f0] sm:$0xff]
        %v738 = vld [vmem:[%s471 + $0x3f8] sm:$0xff]
        %v755 = vunpack.c.l.b16 %v594
        %v756 = vunpack.c.h.b16 %v594
        %v757 = vunpack.c.l.b16 %v595
        %v758 = vunpack.c.h.b16 %v595
        %v759 = vunpack.c.l.b16 %v596
        %v760 = vunpack.c.h.b16 %v596
        %v761 = vunpack.c.l.b16 %v597
        %v762 = vunpack.c.h.b16 %v597
        %v763 = vunpack.c.l.b16 %v598
        %v764 = vunpack.c.h.b16 %v598
        %v765 = vunpack.c.l.b16 %v599
        %v766 = vunpack.c.h.b16 %v599
        %v767 = vunpack.c.l.b16 %v600
        %v768 = vunpack.c.h.b16 %v600
        %v769 = vunpack.c.l.b16 %v601
        %v770 = vunpack.c.h.b16 %v601
        %v771 = vunpack.c.l.b16 %v602
        %v772 = vunpack.c.h.b16 %v602
        %v773 = vunpack.c.l.b16 %v603
        %v774 = vunpack.c.h.b16 %v603
        %v775 = vunpack.c.l.b16 %v604
        %v776 = vunpack.c.h.b16 %v604
        %v777 = vunpack.c.l.b16 %v605
        %v778 = vunpack.c.h.b16 %v605
        %v779 = vunpack.c.l.b16 %v606
        %v780 = vunpack.c.h.b16 %v606
        %v781 = vunpack.c.l.b16 %v607
        %v782 = vunpack.c.h.b16 %v607
        %v783 = vunpack.c.l.b16 %v608
        %v784 = vunpack.c.h.b16 %v608
        %v785 = vunpack.c.l.b16 %v609
        %v786 = vunpack.c.h.b16 %v609
        %v787 = vpack.c.b16 %v763, %v755
        %v788 = vpack.c.b16 %v764, %v756
        %v789 = vpack.c.b16 %v765, %v757
        %v790 = vpack.c.b16 %v766, %v758
        %v791 = vpack.c.b16 %v767, %v759
        %v792 = vpack.c.b16 %v768, %v760
        %v793 = vpack.c.b16 %v769, %v761
        %v794 = vpack.c.b16 %v770, %v762
        %v795 = vpack.c.b16 %v779, %v771
        %v796 = vpack.c.b16 %v780, %v772
        %v797 = vpack.c.b16 %v781, %v773
        %v798 = vpack.c.b16 %v782, %v774
        %v799 = vpack.c.b16 %v783, %v775
        %v800 = vpack.c.b16 %v784, %v776
        %v801 = vpack.c.b16 %v785, %v777
        %v802 = vpack.c.b16 %v786, %v778
        %v947 = vunpack.c.l.b16 %v611
        %v948 = vunpack.c.h.b16 %v611
        %v949 = vunpack.c.l.b16 %v612
        %v950 = vunpack.c.h.b16 %v612
        %v951 = vunpack.c.l.b16 %v613
        %v952 = vunpack.c.h.b16 %v613
        %v953 = vunpack.c.l.b16 %v614
        %v954 = vunpack.c.h.b16 %v614
        %v955 = vunpack.c.l.b16 %v615
        %v956 = vunpack.c.h.b16 %v615
        %v957 = vunpack.c.l.b16 %v616
        %v958 = vunpack.c.h.b16 %v616
        %v959 = vunpack.c.l.b16 %v617
        %v960 = vunpack.c.h.b16 %v617
        %v961 = vunpack.c.l.b16 %v618
        %v962 = vunpack.c.h.b16 %v618
        %v963 = vunpack.c.l.b16 %v619
        %v964 = vunpack.c.h.b16 %v619
        %v965 = vunpack.c.l.b16 %v620
        %v966 = vunpack.c.h.b16 %v620
        %v967 = vunpack.c.l.b16 %v621
        %v968 = vunpack.c.h.b16 %v621
        %v969 = vunpack.c.l.b16 %v622
        %v970 = vunpack.c.h.b16 %v622
        %v971 = vunpack.c.l.b16 %v623
        %v972 = vunpack.c.h.b16 %v623
        %v973 = vunpack.c.l.b16 %v624
        %v974 = vunpack.c.h.b16 %v624
        %v975 = vunpack.c.l.b16 %v625
        %v976 = vunpack.c.h.b16 %v625
        %v977 = vunpack.c.l.b16 %v626
        %v978 = vunpack.c.h.b16 %v626
        %v979 = vunpack.c.l.b16 %v627
        %v980 = vunpack.c.h.b16 %v627
        %v981 = vunpack.c.l.b16 %v628
        %v982 = vunpack.c.h.b16 %v628
        %v983 = vunpack.c.l.b16 %v629
        %v984 = vunpack.c.h.b16 %v629
        %v985 = vunpack.c.l.b16 %v630
        %v986 = vunpack.c.h.b16 %v630
        %v987 = vunpack.c.l.b16 %v631
        %v988 = vunpack.c.h.b16 %v631
        %v989 = vunpack.c.l.b16 %v632
        %v990 = vunpack.c.h.b16 %v632
        %v991 = vunpack.c.l.b16 %v633
        %v992 = vunpack.c.h.b16 %v633
        %v993 = vunpack.c.l.b16 %v634
        %v994 = vunpack.c.h.b16 %v634
        %v995 = vunpack.c.l.b16 %v635
        %v996 = vunpack.c.h.b16 %v635
        %v997 = vunpack.c.l.b16 %v636
        %v998 = vunpack.c.h.b16 %v636
        %v999 = vunpack.c.l.b16 %v637
        %v1000 = vunpack.c.h.b16 %v637
        %v1001 = vunpack.c.l.b16 %v638
        %v1002 = vunpack.c.h.b16 %v638
        %v1003 = vunpack.c.l.b16 %v639
        %v1004 = vunpack.c.h.b16 %v639
        %v1005 = vunpack.c.l.b16 %v640
        %v1006 = vunpack.c.h.b16 %v640
        %v1007 = vunpack.c.l.b16 %v641
        %v1008 = vunpack.c.h.b16 %v641
        %v1009 = vunpack.c.l.b16 %v642
        %v1010 = vunpack.c.h.b16 %v642
        %v1011 = vunpack.c.l.b16 %v643
        %v1012 = vunpack.c.h.b16 %v643
        %v1013 = vunpack.c.l.b16 %v644
        %v1014 = vunpack.c.h.b16 %v644
        %v1015 = vunpack.c.l.b16 %v645
        %v1016 = vunpack.c.h.b16 %v645
        %v1017 = vunpack.c.l.b16 %v646
        %v1018 = vunpack.c.h.b16 %v646
        %v1019 = vunpack.c.l.b16 %v647
        %v1020 = vunpack.c.h.b16 %v647
        %v1021 = vunpack.c.l.b16 %v648
        %v1022 = vunpack.c.h.b16 %v648
        %v1023 = vunpack.c.l.b16 %v649
        %v1024 = vunpack.c.h.b16 %v649
        %v1025 = vunpack.c.l.b16 %v650
        %v1026 = vunpack.c.h.b16 %v650
        %v1027 = vunpack.c.l.b16 %v651
        %v1028 = vunpack.c.h.b16 %v651
        %v1029 = vunpack.c.l.b16 %v652
        %v1030 = vunpack.c.h.b16 %v652
        %v1031 = vunpack.c.l.b16 %v653
        %v1032 = vunpack.c.h.b16 %v653
        %v1033 = vunpack.c.l.b16 %v654
        %v1034 = vunpack.c.h.b16 %v654
        %v1035 = vunpack.c.l.b16 %v655
        %v1036 = vunpack.c.h.b16 %v655
        %v1037 = vunpack.c.l.b16 %v656
        %v1038 = vunpack.c.h.b16 %v656
        %v1039 = vunpack.c.l.b16 %v657
        %v1040 = vunpack.c.h.b16 %v657
        %v1041 = vunpack.c.l.b16 %v658
        %v1042 = vunpack.c.h.b16 %v658
        %v1043 = vunpack.c.l.b16 %v659
        %v1044 = vunpack.c.h.b16 %v659
        %v1045 = vunpack.c.l.b16 %v660
        %v1046 = vunpack.c.h.b16 %v660
        %v1047 = vunpack.c.l.b16 %v661
        %v1048 = vunpack.c.h.b16 %v661
        %v1049 = vunpack.c.l.b16 %v662
        %v1050 = vunpack.c.h.b16 %v662
        %v1051 = vunpack.c.l.b16 %v663
        %v1052 = vunpack.c.h.b16 %v663
        %v1053 = vunpack.c.l.b16 %v664
        %v1054 = vunpack.c.h.b16 %v664
        %v1055 = vunpack.c.l.b16 %v665
        %v1056 = vunpack.c.h.b16 %v665
        %v1057 = vunpack.c.l.b16 %v666
        %v1058 = vunpack.c.h.b16 %v666
        %v1059 = vunpack.c.l.b16 %v667
        %v1060 = vunpack.c.h.b16 %v667
        %v1061 = vunpack.c.l.b16 %v668
        %v1062 = vunpack.c.h.b16 %v668
        %v1063 = vunpack.c.l.b16 %v669
        %v1064 = vunpack.c.h.b16 %v669
        %v1065 = vunpack.c.l.b16 %v670
        %v1066 = vunpack.c.h.b16 %v670
        %v1067 = vunpack.c.l.b16 %v671
        %v1068 = vunpack.c.h.b16 %v671
        %v1069 = vunpack.c.l.b16 %v672
        %v1070 = vunpack.c.h.b16 %v672
        %v1071 = vunpack.c.l.b16 %v673
        %v1072 = vunpack.c.h.b16 %v673
        %v1073 = vunpack.c.l.b16 %v674
        %v1074 = vunpack.c.h.b16 %v674
        %v1075 = vunpack.c.l.b16 %v675
        %v1076 = vunpack.c.h.b16 %v675
        %v1077 = vunpack.c.l.b16 %v676
        %v1078 = vunpack.c.h.b16 %v676
        %v1079 = vunpack.c.l.b16 %v677
        %v1080 = vunpack.c.h.b16 %v677
        %v1081 = vunpack.c.l.b16 %v678
        %v1082 = vunpack.c.h.b16 %v678
        %v1083 = vunpack.c.l.b16 %v679
        %v1084 = vunpack.c.h.b16 %v679
        %v1085 = vunpack.c.l.b16 %v680
        %v1086 = vunpack.c.h.b16 %v680
        %v1087 = vunpack.c.l.b16 %v681
        %v1088 = vunpack.c.h.b16 %v681
        %v1089 = vunpack.c.l.b16 %v682
        %v1090 = vunpack.c.h.b16 %v682
        %v1091 = vunpack.c.l.b16 %v683
        %v1092 = vunpack.c.h.b16 %v683
        %v1093 = vunpack.c.l.b16 %v684
        %v1094 = vunpack.c.h.b16 %v684
        %v1095 = vunpack.c.l.b16 %v685
        %v1096 = vunpack.c.h.b16 %v685
        %v1097 = vunpack.c.l.b16 %v686
        %v1098 = vunpack.c.h.b16 %v686
        %v1099 = vunpack.c.l.b16 %v687
        %v1100 = vunpack.c.h.b16 %v687
        %v1101 = vunpack.c.l.b16 %v688
        %v1102 = vunpack.c.h.b16 %v688
        %v1103 = vunpack.c.l.b16 %v689
        %v1104 = vunpack.c.h.b16 %v689
        %v1105 = vunpack.c.l.b16 %v690
        %v1106 = vunpack.c.h.b16 %v690
        %v1107 = vunpack.c.l.b16 %v691
        %v1108 = vunpack.c.h.b16 %v691
        %v1109 = vunpack.c.l.b16 %v692
        %v1110 = vunpack.c.h.b16 %v692
        %v1111 = vunpack.c.l.b16 %v693
        %v1112 = vunpack.c.h.b16 %v693
        %v1113 = vunpack.c.l.b16 %v694
        %v1114 = vunpack.c.h.b16 %v694
        %v1115 = vunpack.c.l.b16 %v695
        %v1116 = vunpack.c.h.b16 %v695
        %v1117 = vunpack.c.l.b16 %v696
        %v1118 = vunpack.c.h.b16 %v696
        %v1119 = vunpack.c.l.b16 %v697
        %v1120 = vunpack.c.h.b16 %v697
        %v1121 = vunpack.c.l.b16 %v698
        %v1122 = vunpack.c.h.b16 %v698
        %v1123 = vunpack.c.l.b16 %v699
        %v1124 = vunpack.c.h.b16 %v699
        %v1125 = vunpack.c.l.b16 %v700
        %v1126 = vunpack.c.h.b16 %v700
        %v1127 = vunpack.c.l.b16 %v701
        %v1128 = vunpack.c.h.b16 %v701
        %v1129 = vunpack.c.l.b16 %v702
        %v1130 = vunpack.c.h.b16 %v702
        %v1131 = vunpack.c.l.b16 %v703
        %v1132 = vunpack.c.h.b16 %v703
        %v1133 = vunpack.c.l.b16 %v704
        %v1134 = vunpack.c.h.b16 %v704
        %v1135 = vunpack.c.l.b16 %v705
        %v1136 = vunpack.c.h.b16 %v705
        %v1137 = vunpack.c.l.b16 %v706
        %v1138 = vunpack.c.h.b16 %v706
        %v1139 = vunpack.c.l.b16 %v707
        %v1140 = vunpack.c.h.b16 %v707
        %v1141 = vunpack.c.l.b16 %v708
        %v1142 = vunpack.c.h.b16 %v708
        %v1143 = vunpack.c.l.b16 %v709
        %v1144 = vunpack.c.h.b16 %v709
        %v1145 = vunpack.c.l.b16 %v710
        %v1146 = vunpack.c.h.b16 %v710
        %v1147 = vunpack.c.l.b16 %v711
        %v1148 = vunpack.c.h.b16 %v711
        %v1149 = vunpack.c.l.b16 %v712
        %v1150 = vunpack.c.h.b16 %v712
        %v1151 = vunpack.c.l.b16 %v713
        %v1152 = vunpack.c.h.b16 %v713
        %v1153 = vunpack.c.l.b16 %v714
        %v1154 = vunpack.c.h.b16 %v714
        %v1155 = vunpack.c.l.b16 %v715
        %v1156 = vunpack.c.h.b16 %v715
        %v1157 = vunpack.c.l.b16 %v716
        %v1158 = vunpack.c.h.b16 %v716
        %v1159 = vunpack.c.l.b16 %v717
        %v1160 = vunpack.c.h.b16 %v717
        %v1161 = vunpack.c.l.b16 %v718
        %v1162 = vunpack.c.h.b16 %v718
        %v1163 = vunpack.c.l.b16 %v719
        %v1164 = vunpack.c.h.b16 %v719
        %v1165 = vunpack.c.l.b16 %v720
        %v1166 = vunpack.c.h.b16 %v720
        %v1167 = vunpack.c.l.b16 %v721
        %v1168 = vunpack.c.h.b16 %v721
        %v1169 = vunpack.c.l.b16 %v722
        %v1170 = vunpack.c.h.b16 %v722
        %v1171 = vunpack.c.l.b16 %v723
        %v1172 = vunpack.c.h.b16 %v723
        %v1173 = vunpack.c.l.b16 %v724
        %v1174 = vunpack.c.h.b16 %v724
        %v1175 = vunpack.c.l.b16 %v725
        %v1176 = vunpack.c.h.b16 %v725
        %v1177 = vunpack.c.l.b16 %v726
        %v1178 = vunpack.c.h.b16 %v726
        %v1179 = vunpack.c.l.b16 %v727
        %v1180 = vunpack.c.h.b16 %v727
        %v1181 = vunpack.c.l.b16 %v728
        %v1182 = vunpack.c.h.b16 %v728
        %v1183 = vunpack.c.l.b16 %v729
        %v1184 = vunpack.c.h.b16 %v729
        %v1185 = vunpack.c.l.b16 %v730
        %v1186 = vunpack.c.h.b16 %v730
        %v1187 = vunpack.c.l.b16 %v731
        %v1188 = vunpack.c.h.b16 %v731
        %v1189 = vunpack.c.l.b16 %v732
        %v1190 = vunpack.c.h.b16 %v732
        %v1191 = vunpack.c.l.b16 %v733
        %v1192 = vunpack.c.h.b16 %v733
        %v1193 = vunpack.c.l.b16 %v734
        %v1194 = vunpack.c.h.b16 %v734
        %v1195 = vunpack.c.l.b16 %v735
        %v1196 = vunpack.c.h.b16 %v735
        %v1197 = vunpack.c.l.b16 %v736
        %v1198 = vunpack.c.h.b16 %v736
        %v1199 = vunpack.c.l.b16 %v737
        %v1200 = vunpack.c.h.b16 %v737
        %v1201 = vunpack.c.l.b16 %v738
        %v1202 = vunpack.c.h.b16 %v738
        %v1203 = vpack.c.b16 %v949, %v947
        %v1204 = vpack.c.b16 %v950, %v948
        %v1205 = vpack.c.b16 %v953, %v951
        %v1206 = vpack.c.b16 %v954, %v952
        %v1207 = vpack.c.b16 %v957, %v955
        %v1208 = vpack.c.b16 %v958, %v956
        %v1209 = vpack.c.b16 %v961, %v959
        %v1210 = vpack.c.b16 %v962, %v960
        %v1211 = vpack.c.b16 %v965, %v963
        %v1212 = vpack.c.b16 %v966, %v964
        %v1213 = vpack.c.b16 %v969, %v967
        %v1214 = vpack.c.b16 %v970, %v968
        %v1215 = vpack.c.b16 %v973, %v971
        %v1216 = vpack.c.b16 %v974, %v972
        %v1217 = vpack.c.b16 %v977, %v975
        %v1218 = vpack.c.b16 %v978, %v976
        %v1219 = vpack.c.b16 %v981, %v979
        %v1220 = vpack.c.b16 %v982, %v980
        %v1221 = vpack.c.b16 %v985, %v983
        %v1222 = vpack.c.b16 %v986, %v984
        %v1223 = vpack.c.b16 %v989, %v987
        %v1224 = vpack.c.b16 %v990, %v988
        %v1225 = vpack.c.b16 %v993, %v991
        %v1226 = vpack.c.b16 %v994, %v992
        %v1227 = vpack.c.b16 %v997, %v995
        %v1228 = vpack.c.b16 %v998, %v996
        %v1229 = vpack.c.b16 %v1001, %v999
        %v1230 = vpack.c.b16 %v1002, %v1000
        %v1231 = vpack.c.b16 %v1005, %v1003
        %v1232 = vpack.c.b16 %v1006, %v1004
        %v1233 = vpack.c.b16 %v1009, %v1007
        %v1234 = vpack.c.b16 %v1010, %v1008
        %v1235 = vpack.c.b16 %v1013, %v1011
        %v1236 = vpack.c.b16 %v1014, %v1012
        %v1237 = vpack.c.b16 %v1017, %v1015
        %v1238 = vpack.c.b16 %v1018, %v1016
        %v1239 = vpack.c.b16 %v1021, %v1019
        %v1240 = vpack.c.b16 %v1022, %v1020
        %v1241 = vpack.c.b16 %v1025, %v1023
        %v1242 = vpack.c.b16 %v1026, %v1024
        %v1243 = vpack.c.b16 %v1029, %v1027
        %v1244 = vpack.c.b16 %v1030, %v1028
        %v1245 = vpack.c.b16 %v1033, %v1031
        %v1246 = vpack.c.b16 %v1034, %v1032
        %v1247 = vpack.c.b16 %v1037, %v1035
        %v1248 = vpack.c.b16 %v1038, %v1036
        %v1249 = vpack.c.b16 %v1041, %v1039
        %v1250 = vpack.c.b16 %v1042, %v1040
        %v1251 = vpack.c.b16 %v1045, %v1043
        %v1252 = vpack.c.b16 %v1046, %v1044
        %v1253 = vpack.c.b16 %v1049, %v1047
        %v1254 = vpack.c.b16 %v1050, %v1048
        %v1255 = vpack.c.b16 %v1053, %v1051
        %v1256 = vpack.c.b16 %v1054, %v1052
        %v1257 = vpack.c.b16 %v1057, %v1055
        %v1258 = vpack.c.b16 %v1058, %v1056
        %v1259 = vpack.c.b16 %v1061, %v1059
        %v1260 = vpack.c.b16 %v1062, %v1060
        %v1261 = vpack.c.b16 %v1065, %v1063
        %v1262 = vpack.c.b16 %v1066, %v1064
        %v1263 = vpack.c.b16 %v1069, %v1067
        %v1264 = vpack.c.b16 %v1070, %v1068
        %v1265 = vpack.c.b16 %v1073, %v1071
        %v1266 = vpack.c.b16 %v1074, %v1072
        %v1267 = vpack.c.b16 %v1077, %v1075
        %v1268 = vpack.c.b16 %v1078, %v1076
        %v1269 = vpack.c.b16 %v1081, %v1079
        %v1270 = vpack.c.b16 %v1082, %v1080
        %v1271 = vpack.c.b16 %v1085, %v1083
        %v1272 = vpack.c.b16 %v1086, %v1084
        %v1273 = vpack.c.b16 %v1089, %v1087
        %v1274 = vpack.c.b16 %v1090, %v1088
        %v1275 = vpack.c.b16 %v1093, %v1091
        %v1276 = vpack.c.b16 %v1094, %v1092
        %v1277 = vpack.c.b16 %v1097, %v1095
        %v1278 = vpack.c.b16 %v1098, %v1096
        %v1279 = vpack.c.b16 %v1101, %v1099
        %v1280 = vpack.c.b16 %v1102, %v1100
        %v1281 = vpack.c.b16 %v1105, %v1103
        %v1282 = vpack.c.b16 %v1106, %v1104
        %v1283 = vpack.c.b16 %v1109, %v1107
        %v1284 = vpack.c.b16 %v1110, %v1108
        %v1285 = vpack.c.b16 %v1113, %v1111
        %v1286 = vpack.c.b16 %v1114, %v1112
        %v1287 = vpack.c.b16 %v1117, %v1115
        %v1288 = vpack.c.b16 %v1118, %v1116
        %v1289 = vpack.c.b16 %v1121, %v1119
        %v1290 = vpack.c.b16 %v1122, %v1120
        %v1291 = vpack.c.b16 %v1125, %v1123
        %v1292 = vpack.c.b16 %v1126, %v1124
        %v1293 = vpack.c.b16 %v1129, %v1127
        %v1294 = vpack.c.b16 %v1130, %v1128
        %v1295 = vpack.c.b16 %v1133, %v1131
        %v1296 = vpack.c.b16 %v1134, %v1132
        %v1297 = vpack.c.b16 %v1137, %v1135
        %v1298 = vpack.c.b16 %v1138, %v1136
        %v1299 = vpack.c.b16 %v1141, %v1139
        %v1300 = vpack.c.b16 %v1142, %v1140
        %v1301 = vpack.c.b16 %v1145, %v1143
        %v1302 = vpack.c.b16 %v1146, %v1144
        %v1303 = vpack.c.b16 %v1149, %v1147
        %v1304 = vpack.c.b16 %v1150, %v1148
        %v1305 = vpack.c.b16 %v1153, %v1151
        %v1306 = vpack.c.b16 %v1154, %v1152
        %v1307 = vpack.c.b16 %v1157, %v1155
        %v1308 = vpack.c.b16 %v1158, %v1156
        %v1309 = vpack.c.b16 %v1161, %v1159
        %v1310 = vpack.c.b16 %v1162, %v1160
        %v1311 = vpack.c.b16 %v1165, %v1163
        %v1312 = vpack.c.b16 %v1166, %v1164
        %v1313 = vpack.c.b16 %v1169, %v1167
        %v1314 = vpack.c.b16 %v1170, %v1168
        %v1315 = vpack.c.b16 %v1173, %v1171
        %v1316 = vpack.c.b16 %v1174, %v1172
        %v1317 = vpack.c.b16 %v1177, %v1175
        %v1318 = vpack.c.b16 %v1178, %v1176
        %v1319 = vpack.c.b16 %v1181, %v1179
        %v1320 = vpack.c.b16 %v1182, %v1180
        %v1321 = vpack.c.b16 %v1185, %v1183
        %v1322 = vpack.c.b16 %v1186, %v1184
        %v1323 = vpack.c.b16 %v1189, %v1187
        %v1324 = vpack.c.b16 %v1190, %v1188
        %v1325 = vpack.c.b16 %v1193, %v1191
        %v1326 = vpack.c.b16 %v1194, %v1192
        %v1327 = vpack.c.b16 %v1197, %v1195
        %v1328 = vpack.c.b16 %v1198, %v1196
        %v1329 = vpack.c.b16 %v1201, %v1199
        %v1330 = vpack.c.b16 %v1202, %v1200
        %1459 = vmatprep.subr.bf16.mxu0 %v1204
        %1460 = vmatpush1.bf16.msra.mxu0 %v1203
        %1461 = vmatprep.subr.bf16.mxu0 %v1206
        %1462 = vmatpush1.bf16.msra.mxu0 %v1205
        %1463 = vmatprep.subr.bf16.mxu0 %v1208
        %1464 = vmatpush1.bf16.msra.mxu0 %v1207
        %1465 = vmatprep.subr.bf16.mxu0 %v1210
        %1466 = vmatpush1.bf16.msra.mxu0 %v1209
        %1467 = vmatprep.subr.bf16.mxu0 %v1212
        %1468 = vmatpush1.bf16.msra.mxu0 %v1211
        %1469 = vmatprep.subr.bf16.mxu0 %v1214
        %1470 = vmatpush1.bf16.msra.mxu0 %v1213
        %1471 = vmatprep.subr.bf16.mxu0 %v1216
        %1472 = vmatpush1.bf16.msra.mxu0 %v1215
        %1473 = vmatprep.subr.bf16.mxu0 %v1218
        %1474 = vmatpush1.bf16.msra.mxu0 %v1217
        %1475 = vmatprep.subr.bf16.mxu0 %v1220
        %1476 = vmatpush1.bf16.msra.mxu0 %v1219
        %1477 = vmatprep.subr.bf16.mxu0 %v1222
        %1478 = vmatpush1.bf16.msra.mxu0 %v1221
        %1479 = vmatprep.subr.bf16.mxu0 %v1224
        %1480 = vmatpush1.bf16.msra.mxu0 %v1223
        %1481 = vmatprep.subr.bf16.mxu0 %v1226
        %1482 = vmatpush1.bf16.msra.mxu0 %v1225
        %1483 = vmatprep.subr.bf16.mxu0 %v1228
        %1484 = vmatpush1.bf16.msra.mxu0 %v1227
        %1485 = vmatprep.subr.bf16.mxu0 %v1230
        %1486 = vmatpush1.bf16.msra.mxu0 %v1229
        %1487 = vmatprep.subr.bf16.mxu0 %v1232
        %1488 = vmatpush1.bf16.msra.mxu0 %v1231
        %1489 = vmatprep.subr.bf16.mxu0 %v1234
        %1490 = vmatpush1.bf16.msra.mxu0 %v1233
        %1491 = vmatprep.mubr.bf16.mxu0 %v788
        %1492 = vmatmul.mubr.bf16.gmra.mrb[0].mxu0 %v787
        %v1493 = vpop.f32.mrb[0].mxu0
        %v1494 = vadd.f32 0.0, %v1493
        %v1495 = vpop.f32.mrb[0].mxu0
        %v1496 = vadd.f32 0.0, %v1495
        %v1497 = vpop.f32.mrb[0].mxu0
        %v1498 = vadd.f32 0.0, %v1497
        %v1499 = vpop.f32.mrb[0].mxu0
        %v1500 = vadd.f32 0.0, %v1499
        %1501 = vmatprep.mubr.bf16.mxu0 %v796
        %1502 = vmatmul.mubr.bf16.gmra.mrb[0].mxu0 %v795
        %v1503 = vpop.f32.mrb[0].mxu0
        %v1504 = vadd.f32 0.0, %v1503
        %v1505 = vpop.f32.mrb[0].mxu0
        %v1506 = vadd.f32 0.0, %v1505
        %v1507 = vpop.f32.mrb[0].mxu0
        %v1508 = vadd.f32 0.0, %v1507
        %v1509 = vpop.f32.mrb[0].mxu0
        %v1510 = vadd.f32 0.0, %v1509
        %1511 = vdwg.mxu0
        %1512 = vmatprep.subr.bf16.mxu0 %v1236
        %1513 = vmatpush1.bf16.msra.mxu0 %v1235
        %1514 = vmatprep.subr.bf16.mxu0 %v1238
        %1515 = vmatpush1.bf16.msra.mxu0 %v1237
        %1516 = vmatprep.subr.bf16.mxu0 %v1240
        %1517 = vmatpush1.bf16.msra.mxu0 %v1239
        %1518 = vmatprep.subr.bf16.mxu0 %v1242
        %1519 = vmatpush1.bf16.msra.mxu0 %v1241
        %1520 = vmatprep.subr.bf16.mxu0 %v1244
        %1521 = vmatpush1.bf16.msra.mxu0 %v1243
        %1522 = vmatprep.subr.bf16.mxu0 %v1246
        %1523 = vmatpush1.bf16.msra.mxu0 %v1245
        %1524 = vmatprep.subr.bf16.mxu0 %v1248
        %1525 = vmatpush1.bf16.msra.mxu0 %v1247
        %1526 = vmatprep.subr.bf16.mxu0 %v1250
        %1527 = vmatpush1.bf16.msra.mxu0 %v1249
        %1528 = vmatprep.subr.bf16.mxu0 %v1252
        %1529 = vmatpush1.bf16.msra.mxu0 %v1251
        %1530 = vmatprep.subr.bf16.mxu0 %v1254
        %1531 = vmatpush1.bf16.msra.mxu0 %v1253
        %1532 = vmatprep.subr.bf16.mxu0 %v1256
        %1533 = vmatpush1.bf16.msra.mxu0 %v1255
        %1534 = vmatprep.subr.bf16.mxu0 %v1258
        %1535 = vmatpush1.bf16.msra.mxu0 %v1257
        %1536 = vmatprep.subr.bf16.mxu0 %v1260
        %1537 = vmatpush1.bf16.msra.mxu0 %v1259
        %1538 = vmatprep.subr.bf16.mxu0 %v1262
        %1539 = vmatpush1.bf16.msra.mxu0 %v1261
        %1540 = vmatprep.subr.bf16.mxu0 %v1264
        %1541 = vmatpush1.bf16.msra.mxu0 %v1263
        %1542 = vmatprep.subr.bf16.mxu0 %v1266
        %1543 = vmatpush1.bf16.msra.mxu0 %v1265
        %1544 = vmatprep.mubr.bf16.mxu0 %v790
        %1545 = vmatmul.mubr.bf16.gmra.mrb[0].mxu0 %v789
        %v1546 = vpop.f32.mrb[0].mxu0
        %v1547 = vadd.f32 %v1494, %v1546
        %v1548 = vpop.f32.mrb[0].mxu0
        %v1549 = vadd.f32 %v1496, %v1548
        %v1550 = vpop.f32.mrb[0].mxu0
        %v1551 = vadd.f32 %v1498, %v1550
        %v1552 = vpop.f32.mrb[0].mxu0
        %v1553 = vadd.f32 %v1500, %v1552
        %1554 = vmatprep.mubr.bf16.mxu0 %v798
        %1555 = vmatmul.mubr.bf16.gmra.mrb[0].mxu0 %v797
        %v1556 = vpop.f32.mrb[0].mxu0
        %v1557 = vadd.f32 %v1504, %v1556
        %v1558 = vpop.f32.mrb[0].mxu0
        %v1559 = vadd.f32 %v1506, %v1558
        %v1560 = vpop.f32.mrb[0].mxu0
        %v1561 = vadd.f32 %v1508, %v1560
        %v1562 = vpop.f32.mrb[0].mxu0
        %v1563 = vadd.f32 %v1510, %v1562
        %1564 = vdwg.mxu0
        %1565 = vmatprep.subr.bf16.mxu0 %v1268
        %1566 = vmatpush1.bf16.msra.mxu0 %v1267
        %1567 = vmatprep.subr.bf16.mxu0 %v1270
        %1568 = vmatpush1.bf16.msra.mxu0 %v1269
        %1569 = vmatprep.subr.bf16.mxu0 %v1272
        %1570 = vmatpush1.bf16.msra.mxu0 %v1271
        %1571 = vmatprep.subr.bf16.mxu0 %v1274
        %1572 = vmatpush1.bf16.msra.mxu0 %v1273
        %1573 = vmatprep.subr.bf16.mxu0 %v1276
        %1574 = vmatpush1.bf16.msra.mxu0 %v1275
        %1575 = vmatprep.subr.bf16.mxu0 %v1278
        %1576 = vmatpush1.bf16.msra.mxu0 %v1277
        %1577 = vmatprep.subr.bf16.mxu0 %v1280
        %1578 = vmatpush1.bf16.msra.mxu0 %v1279
        %1579 = vmatprep.subr.bf16.mxu0 %v1282
        %1580 = vmatpush1.bf16.msra.mxu0 %v1281
        %1581 = vmatprep.subr.bf16.mxu0 %v1284
        %1582 = vmatpush1.bf16.msra.mxu0 %v1283
        %1583 = vmatprep.subr.bf16.mxu0 %v1286
        %1584 = vmatpush1.bf16.msra.mxu0 %v1285
        %1585 = vmatprep.subr.bf16.mxu0 %v1288
        %1586 = vmatpush1.bf16.msra.mxu0 %v1287
        %1587 = vmatprep.subr.bf16.mxu0 %v1290
        %1588 = vmatpush1.bf16.msra.mxu0 %v1289
        %1589 = vmatprep.subr.bf16.mxu0 %v1292
        %1590 = vmatpush1.bf16.msra.mxu0 %v1291
        %1591 = vmatprep.subr.bf16.mxu0 %v1294
        %1592 = vmatpush1.bf16.msra.mxu0 %v1293
        %1593 = vmatprep.subr.bf16.mxu0 %v1296
        %1594 = vmatpush1.bf16.msra.mxu0 %v1295
        %1595 = vmatprep.subr.bf16.mxu0 %v1298
        %1596 = vmatpush1.bf16.msra.mxu0 %v1297
        %1597 = vmatprep.mubr.bf16.mxu0 %v792
        %1598 = vmatmul.mubr.bf16.gmra.mrb[0].mxu0 %v791
        %v1599 = vpop.f32.mrb[0].mxu0
        %v1600 = vadd.f32 %v1547, %v1599
        %v1601 = vpop.f32.mrb[0].mxu0
        %v1602 = vadd.f32 %v1549, %v1601
        %v1603 = vpop.f32.mrb[0].mxu0
        %v1604 = vadd.f32 %v1551, %v1603
        %v1605 = vpop.f32.mrb[0].mxu0
        %v1606 = vadd.f32 %v1553, %v1605
        %1607 = vmatprep.mubr.bf16.mxu0 %v800
        %1608 = vmatmul.mubr.bf16.gmra.mrb[0].mxu0 %v799
        %v1609 = vpop.f32.mrb[0].mxu0
        %v1610 = vadd.f32 %v1557, %v1609
        %v1611 = vpop.f32.mrb[0].mxu0
        %v1612 = vadd.f32 %v1559, %v1611
        %v1613 = vpop.f32.mrb[0].mxu0
        %v1614 = vadd.f32 %v1561, %v1613
        %v1615 = vpop.f32.mrb[0].mxu0
        %v1616 = vadd.f32 %v1563, %v1615
        %1617 = vdwg.mxu0
        %1618 = vmatprep.subr.bf16.mxu0 %v1300
        %1619 = vmatpush1.bf16.msra.mxu0 %v1299
        %1620 = vmatprep.subr.bf16.mxu0 %v1302
        %1621 = vmatpush1.bf16.msra.mxu0 %v1301
        %1622 = vmatprep.subr.bf16.mxu0 %v1304
        %1623 = vmatpush1.bf16.msra.mxu0 %v1303
        %1624 = vmatprep.subr.bf16.mxu0 %v1306
        %1625 = vmatpush1.bf16.msra.mxu0 %v1305
        %1626 = vmatprep.subr.bf16.mxu0 %v1308
        %1627 = vmatpush1.bf16.msra.mxu0 %v1307
        %1628 = vmatprep.subr.bf16.mxu0 %v1310
        %1629 = vmatpush1.bf16.msra.mxu0 %v1309
        %1630 = vmatprep.subr.bf16.mxu0 %v1312
        %1631 = vmatpush1.bf16.msra.mxu0 %v1311
        %1632 = vmatprep.subr.bf16.mxu0 %v1314
        %1633 = vmatpush1.bf16.msra.mxu0 %v1313
        %1634 = vmatprep.subr.bf16.mxu0 %v1316
        %1635 = vmatpush1.bf16.msra.mxu0 %v1315
        %1636 = vmatprep.subr.bf16.mxu0 %v1318
        %1637 = vmatpush1.bf16.msra.mxu0 %v1317
        %1638 = vmatprep.subr.bf16.mxu0 %v1320
        %1639 = vmatpush1.bf16.msra.mxu0 %v1319
        %1640 = vmatprep.subr.bf16.mxu0 %v1322
        %1641 = vmatpush1.bf16.msra.mxu0 %v1321
        %1642 = vmatprep.subr.bf16.mxu0 %v1324
        %1643 = vmatpush1.bf16.msra.mxu0 %v1323
        %1644 = vmatprep.subr.bf16.mxu0 %v1326
        %1645 = vmatpush1.bf16.msra.mxu0 %v1325
        %1646 = vmatprep.subr.bf16.mxu0 %v1328
        %1647 = vmatpush1.bf16.msra.mxu0 %v1327
        %1648 = vmatprep.subr.bf16.mxu0 %v1330
        %1649 = vmatpush1.bf16.msra.mxu0 %v1329
        %1650 = vmatprep.mubr.bf16.mxu0 %v794
        %1651 = vmatmul.mubr.bf16.gmra.mrb[0].mxu0 %v793
        %v1652 = vpop.f32.mrb[0].mxu0
        %v1653 = vadd.f32 %v1600, %v1652
        %v1654 = vpop.f32.mrb[0].mxu0
        %v1655 = vadd.f32 %v1602, %v1654
        %v1656 = vpop.f32.mrb[0].mxu0
        %v1657 = vadd.f32 %v1604, %v1656
        %v1658 = vpop.f32.mrb[0].mxu0
        %v1659 = vadd.f32 %v1606, %v1658
        %1660 = vmatprep.mubr.bf16.mxu0 %v802
        %1661 = vmatmul.mubr.bf16.gmra.mrb[0].mxu0 %v801
        %v1662 = vpop.f32.mrb[0].mxu0
        %v1663 = vadd.f32 %v1610, %v1662
        %v1664 = vpop.f32.mrb[0].mxu0
        %v1665 = vadd.f32 %v1612, %v1664
        %v1666 = vpop.f32.mrb[0].mxu0
        %v1667 = vadd.f32 %v1614, %v1666
        %v1668 = vpop.f32.mrb[0].mxu0
        %v1669 = vadd.f32 %v1616, %v1668
        %1670 = vdwg.mxu0
        %vm1679 = vcmask 1040384
        %v1680 = vrot.slane %v1653, 7
        %v1681 = vrot.slane %v1655, 7
        %v1682 = vrot.slane %v1657, 7
        %v1683 = vsel %vm1679, %v1680, %v1682
        %v1684 = vrot.slane %v1659, 7
        %v1685 = vsel %vm1679, %v1681, %v1684
        %v1686 = vrot.slane %v1663, 7
        %v1687 = vrot.slane %v1665, 7
        %v1688 = vrot.slane %v1667, 7
        %v1689 = vsel %vm1679, %v1686, %v1688
        %v1690 = vrot.slane %v1669, 7
        %v1691 = vsel %vm1679, %v1687, %v1690
        %v1700 = vsel %vm1679, 0.0, %v1680
        %v1701 = vsel %vm1679, 0.0, %v1681
        %v1702 = vsel %vm1679, 0.0, %v1686
        %v1703 = vsel %vm1679, 0.0, %v1687
        %v1704 = vadd.f32 %v1700, 0.0
        %v1705 = vadd.f32 %v1701, 0.0
        %v1706 = vadd.f32 %v1683, 0.0
        %v1707 = vadd.f32 %v1685, 0.0
        %v1708 = vadd.f32 %v1702, 0.0
        %v1709 = vadd.f32 %v1703, 0.0
        %v1710 = vadd.f32 %v1689, 0.0
        %v1711 = vadd.f32 %v1691, 0.0
        %v1712 = vld [vmem:[%s471 + $0x400] sm:$0xff]
        %v1713 = vld [vmem:[%s471 + $0x408] sm:$0xff]
        %v1714 = vld [vmem:[%s471 + $0x410] sm:$0xff]
        %v1715 = vld [vmem:[%s471 + $0x418] sm:$0xff]
        %v1716 = vld [vmem:[%s471 + $0x420] sm:$0xff]
        %v1717 = vld [vmem:[%s471 + $0x428] sm:$0xff]
        %v1718 = vld [vmem:[%s471 + $0x430] sm:$0xff]
        %v1719 = vld [vmem:[%s471 + $0x438] sm:$0xff]
        %v1720 = vld [vmem:[%s471 + $0x440] sm:$0xff]
        %v1721 = vld [vmem:[%s471 + $0x448] sm:$0xff]
        %v1722 = vld [vmem:[%s471 + $0x450] sm:$0xff]
        %v1723 = vld [vmem:[%s471 + $0x458] sm:$0xff]
        %v1724 = vld [vmem:[%s471 + $0x460] sm:$0xff]
        %v1725 = vld [vmem:[%s471 + $0x468] sm:$0xff]
        %v1726 = vld [vmem:[%s471 + $0x470] sm:$0xff]
        %v1727 = vld [vmem:[%s471 + $0x478] sm:$0xff]
        %v1728 = vld [vmem:[%s471 + $0x480] sm:$0xff]
        %v1729 = vld [vmem:[%s471 + $0x488] sm:$0xff]
        %v1730 = vld [vmem:[%s471 + $0x490] sm:$0xff]
        %v1731 = vld [vmem:[%s471 + $0x498] sm:$0xff]
        %v1732 = vld [vmem:[%s471 + $0x4a0] sm:$0xff]
        %v1733 = vld [vmem:[%s471 + $0x4a8] sm:$0xff]
        %v1734 = vld [vmem:[%s471 + $0x4b0] sm:$0xff]
        %v1735 = vld [vmem:[%s471 + $0x4b8] sm:$0xff]
        %v1736 = vld [vmem:[%s471 + $0x4c0] sm:$0xff]
        %v1737 = vld [vmem:[%s471 + $0x4c8] sm:$0xff]
        %v1738 = vld [vmem:[%s471 + $0x4d0] sm:$0xff]
        %v1739 = vld [vmem:[%s471 + $0x4d8] sm:$0xff]
        %v1740 = vld [vmem:[%s471 + $0x4e0] sm:$0xff]
        %v1741 = vld [vmem:[%s471 + $0x4e8] sm:$0xff]
        %v1742 = vld [vmem:[%s471 + $0x4f0] sm:$0xff]
        %v1743 = vld [vmem:[%s471 + $0x4f8] sm:$0xff]
        %v1744 = vld [vmem:[%s471 + $0x500] sm:$0xff]
        %v1745 = vld [vmem:[%s471 + $0x508] sm:$0xff]
        %v1746 = vld [vmem:[%s471 + $0x510] sm:$0xff]
        %v1747 = vld [vmem:[%s471 + $0x518] sm:$0xff]
        %v1748 = vld [vmem:[%s471 + $0x520] sm:$0xff]
        %v1749 = vld [vmem:[%s471 + $0x528] sm:$0xff]
        %v1750 = vld [vmem:[%s471 + $0x530] sm:$0xff]
        %v1751 = vld [vmem:[%s471 + $0x538] sm:$0xff]
        %v1752 = vld [vmem:[%s471 + $0x540] sm:$0xff]
        %v1753 = vld [vmem:[%s471 + $0x548] sm:$0xff]
        %v1754 = vld [vmem:[%s471 + $0x550] sm:$0xff]
        %v1755 = vld [vmem:[%s471 + $0x558] sm:$0xff]
        %v1756 = vld [vmem:[%s471 + $0x560] sm:$0xff]
        %v1757 = vld [vmem:[%s471 + $0x568] sm:$0xff]
        %v1758 = vld [vmem:[%s471 + $0x570] sm:$0xff]
        %v1759 = vld [vmem:[%s471 + $0x578] sm:$0xff]
        %v1760 = vld [vmem:[%s471 + $0x580] sm:$0xff]
        %v1761 = vld [vmem:[%s471 + $0x588] sm:$0xff]
        %v1762 = vld [vmem:[%s471 + $0x590] sm:$0xff]
        %v1763 = vld [vmem:[%s471 + $0x598] sm:$0xff]
        %v1764 = vld [vmem:[%s471 + $0x5a0] sm:$0xff]
        %v1765 = vld [vmem:[%s471 + $0x5a8] sm:$0xff]
        %v1766 = vld [vmem:[%s471 + $0x5b0] sm:$0xff]
        %v1767 = vld [vmem:[%s471 + $0x5b8] sm:$0xff]
        %v1768 = vld [vmem:[%s471 + $0x5c0] sm:$0xff]
        %v1769 = vld [vmem:[%s471 + $0x5c8] sm:$0xff]
        %v1770 = vld [vmem:[%s471 + $0x5d0] sm:$0xff]
        %v1771 = vld [vmem:[%s471 + $0x5d8] sm:$0xff]
        %v1772 = vld [vmem:[%s471 + $0x5e0] sm:$0xff]
        %v1773 = vld [vmem:[%s471 + $0x5e8] sm:$0xff]
        %v1774 = vld [vmem:[%s471 + $0x5f0] sm:$0xff]
        %v1775 = vld [vmem:[%s471 + $0x5f8] sm:$0xff]
        %v1776 = vld [vmem:[%s471 + $0x600] sm:$0xff]
        %v1777 = vld [vmem:[%s471 + $0x608] sm:$0xff]
        %v1778 = vld [vmem:[%s471 + $0x610] sm:$0xff]
        %v1779 = vld [vmem:[%s471 + $0x618] sm:$0xff]
        %v1780 = vld [vmem:[%s471 + $0x620] sm:$0xff]
        %v1781 = vld [vmem:[%s471 + $0x628] sm:$0xff]
        %v1782 = vld [vmem:[%s471 + $0x630] sm:$0xff]
        %v1783 = vld [vmem:[%s471 + $0x638] sm:$0xff]
        %v1784 = vld [vmem:[%s471 + $0x640] sm:$0xff]
        %v1785 = vld [vmem:[%s471 + $0x648] sm:$0xff]
        %v1786 = vld [vmem:[%s471 + $0x650] sm:$0xff]
        %v1787 = vld [vmem:[%s471 + $0x658] sm:$0xff]
        %v1788 = vld [vmem:[%s471 + $0x660] sm:$0xff]
        %v1789 = vld [vmem:[%s471 + $0x668] sm:$0xff]
        %v1790 = vld [vmem:[%s471 + $0x670] sm:$0xff]
        %v1791 = vld [vmem:[%s471 + $0x678] sm:$0xff]
        %v1792 = vld [vmem:[%s471 + $0x680] sm:$0xff]
        %v1793 = vld [vmem:[%s471 + $0x688] sm:$0xff]
        %v1794 = vld [vmem:[%s471 + $0x690] sm:$0xff]
        %v1795 = vld [vmem:[%s471 + $0x698] sm:$0xff]
        %v1796 = vld [vmem:[%s471 + $0x6a0] sm:$0xff]
        %v1797 = vld [vmem:[%s471 + $0x6a8] sm:$0xff]
        %v1798 = vld [vmem:[%s471 + $0x6b0] sm:$0xff]
        %v1799 = vld [vmem:[%s471 + $0x6b8] sm:$0xff]
        %v1800 = vld [vmem:[%s471 + $0x6c0] sm:$0xff]
        %v1801 = vld [vmem:[%s471 + $0x6c8] sm:$0xff]
        %v1802 = vld [vmem:[%s471 + $0x6d0] sm:$0xff]
        %v1803 = vld [vmem:[%s471 + $0x6d8] sm:$0xff]
        %v1804 = vld [vmem:[%s471 + $0x6e0] sm:$0xff]
        %v1805 = vld [vmem:[%s471 + $0x6e8] sm:$0xff]
        %v1806 = vld [vmem:[%s471 + $0x6f0] sm:$0xff]
        %v1807 = vld [vmem:[%s471 + $0x6f8] sm:$0xff]
        %v1808 = vld [vmem:[%s471 + $0x700] sm:$0xff]
        %v1809 = vld [vmem:[%s471 + $0x708] sm:$0xff]
        %v1810 = vld [vmem:[%s471 + $0x710] sm:$0xff]
        %v1811 = vld [vmem:[%s471 + $0x718] sm:$0xff]
        %v1812 = vld [vmem:[%s471 + $0x720] sm:$0xff]
        %v1813 = vld [vmem:[%s471 + $0x728] sm:$0xff]
        %v1814 = vld [vmem:[%s471 + $0x730] sm:$0xff]
        %v1815 = vld [vmem:[%s471 + $0x738] sm:$0xff]
        %v1816 = vld [vmem:[%s471 + $0x740] sm:$0xff]
        %v1817 = vld [vmem:[%s471 + $0x748] sm:$0xff]
        %v1818 = vld [vmem:[%s471 + $0x750] sm:$0xff]
        %v1819 = vld [vmem:[%s471 + $0x758] sm:$0xff]
        %v1820 = vld [vmem:[%s471 + $0x760] sm:$0xff]
        %v1821 = vld [vmem:[%s471 + $0x768] sm:$0xff]
        %v1822 = vld [vmem:[%s471 + $0x770] sm:$0xff]
        %v1823 = vld [vmem:[%s471 + $0x778] sm:$0xff]
        %v1824 = vld [vmem:[%s471 + $0x780] sm:$0xff]
        %v1825 = vld [vmem:[%s471 + $0x788] sm:$0xff]
        %v1826 = vld [vmem:[%s471 + $0x790] sm:$0xff]
        %v1827 = vld [vmem:[%s471 + $0x798] sm:$0xff]
        %v1828 = vld [vmem:[%s471 + $0x7a0] sm:$0xff]
        %v1829 = vld [vmem:[%s471 + $0x7a8] sm:$0xff]
        %v1830 = vld [vmem:[%s471 + $0x7b0] sm:$0xff]
        %v1831 = vld [vmem:[%s471 + $0x7b8] sm:$0xff]
        %v1832 = vld [vmem:[%s471 + $0x7c0] sm:$0xff]
        %v1833 = vld [vmem:[%s471 + $0x7c8] sm:$0xff]
        %v1834 = vld [vmem:[%s471 + $0x7d0] sm:$0xff]
        %v1835 = vld [vmem:[%s471 + $0x7d8] sm:$0xff]
        %v1836 = vld [vmem:[%s471 + $0x7e0] sm:$0xff]
        %v1837 = vld [vmem:[%s471 + $0x7e8] sm:$0xff]
        %v1838 = vld [vmem:[%s471 + $0x7f0] sm:$0xff]
        %v1839 = vld [vmem:[%s471 + $0x7f8] sm:$0xff]
        %v1968 = vunpack.c.l.b16 %v1712
        %v1969 = vunpack.c.h.b16 %v1712
        %v1970 = vunpack.c.l.b16 %v1713
        %v1971 = vunpack.c.h.b16 %v1713
        %v1972 = vunpack.c.l.b16 %v1714
        %v1973 = vunpack.c.h.b16 %v1714
        %v1974 = vunpack.c.l.b16 %v1715
        %v1975 = vunpack.c.h.b16 %v1715
        %v1976 = vunpack.c.l.b16 %v1716
        %v1977 = vunpack.c.h.b16 %v1716
        %v1978 = vunpack.c.l.b16 %v1717
        %v1979 = vunpack.c.h.b16 %v1717
        %v1980 = vunpack.c.l.b16 %v1718
        %v1981 = vunpack.c.h.b16 %v1718
        %v1982 = vunpack.c.l.b16 %v1719
        %v1983 = vunpack.c.h.b16 %v1719
        %v1984 = vunpack.c.l.b16 %v1720
        %v1985 = vunpack.c.h.b16 %v1720
        %v1986 = vunpack.c.l.b16 %v1721
        %v1987 = vunpack.c.h.b16 %v1721
        %v1988 = vunpack.c.l.b16 %v1722
        %v1989 = vunpack.c.h.b16 %v1722
        %v1990 = vunpack.c.l.b16 %v1723
        %v1991 = vunpack.c.h.b16 %v1723
        %v1992 = vunpack.c.l.b16 %v1724
        %v1993 = vunpack.c.h.b16 %v1724
        %v1994 = vunpack.c.l.b16 %v1725
        %v1995 = vunpack.c.h.b16 %v1725
        %v1996 = vunpack.c.l.b16 %v1726
        %v1997 = vunpack.c.h.b16 %v1726
        %v1998 = vunpack.c.l.b16 %v1727
        %v1999 = vunpack.c.h.b16 %v1727
        %v2000 = vunpack.c.l.b16 %v1728
        %v2001 = vunpack.c.h.b16 %v1728
        %v2002 = vunpack.c.l.b16 %v1729
        %v2003 = vunpack.c.h.b16 %v1729
        %v2004 = vunpack.c.l.b16 %v1730
        %v2005 = vunpack.c.h.b16 %v1730
        %v2006 = vunpack.c.l.b16 %v1731
        %v2007 = vunpack.c.h.b16 %v1731
        %v2008 = vunpack.c.l.b16 %v1732
        %v2009 = vunpack.c.h.b16 %v1732
        %v2010 = vunpack.c.l.b16 %v1733
        %v2011 = vunpack.c.h.b16 %v1733
        %v2012 = vunpack.c.l.b16 %v1734
        %v2013 = vunpack.c.h.b16 %v1734
        %v2014 = vunpack.c.l.b16 %v1735
        %v2015 = vunpack.c.h.b16 %v1735
        %v2016 = vunpack.c.l.b16 %v1736
        %v2017 = vunpack.c.h.b16 %v1736
        %v2018 = vunpack.c.l.b16 %v1737
        %v2019 = vunpack.c.h.b16 %v1737
        %v2020 = vunpack.c.l.b16 %v1738
        %v2021 = vunpack.c.h.b16 %v1738
        %v2022 = vunpack.c.l.b16 %v1739
        %v2023 = vunpack.c.h.b16 %v1739
        %v2024 = vunpack.c.l.b16 %v1740
        %v2025 = vunpack.c.h.b16 %v1740
        %v2026 = vunpack.c.l.b16 %v1741
        %v2027 = vunpack.c.h.b16 %v1741
        %v2028 = vunpack.c.l.b16 %v1742
        %v2029 = vunpack.c.h.b16 %v1742
        %v2030 = vunpack.c.l.b16 %v1743
        %v2031 = vunpack.c.h.b16 %v1743
        %v2032 = vunpack.c.l.b16 %v1744
        %v2033 = vunpack.c.h.b16 %v1744
        %v2034 = vunpack.c.l.b16 %v1745
        %v2035 = vunpack.c.h.b16 %v1745
        %v2036 = vunpack.c.l.b16 %v1746
        %v2037 = vunpack.c.h.b16 %v1746
        %v2038 = vunpack.c.l.b16 %v1747
        %v2039 = vunpack.c.h.b16 %v1747
        %v2040 = vunpack.c.l.b16 %v1748
        %v2041 = vunpack.c.h.b16 %v1748
        %v2042 = vunpack.c.l.b16 %v1749
        %v2043 = vunpack.c.h.b16 %v1749
        %v2044 = vunpack.c.l.b16 %v1750
        %v2045 = vunpack.c.h.b16 %v1750
        %v2046 = vunpack.c.l.b16 %v1751
        %v2047 = vunpack.c.h.b16 %v1751
        %v2048 = vunpack.c.l.b16 %v1752
        %v2049 = vunpack.c.h.b16 %v1752
        %v2050 = vunpack.c.l.b16 %v1753
        %v2051 = vunpack.c.h.b16 %v1753
        %v2052 = vunpack.c.l.b16 %v1754
        %v2053 = vunpack.c.h.b16 %v1754
        %v2054 = vunpack.c.l.b16 %v1755
        %v2055 = vunpack.c.h.b16 %v1755
        %v2056 = vunpack.c.l.b16 %v1756
        %v2057 = vunpack.c.h.b16 %v1756
        %v2058 = vunpack.c.l.b16 %v1757
        %v2059 = vunpack.c.h.b16 %v1757
        %v2060 = vunpack.c.l.b16 %v1758
        %v2061 = vunpack.c.h.b16 %v1758
        %v2062 = vunpack.c.l.b16 %v1759
        %v2063 = vunpack.c.h.b16 %v1759
        %v2064 = vunpack.c.l.b16 %v1760
        %v2065 = vunpack.c.h.b16 %v1760
        %v2066 = vunpack.c.l.b16 %v1761
        %v2067 = vunpack.c.h.b16 %v1761
        %v2068 = vunpack.c.l.b16 %v1762
        %v2069 = vunpack.c.h.b16 %v1762
        %v2070 = vunpack.c.l.b16 %v1763
        %v2071 = vunpack.c.h.b16 %v1763
        %v2072 = vunpack.c.l.b16 %v1764
        %v2073 = vunpack.c.h.b16 %v1764
        %v2074 = vunpack.c.l.b16 %v1765
        %v2075 = vunpack.c.h.b16 %v1765
        %v2076 = vunpack.c.l.b16 %v1766
        %v2077 = vunpack.c.h.b16 %v1766
        %v2078 = vunpack.c.l.b16 %v1767
        %v2079 = vunpack.c.h.b16 %v1767
        %v2080 = vunpack.c.l.b16 %v1768
        %v2081 = vunpack.c.h.b16 %v1768
        %v2082 = vunpack.c.l.b16 %v1769
        %v2083 = vunpack.c.h.b16 %v1769
        %v2084 = vunpack.c.l.b16 %v1770
        %v2085 = vunpack.c.h.b16 %v1770
        %v2086 = vunpack.c.l.b16 %v1771
        %v2087 = vunpack.c.h.b16 %v1771
        %v2088 = vunpack.c.l.b16 %v1772
        %v2089 = vunpack.c.h.b16 %v1772
        %v2090 = vunpack.c.l.b16 %v1773
        %v2091 = vunpack.c.h.b16 %v1773
        %v2092 = vunpack.c.l.b16 %v1774
        %v2093 = vunpack.c.h.b16 %v1774
        %v2094 = vunpack.c.l.b16 %v1775
        %v2095 = vunpack.c.h.b16 %v1775
        %v2096 = vunpack.c.l.b16 %v1776
        %v2097 = vunpack.c.h.b16 %v1776
        %v2098 = vunpack.c.l.b16 %v1777
        %v2099 = vunpack.c.h.b16 %v1777
        %v2100 = vunpack.c.l.b16 %v1778
        %v2101 = vunpack.c.h.b16 %v1778
        %v2102 = vunpack.c.l.b16 %v1779
        %v2103 = vunpack.c.h.b16 %v1779
        %v2104 = vunpack.c.l.b16 %v1780
        %v2105 = vunpack.c.h.b16 %v1780
        %v2106 = vunpack.c.l.b16 %v1781
        %v2107 = vunpack.c.h.b16 %v1781
        %v2108 = vunpack.c.l.b16 %v1782
        %v2109 = vunpack.c.h.b16 %v1782
        %v2110 = vunpack.c.l.b16 %v1783
        %v2111 = vunpack.c.h.b16 %v1783
        %v2112 = vunpack.c.l.b16 %v1784
        %v2113 = vunpack.c.h.b16 %v1784
        %v2114 = vunpack.c.l.b16 %v1785
        %v2115 = vunpack.c.h.b16 %v1785
        %v2116 = vunpack.c.l.b16 %v1786
        %v2117 = vunpack.c.h.b16 %v1786
        %v2118 = vunpack.c.l.b16 %v1787
        %v2119 = vunpack.c.h.b16 %v1787
        %v2120 = vunpack.c.l.b16 %v1788
        %v2121 = vunpack.c.h.b16 %v1788
        %v2122 = vunpack.c.l.b16 %v1789
        %v2123 = vunpack.c.h.b16 %v1789
        %v2124 = vunpack.c.l.b16 %v1790
        %v2125 = vunpack.c.h.b16 %v1790
        %v2126 = vunpack.c.l.b16 %v1791
        %v2127 = vunpack.c.h.b16 %v1791
        %v2128 = vunpack.c.l.b16 %v1792
        %v2129 = vunpack.c.h.b16 %v1792
        %v2130 = vunpack.c.l.b16 %v1793
        %v2131 = vunpack.c.h.b16 %v1793
        %v2132 = vunpack.c.l.b16 %v1794
        %v2133 = vunpack.c.h.b16 %v1794
        %v2134 = vunpack.c.l.b16 %v1795
        %v2135 = vunpack.c.h.b16 %v1795
        %v2136 = vunpack.c.l.b16 %v1796
        %v2137 = vunpack.c.h.b16 %v1796
        %v2138 = vunpack.c.l.b16 %v1797
        %v2139 = vunpack.c.h.b16 %v1797
        %v2140 = vunpack.c.l.b16 %v1798
        %v2141 = vunpack.c.h.b16 %v1798
        %v2142 = vunpack.c.l.b16 %v1799
        %v2143 = vunpack.c.h.b16 %v1799
        %v2144 = vunpack.c.l.b16 %v1800
        %v2145 = vunpack.c.h.b16 %v1800
        %v2146 = vunpack.c.l.b16 %v1801
        %v2147 = vunpack.c.h.b16 %v1801
        %v2148 = vunpack.c.l.b16 %v1802
        %v2149 = vunpack.c.h.b16 %v1802
        %v2150 = vunpack.c.l.b16 %v1803
        %v2151 = vunpack.c.h.b16 %v1803
        %v2152 = vunpack.c.l.b16 %v1804
        %v2153 = vunpack.c.h.b16 %v1804
        %v2154 = vunpack.c.l.b16 %v1805
        %v2155 = vunpack.c.h.b16 %v1805
        %v2156 = vunpack.c.l.b16 %v1806
        %v2157 = vunpack.c.h.b16 %v1806
        %v2158 = vunpack.c.l.b16 %v1807
        %v2159 = vunpack.c.h.b16 %v1807
        %v2160 = vunpack.c.l.b16 %v1808
        %v2161 = vunpack.c.h.b16 %v1808
        %v2162 = vunpack.c.l.b16 %v1809
        %v2163 = vunpack.c.h.b16 %v1809
        %v2164 = vunpack.c.l.b16 %v1810
        %v2165 = vunpack.c.h.b16 %v1810
        %v2166 = vunpack.c.l.b16 %v1811
        %v2167 = vunpack.c.h.b16 %v1811
        %v2168 = vunpack.c.l.b16 %v1812
        %v2169 = vunpack.c.h.b16 %v1812
        %v2170 = vunpack.c.l.b16 %v1813
        %v2171 = vunpack.c.h.b16 %v1813
        %v2172 = vunpack.c.l.b16 %v1814
        %v2173 = vunpack.c.h.b16 %v1814
        %v2174 = vunpack.c.l.b16 %v1815
        %v2175 = vunpack.c.h.b16 %v1815
        %v2176 = vunpack.c.l.b16 %v1816
        %v2177 = vunpack.c.h.b16 %v1816
        %v2178 = vunpack.c.l.b16 %v1817
        %v2179 = vunpack.c.h.b16 %v1817
        %v2180 = vunpack.c.l.b16 %v1818
        %v2181 = vunpack.c.h.b16 %v1818
        %v2182 = vunpack.c.l.b16 %v1819
        %v2183 = vunpack.c.h.b16 %v1819
        %v2184 = vunpack.c.l.b16 %v1820
        %v2185 = vunpack.c.h.b16 %v1820
        %v2186 = vunpack.c.l.b16 %v1821
        %v2187 = vunpack.c.h.b16 %v1821
        %v2188 = vunpack.c.l.b16 %v1822
        %v2189 = vunpack.c.h.b16 %v1822
        %v2190 = vunpack.c.l.b16 %v1823
        %v2191 = vunpack.c.h.b16 %v1823
        %v2192 = vunpack.c.l.b16 %v1824
        %v2193 = vunpack.c.h.b16 %v1824
        %v2194 = vunpack.c.l.b16 %v1825
        %v2195 = vunpack.c.h.b16 %v1825
        %v2196 = vunpack.c.l.b16 %v1826
        %v2197 = vunpack.c.h.b16 %v1826
        %v2198 = vunpack.c.l.b16 %v1827
        %v2199 = vunpack.c.h.b16 %v1827
        %v2200 = vunpack.c.l.b16 %v1828
        %v2201 = vunpack.c.h.b16 %v1828
        %v2202 = vunpack.c.l.b16 %v1829
        %v2203 = vunpack.c.h.b16 %v1829
        %v2204 = vunpack.c.l.b16 %v1830
        %v2205 = vunpack.c.h.b16 %v1830
        %v2206 = vunpack.c.l.b16 %v1831
        %v2207 = vunpack.c.h.b16 %v1831
        %v2208 = vunpack.c.l.b16 %v1832
        %v2209 = vunpack.c.h.b16 %v1832
        %v2210 = vunpack.c.l.b16 %v1833
        %v2211 = vunpack.c.h.b16 %v1833
        %v2212 = vunpack.c.l.b16 %v1834
        %v2213 = vunpack.c.h.b16 %v1834
        %v2214 = vunpack.c.l.b16 %v1835
        %v2215 = vunpack.c.h.b16 %v1835
        %v2216 = vunpack.c.l.b16 %v1836
        %v2217 = vunpack.c.h.b16 %v1836
        %v2218 = vunpack.c.l.b16 %v1837
        %v2219 = vunpack.c.h.b16 %v1837
        %v2220 = vunpack.c.l.b16 %v1838
        %v2221 = vunpack.c.h.b16 %v1838
        %v2222 = vunpack.c.l.b16 %v1839
        %v2223 = vunpack.c.h.b16 %v1839
        %v2224 = vpack.c.b16 %v1970, %v1968
        %v2225 = vpack.c.b16 %v1971, %v1969
        %v2226 = vpack.c.b16 %v1974, %v1972
        %v2227 = vpack.c.b16 %v1975, %v1973
        %v2228 = vpack.c.b16 %v1978, %v1976
        %v2229 = vpack.c.b16 %v1979, %v1977
        %v2230 = vpack.c.b16 %v1982, %v1980
        %v2231 = vpack.c.b16 %v1983, %v1981
        %v2232 = vpack.c.b16 %v1986, %v1984
        %v2233 = vpack.c.b16 %v1987, %v1985
        %v2234 = vpack.c.b16 %v1990, %v1988
        %v2235 = vpack.c.b16 %v1991, %v1989
        %v2236 = vpack.c.b16 %v1994, %v1992
        %v2237 = vpack.c.b16 %v1995, %v1993
        %v2238 = vpack.c.b16 %v1998, %v1996
        %v2239 = vpack.c.b16 %v1999, %v1997
        %v2240 = vpack.c.b16 %v2002, %v2000
        %v2241 = vpack.c.b16 %v2003, %v2001
        %v2242 = vpack.c.b16 %v2006, %v2004
        %v2243 = vpack.c.b16 %v2007, %v2005
        %v2244 = vpack.c.b16 %v2010, %v2008
        %v2245 = vpack.c.b16 %v2011, %v2009
        %v2246 = vpack.c.b16 %v2014, %v2012
        %v2247 = vpack.c.b16 %v2015, %v2013
        %v2248 = vpack.c.b16 %v2018, %v2016
        %v2249 = vpack.c.b16 %v2019, %v2017
        %v2250 = vpack.c.b16 %v2022, %v2020
        %v2251 = vpack.c.b16 %v2023, %v2021
        %v2252 = vpack.c.b16 %v2026, %v2024
        %v2253 = vpack.c.b16 %v2027, %v2025
        %v2254 = vpack.c.b16 %v2030, %v2028
        %v2255 = vpack.c.b16 %v2031, %v2029
        %v2256 = vpack.c.b16 %v2034, %v2032
        %v2257 = vpack.c.b16 %v2035, %v2033
        %v2258 = vpack.c.b16 %v2038, %v2036
        %v2259 = vpack.c.b16 %v2039, %v2037
        %v2260 = vpack.c.b16 %v2042, %v2040
        %v2261 = vpack.c.b16 %v2043, %v2041
        %v2262 = vpack.c.b16 %v2046, %v2044
        %v2263 = vpack.c.b16 %v2047, %v2045
        %v2264 = vpack.c.b16 %v2050, %v2048
        %v2265 = vpack.c.b16 %v2051, %v2049
        %v2266 = vpack.c.b16 %v2054, %v2052
        %v2267 = vpack.c.b16 %v2055, %v2053
        %v2268 = vpack.c.b16 %v2058, %v2056
        %v2269 = vpack.c.b16 %v2059, %v2057
        %v2270 = vpack.c.b16 %v2062, %v2060
        %v2271 = vpack.c.b16 %v2063, %v2061
        %v2272 = vpack.c.b16 %v2066, %v2064
        %v2273 = vpack.c.b16 %v2067, %v2065
        %v2274 = vpack.c.b16 %v2070, %v2068
        %v2275 = vpack.c.b16 %v2071, %v2069
        %v2276 = vpack.c.b16 %v2074, %v2072
        %v2277 = vpack.c.b16 %v2075, %v2073
        %v2278 = vpack.c.b16 %v2078, %v2076
        %v2279 = vpack.c.b16 %v2079, %v2077
        %v2280 = vpack.c.b16 %v2082, %v2080
        %v2281 = vpack.c.b16 %v2083, %v2081
        %v2282 = vpack.c.b16 %v2086, %v2084
        %v2283 = vpack.c.b16 %v2087, %v2085
        %v2284 = vpack.c.b16 %v2090, %v2088
        %v2285 = vpack.c.b16 %v2091, %v2089
        %v2286 = vpack.c.b16 %v2094, %v2092
        %v2287 = vpack.c.b16 %v2095, %v2093
        %v2288 = vpack.c.b16 %v2098, %v2096
        %v2289 = vpack.c.b16 %v2099, %v2097
        %v2290 = vpack.c.b16 %v2102, %v2100
        %v2291 = vpack.c.b16 %v2103, %v2101
        %v2292 = vpack.c.b16 %v2106, %v2104
        %v2293 = vpack.c.b16 %v2107, %v2105
        %v2294 = vpack.c.b16 %v2110, %v2108
        %v2295 = vpack.c.b16 %v2111, %v2109
        %v2296 = vpack.c.b16 %v2114, %v2112
        %v2297 = vpack.c.b16 %v2115, %v2113
        %v2298 = vpack.c.b16 %v2118, %v2116
        %v2299 = vpack.c.b16 %v2119, %v2117
        %v2300 = vpack.c.b16 %v2122, %v2120
        %v2301 = vpack.c.b16 %v2123, %v2121
        %v2302 = vpack.c.b16 %v2126, %v2124
        %v2303 = vpack.c.b16 %v2127, %v2125
        %v2304 = vpack.c.b16 %v2130, %v2128
        %v2305 = vpack.c.b16 %v2131, %v2129
        %v2306 = vpack.c.b16 %v2134, %v2132
        %v2307 = vpack.c.b16 %v2135, %v2133
        %v2308 = vpack.c.b16 %v2138, %v2136
        %v2309 = vpack.c.b16 %v2139, %v2137
        %v2310 = vpack.c.b16 %v2142, %v2140
        %v2311 = vpack.c.b16 %v2143, %v2141
        %v2312 = vpack.c.b16 %v2146, %v2144
        %v2313 = vpack.c.b16 %v2147, %v2145
        %v2314 = vpack.c.b16 %v2150, %v2148
        %v2315 = vpack.c.b16 %v2151, %v2149
        %v2316 = vpack.c.b16 %v2154, %v2152
        %v2317 = vpack.c.b16 %v2155, %v2153
        %v2318 = vpack.c.b16 %v2158, %v2156
        %v2319 = vpack.c.b16 %v2159, %v2157
        %v2320 = vpack.c.b16 %v2162, %v2160
        %v2321 = vpack.c.b16 %v2163, %v2161
        %v2322 = vpack.c.b16 %v2166, %v2164
        %v2323 = vpack.c.b16 %v2167, %v2165
        %v2324 = vpack.c.b16 %v2170, %v2168
        %v2325 = vpack.c.b16 %v2171, %v2169
        %v2326 = vpack.c.b16 %v2174, %v2172
        %v2327 = vpack.c.b16 %v2175, %v2173
        %v2328 = vpack.c.b16 %v2178, %v2176
        %v2329 = vpack.c.b16 %v2179, %v2177
        %v2330 = vpack.c.b16 %v2182, %v2180
        %v2331 = vpack.c.b16 %v2183, %v2181
        %v2332 = vpack.c.b16 %v2186, %v2184
        %v2333 = vpack.c.b16 %v2187, %v2185
        %v2334 = vpack.c.b16 %v2190, %v2188
        %v2335 = vpack.c.b16 %v2191, %v2189
        %v2336 = vpack.c.b16 %v2194, %v2192
        %v2337 = vpack.c.b16 %v2195, %v2193
        %v2338 = vpack.c.b16 %v2198, %v2196
        %v2339 = vpack.c.b16 %v2199, %v2197
        %v2340 = vpack.c.b16 %v2202, %v2200
        %v2341 = vpack.c.b16 %v2203, %v2201
        %v2342 = vpack.c.b16 %v2206, %v2204
        %v2343 = vpack.c.b16 %v2207, %v2205
        %v2344 = vpack.c.b16 %v2210, %v2208
        %v2345 = vpack.c.b16 %v2211, %v2209
        %v2346 = vpack.c.b16 %v2214, %v2212
        %v2347 = vpack.c.b16 %v2215, %v2213
        %v2348 = vpack.c.b16 %v2218, %v2216
        %v2349 = vpack.c.b16 %v2219, %v2217
        %v2350 = vpack.c.b16 %v2222, %v2220
        %v2351 = vpack.c.b16 %v2223, %v2221
        %2480 = vmatprep.subr.bf16.mxu0 %v2225
        %2481 = vmatpush1.bf16.msra.mxu0 %v2224
        %2482 = vmatprep.subr.bf16.mxu0 %v2227
        %2483 = vmatpush1.bf16.msra.mxu0 %v2226
        %2484 = vmatprep.subr.bf16.mxu0 %v2229
        %2485 = vmatpush1.bf16.msra.mxu0 %v2228
        %2486 = vmatprep.subr.bf16.mxu0 %v2231
        %2487 = vmatpush1.bf16.msra.mxu0 %v2230
        %2488 = vmatprep.subr.bf16.mxu0 %v2233
        %2489 = vmatpush1.bf16.msra.mxu0 %v2232
        %2490 = vmatprep.subr.bf16.mxu0 %v2235
        %2491 = vmatpush1.bf16.msra.mxu0 %v2234
        %2492 = vmatprep.subr.bf16.mxu0 %v2237
        %2493 = vmatpush1.bf16.msra.mxu0 %v2236
        %2494 = vmatprep.subr.bf16.mxu0 %v2239
        %2495 = vmatpush1.bf16.msra.mxu0 %v2238
        %2496 = vmatprep.subr.bf16.mxu0 %v2241
        %2497 = vmatpush1.bf16.msra.mxu0 %v2240
        %2498 = vmatprep.subr.bf16.mxu0 %v2243
        %2499 = vmatpush1.bf16.msra.mxu0 %v2242
        %2500 = vmatprep.subr.bf16.mxu0 %v2245
        %2501 = vmatpush1.bf16.msra.mxu0 %v2244
        %2502 = vmatprep.subr.bf16.mxu0 %v2247
        %2503 = vmatpush1.bf16.msra.mxu0 %v2246
        %2504 = vmatprep.subr.bf16.mxu0 %v2249
        %2505 = vmatpush1.bf16.msra.mxu0 %v2248
        %2506 = vmatprep.subr.bf16.mxu0 %v2251
        %2507 = vmatpush1.bf16.msra.mxu0 %v2250
        %2508 = vmatprep.subr.bf16.mxu0 %v2253
        %2509 = vmatpush1.bf16.msra.mxu0 %v2252
        %2510 = vmatprep.subr.bf16.mxu0 %v2255
        %2511 = vmatpush1.bf16.msra.mxu0 %v2254
        %2512 = vmatprep.mubr.bf16.mxu0 %v788
        %2513 = vmatmul.mubr.bf16.gmra.mrb[0].mxu0 %v787
        %v2514 = vpop.f32.mrb[0].mxu0
        %v2515 = vadd.f32 0.0, %v2514
        %v2516 = vpop.f32.mrb[0].mxu0
        %v2517 = vadd.f32 0.0, %v2516
        %v2518 = vpop.f32.mrb[0].mxu0
        %v2519 = vadd.f32 0.0, %v2518
        %v2520 = vpop.f32.mrb[0].mxu0
        %v2521 = vadd.f32 0.0, %v2520
        %2522 = vmatprep.mubr.bf16.mxu0 %v796
        %2523 = vmatmul.mubr.bf16.gmra.mrb[0].mxu0 %v795
        %v2524 = vpop.f32.mrb[0].mxu0
        %v2525 = vadd.f32 0.0, %v2524
        %v2526 = vpop.f32.mrb[0].mxu0
        %v2527 = vadd.f32 0.0, %v2526
        %v2528 = vpop.f32.mrb[0].mxu0
        %v2529 = vadd.f32 0.0, %v2528
        %v2530 = vpop.f32.mrb[0].mxu0
        %v2531 = vadd.f32 0.0, %v2530
        %2532 = vdwg.mxu0
        %2533 = vmatprep.subr.bf16.mxu0 %v2257
        %2534 = vmatpush1.bf16.msra.mxu0 %v2256
        %2535 = vmatprep.subr.bf16.mxu0 %v2259
        %2536 = vmatpush1.bf16.msra.mxu0 %v2258
        %2537 = vmatprep.subr.bf16.mxu0 %v2261
        %2538 = vmatpush1.bf16.msra.mxu0 %v2260
        %2539 = vmatprep.subr.bf16.mxu0 %v2263
        %2540 = vmatpush1.bf16.msra.mxu0 %v2262
        %2541 = vmatprep.subr.bf16.mxu0 %v2265
        %2542 = vmatpush1.bf16.msra.mxu0 %v2264
        %2543 = vmatprep.subr.bf16.mxu0 %v2267
        %2544 = vmatpush1.bf16.msra.mxu0 %v2266
        %2545 = vmatprep.subr.bf16.mxu0 %v2269
        %2546 = vmatpush1.bf16.msra.mxu0 %v2268
        %2547 = vmatprep.subr.bf16.mxu0 %v2271
        %2548 = vmatpush1.bf16.msra.mxu0 %v2270
        %2549 = vmatprep.subr.bf16.mxu0 %v2273
        %2550 = vmatpush1.bf16.msra.mxu0 %v2272
        %2551 = vmatprep.subr.bf16.mxu0 %v2275
        %2552 = vmatpush1.bf16.msra.mxu0 %v2274
        %2553 = vmatprep.subr.bf16.mxu0 %v2277
        %2554 = vmatpush1.bf16.msra.mxu0 %v2276
        %2555 = vmatprep.subr.bf16.mxu0 %v2279
        %2556 = vmatpush1.bf16.msra.mxu0 %v2278
        %2557 = vmatprep.subr.bf16.mxu0 %v2281
        %2558 = vmatpush1.bf16.msra.mxu0 %v2280
        %2559 = vmatprep.subr.bf16.mxu0 %v2283
        %2560 = vmatpush1.bf16.msra.mxu0 %v2282
        %2561 = vmatprep.subr.bf16.mxu0 %v2285
        %2562 = vmatpush1.bf16.msra.mxu0 %v2284
        %2563 = vmatprep.subr.bf16.mxu0 %v2287
        %2564 = vmatpush1.bf16.msra.mxu0 %v2286
        %2565 = vmatprep.mubr.bf16.mxu0 %v790
        %2566 = vmatmul.mubr.bf16.gmra.mrb[0].mxu0 %v789
        %v2567 = vpop.f32.mrb[0].mxu0
        %v2568 = vadd.f32 %v2515, %v2567
        %v2569 = vpop.f32.mrb[0].mxu0
        %v2570 = vadd.f32 %v2517, %v2569
        %v2571 = vpop.f32.mrb[0].mxu0
        %v2572 = vadd.f32 %v2519, %v2571
        %v2573 = vpop.f32.mrb[0].mxu0
        %v2574 = vadd.f32 %v2521, %v2573
        %2575 = vmatprep.mubr.bf16.mxu0 %v798
        %2576 = vmatmul.mubr.bf16.gmra.mrb[0].mxu0 %v797
        %v2577 = vpop.f32.mrb[0].mxu0
        %v2578 = vadd.f32 %v2525, %v2577
        %v2579 = vpop.f32.mrb[0].mxu0
        %v2580 = vadd.f32 %v2527, %v2579
        %v2581 = vpop.f32.mrb[0].mxu0
        %v2582 = vadd.f32 %v2529, %v2581
        %v2583 = vpop.f32.mrb[0].mxu0
        %v2584 = vadd.f32 %v2531, %v2583
        %2585 = vdwg.mxu0
        %2586 = vmatprep.subr.bf16.mxu0 %v2289
        %2587 = vmatpush1.bf16.msra.mxu0 %v2288
        %2588 = vmatprep.subr.bf16.mxu0 %v2291
        %2589 = vmatpush1.bf16.msra.mxu0 %v2290
        %2590 = vmatprep.subr.bf16.mxu0 %v2293
        %2591 = vmatpush1.bf16.msra.mxu0 %v2292
        %2592 = vmatprep.subr.bf16.mxu0 %v2295
        %2593 = vmatpush1.bf16.msra.mxu0 %v2294
        %2594 = vmatprep.subr.bf16.mxu0 %v2297
        %2595 = vmatpush1.bf16.msra.mxu0 %v2296
        %2596 = vmatprep.subr.bf16.mxu0 %v2299
        %2597 = vmatpush1.bf16.msra.mxu0 %v2298
        %2598 = vmatprep.subr.bf16.mxu0 %v2301
        %2599 = vmatpush1.bf16.msra.mxu0 %v2300
        %2600 = vmatprep.subr.bf16.mxu0 %v2303
        %2601 = vmatpush1.bf16.msra.mxu0 %v2302
        %2602 = vmatprep.subr.bf16.mxu0 %v2305
        %2603 = vmatpush1.bf16.msra.mxu0 %v2304
        %2604 = vmatprep.subr.bf16.mxu0 %v2307
        %2605 = vmatpush1.bf16.msra.mxu0 %v2306
        %2606 = vmatprep.subr.bf16.mxu0 %v2309
        %2607 = vmatpush1.bf16.msra.mxu0 %v2308
        %2608 = vmatprep.subr.bf16.mxu0 %v2311
        %2609 = vmatpush1.bf16.msra.mxu0 %v2310
        %2610 = vmatprep.subr.bf16.mxu0 %v2313
        %2611 = vmatpush1.bf16.msra.mxu0 %v2312
        %2612 = vmatprep.subr.bf16.mxu0 %v2315
        %2613 = vmatpush1.bf16.msra.mxu0 %v2314
        %2614 = vmatprep.subr.bf16.mxu0 %v2317
        %2615 = vmatpush1.bf16.msra.mxu0 %v2316
        %2616 = vmatprep.subr.bf16.mxu0 %v2319
        %2617 = vmatpush1.bf16.msra.mxu0 %v2318
        %2618 = vmatprep.mubr.bf16.mxu0 %v792
        %2619 = vmatmul.mubr.bf16.gmra.mrb[0].mxu0 %v791
        %v2620 = vpop.f32.mrb[0].mxu0
        %v2621 = vadd.f32 %v2568, %v2620
        %v2622 = vpop.f32.mrb[0].mxu0
        %v2623 = vadd.f32 %v2570, %v2622
        %v2624 = vpop.f32.mrb[0].mxu0
        %v2625 = vadd.f32 %v2572, %v2624
        %v2626 = vpop.f32.mrb[0].mxu0
        %v2627 = vadd.f32 %v2574, %v2626
        %2628 = vmatprep.mubr.bf16.mxu0 %v800
        %2629 = vmatmul.mubr.bf16.gmra.mrb[0].mxu0 %v799
        %v2630 = vpop.f32.mrb[0].mxu0
        %v2631 = vadd.f32 %v2578, %v2630
        %v2632 = vpop.f32.mrb[0].mxu0
        %v2633 = vadd.f32 %v2580, %v2632
        %v2634 = vpop.f32.mrb[0].mxu0
        %v2635 = vadd.f32 %v2582, %v2634
        %v2636 = vpop.f32.mrb[0].mxu0
        %v2637 = vadd.f32 %v2584, %v2636
        %2638 = vdwg.mxu0
        %2639 = vmatprep.subr.bf16.mxu0 %v2321
        %2640 = vmatpush1.bf16.msra.mxu0 %v2320
        %2641 = vmatprep.subr.bf16.mxu0 %v2323
        %2642 = vmatpush1.bf16.msra.mxu0 %v2322
        %2643 = vmatprep.subr.bf16.mxu0 %v2325
        %2644 = vmatpush1.bf16.msra.mxu0 %v2324
        %2645 = vmatprep.subr.bf16.mxu0 %v2327
        %2646 = vmatpush1.bf16.msra.mxu0 %v2326
        %2647 = vmatprep.subr.bf16.mxu0 %v2329
        %2648 = vmatpush1.bf16.msra.mxu0 %v2328
        %2649 = vmatprep.subr.bf16.mxu0 %v2331
        %2650 = vmatpush1.bf16.msra.mxu0 %v2330
        %2651 = vmatprep.subr.bf16.mxu0 %v2333
        %2652 = vmatpush1.bf16.msra.mxu0 %v2332
        %2653 = vmatprep.subr.bf16.mxu0 %v2335
        %2654 = vmatpush1.bf16.msra.mxu0 %v2334
        %2655 = vmatprep.subr.bf16.mxu0 %v2337
        %2656 = vmatpush1.bf16.msra.mxu0 %v2336
        %2657 = vmatprep.subr.bf16.mxu0 %v2339
        %2658 = vmatpush1.bf16.msra.mxu0 %v2338
        %2659 = vmatprep.subr.bf16.mxu0 %v2341
        %2660 = vmatpush1.bf16.msra.mxu0 %v2340
        %2661 = vmatprep.subr.bf16.mxu0 %v2343
        %2662 = vmatpush1.bf16.msra.mxu0 %v2342
        %2663 = vmatprep.subr.bf16.mxu0 %v2345
        %2664 = vmatpush1.bf16.msra.mxu0 %v2344
        %2665 = vmatprep.subr.bf16.mxu0 %v2347
        %2666 = vmatpush1.bf16.msra.mxu0 %v2346
        %2667 = vmatprep.subr.bf16.mxu0 %v2349
        %2668 = vmatpush1.bf16.msra.mxu0 %v2348
        %2669 = vmatprep.subr.bf16.mxu0 %v2351
        %2670 = vmatpush1.bf16.msra.mxu0 %v2350
        %2671 = vmatprep.mubr.bf16.mxu0 %v794
        %2672 = vmatmul.mubr.bf16.gmra.mrb[0].mxu0 %v793
        %v2673 = vpop.f32.mrb[0].mxu0
        %v2674 = vadd.f32 %v2621, %v2673
        %v2675 = vpop.f32.mrb[0].mxu0
        %v2676 = vadd.f32 %v2623, %v2675
        %v2677 = vpop.f32.mrb[0].mxu0
        %v2678 = vadd.f32 %v2625, %v2677
        %v2679 = vpop.f32.mrb[0].mxu0
        %v2680 = vadd.f32 %v2627, %v2679
        %2681 = vmatprep.mubr.bf16.mxu0 %v802
        %2682 = vmatmul.mubr.bf16.gmra.mrb[0].mxu0 %v801
        %v2683 = vpop.f32.mrb[0].mxu0
        %v2684 = vadd.f32 %v2631, %v2683
        %v2685 = vpop.f32.mrb[0].mxu0
        %v2686 = vadd.f32 %v2633, %v2685
        %v2687 = vpop.f32.mrb[0].mxu0
        %v2688 = vadd.f32 %v2635, %v2687
        %v2689 = vpop.f32.mrb[0].mxu0
        %v2690 = vadd.f32 %v2637, %v2689
        %2691 = vdwg.mxu0
        %v2692 = vadd.f32 %v1704, %v2674
        %v2693 = vadd.f32 %v1705, %v2676
        %v2694 = vadd.f32 %v1706, %v2678
        %v2695 = vadd.f32 %v1707, %v2680
        %v2696 = vadd.f32 %v1708, %v2684
        %v2697 = vadd.f32 %v1709, %v2686
        %v2698 = vadd.f32 %v1710, %v2688
        %v2699 = vadd.f32 %v1711, %v2690
        %v2700 = vld [vmem:[%s471 + $0x800] sm:$0xff]
        %v2701 = vld [vmem:[%s471 + $0x808] sm:$0xff]
        %v2702 = vld [vmem:[%s471 + $0x810] sm:$0xff]
        %v2703 = vld [vmem:[%s471 + $0x818] sm:$0xff]
        %v2704 = vld [vmem:[%s471 + $0x820] sm:$0xff]
        %v2705 = vld [vmem:[%s471 + $0x828] sm:$0xff]
        %v2706 = vld [vmem:[%s471 + $0x830] sm:$0xff]
        %v2707 = vld [vmem:[%s471 + $0x838] sm:$0xff]
        %v2708 = vld [vmem:[%s471 + $0x840] sm:$0xff]
        %v2709 = vld [vmem:[%s471 + $0x848] sm:$0xff]
        %v2710 = vld [vmem:[%s471 + $0x850] sm:$0xff]
        %v2711 = vld [vmem:[%s471 + $0x858] sm:$0xff]
        %v2712 = vld [vmem:[%s471 + $0x860] sm:$0xff]
        %v2713 = vld [vmem:[%s471 + $0x868] sm:$0xff]
        %v2714 = vld [vmem:[%s471 + $0x870] sm:$0xff]
        %v2715 = vld [vmem:[%s471 + $0x878] sm:$0xff]
        %v2716 = vld [vmem:[%s471 + $0x880] sm:$0xff]
        %v2717 = vld [vmem:[%s471 + $0x888] sm:$0xff]
        %v2718 = vld [vmem:[%s471 + $0x890] sm:$0xff]
        %v2719 = vld [vmem:[%s471 + $0x898] sm:$0xff]
        %v2720 = vld [vmem:[%s471 + $0x8a0] sm:$0xff]
        %v2721 = vld [vmem:[%s471 + $0x8a8] sm:$0xff]
        %v2722 = vld [vmem:[%s471 + $0x8b0] sm:$0xff]
        %v2723 = vld [vmem:[%s471 + $0x8b8] sm:$0xff]
        %v2724 = vld [vmem:[%s471 + $0x8c0] sm:$0xff]
        %v2725 = vld [vmem:[%s471 + $0x8c8] sm:$0xff]
        %v2726 = vld [vmem:[%s471 + $0x8d0] sm:$0xff]
        %v2727 = vld [vmem:[%s471 + $0x8d8] sm:$0xff]
        %v2728 = vld [vmem:[%s471 + $0x8e0] sm:$0xff]
        %v2729 = vld [vmem:[%s471 + $0x8e8] sm:$0xff]
        %v2730 = vld [vmem:[%s471 + $0x8f0] sm:$0xff]
        %v2731 = vld [vmem:[%s471 + $0x8f8] sm:$0xff]
        %v2732 = vld [vmem:[%s471 + $0x900] sm:$0xff]
        %v2733 = vld [vmem:[%s471 + $0x908] sm:$0xff]
        %v2734 = vld [vmem:[%s471 + $0x910] sm:$0xff]
        %v2735 = vld [vmem:[%s471 + $0x918] sm:$0xff]
        %v2736 = vld [vmem:[%s471 + $0x920] sm:$0xff]
        %v2737 = vld [vmem:[%s471 + $0x928] sm:$0xff]
        %v2738 = vld [vmem:[%s471 + $0x930] sm:$0xff]
        %v2739 = vld [vmem:[%s471 + $0x938] sm:$0xff]
        %v2740 = vld [vmem:[%s471 + $0x940] sm:$0xff]
        %v2741 = vld [vmem:[%s471 + $0x948] sm:$0xff]
        %v2742 = vld [vmem:[%s471 + $0x950] sm:$0xff]
        %v2743 = vld [vmem:[%s471 + $0x958] sm:$0xff]
        %v2744 = vld [vmem:[%s471 + $0x960] sm:$0xff]
        %v2745 = vld [vmem:[%s471 + $0x968] sm:$0xff]
        %v2746 = vld [vmem:[%s471 + $0x970] sm:$0xff]
        %v2747 = vld [vmem:[%s471 + $0x978] sm:$0xff]
        %v2748 = vld [vmem:[%s471 + $0x980] sm:$0xff]
        %v2749 = vld [vmem:[%s471 + $0x988] sm:$0xff]
        %v2750 = vld [vmem:[%s471 + $0x990] sm:$0xff]
        %v2751 = vld [vmem:[%s471 + $0x998] sm:$0xff]
        %v2752 = vld [vmem:[%s471 + $0x9a0] sm:$0xff]
        %v2753 = vld [vmem:[%s471 + $0x9a8] sm:$0xff]
        %v2754 = vld [vmem:[%s471 + $0x9b0] sm:$0xff]
        %v2755 = vld [vmem:[%s471 + $0x9b8] sm:$0xff]
        %v2756 = vld [vmem:[%s471 + $0x9c0] sm:$0xff]
        %v2757 = vld [vmem:[%s471 + $0x9c8] sm:$0xff]
        %v2758 = vld [vmem:[%s471 + $0x9d0] sm:$0xff]
        %v2759 = vld [vmem:[%s471 + $0x9d8] sm:$0xff]
        %v2760 = vld [vmem:[%s471 + $0x9e0] sm:$0xff]
        %v2761 = vld [vmem:[%s471 + $0x9e8] sm:$0xff]
        %v2762 = vld [vmem:[%s471 + $0x9f0] sm:$0xff]
        %v2763 = vld [vmem:[%s471 + $0x9f8] sm:$0xff]
        %v2764 = vld [vmem:[%s471 + $0xa00] sm:$0xff]
        %v2765 = vld [vmem:[%s471 + $0xa08] sm:$0xff]
        %v2766 = vld [vmem:[%s471 + $0xa10] sm:$0xff]
        %v2767 = vld [vmem:[%s471 + $0xa18] sm:$0xff]
        %v2768 = vld [vmem:[%s471 + $0xa20] sm:$0xff]
        %v2769 = vld [vmem:[%s471 + $0xa28] sm:$0xff]
        %v2770 = vld [vmem:[%s471 + $0xa30] sm:$0xff]
        %v2771 = vld [vmem:[%s471 + $0xa38] sm:$0xff]
        %v2772 = vld [vmem:[%s471 + $0xa40] sm:$0xff]
        %v2773 = vld [vmem:[%s471 + $0xa48] sm:$0xff]
        %v2774 = vld [vmem:[%s471 + $0xa50] sm:$0xff]
        %v2775 = vld [vmem:[%s471 + $0xa58] sm:$0xff]
        %v2776 = vld [vmem:[%s471 + $0xa60] sm:$0xff]
        %v2777 = vld [vmem:[%s471 + $0xa68] sm:$0xff]
        %v2778 = vld [vmem:[%s471 + $0xa70] sm:$0xff]
        %v2779 = vld [vmem:[%s471 + $0xa78] sm:$0xff]
        %v2780 = vld [vmem:[%s471 + $0xa80] sm:$0xff]
        %v2781 = vld [vmem:[%s471 + $0xa88] sm:$0xff]
        %v2782 = vld [vmem:[%s471 + $0xa90] sm:$0xff]
        %v2783 = vld [vmem:[%s471 + $0xa98] sm:$0xff]
        %v2784 = vld [vmem:[%s471 + $0xaa0] sm:$0xff]
        %v2785 = vld [vmem:[%s471 + $0xaa8] sm:$0xff]
        %v2786 = vld [vmem:[%s471 + $0xab0] sm:$0xff]
        %v2787 = vld [vmem:[%s471 + $0xab8] sm:$0xff]
        %v2788 = vld [vmem:[%s471 + $0xac0] sm:$0xff]
        %v2789 = vld [vmem:[%s471 + $0xac8] sm:$0xff]
        %v2790 = vld [vmem:[%s471 + $0xad0] sm:$0xff]
        %v2791 = vld [vmem:[%s471 + $0xad8] sm:$0xff]
        %v2792 = vld [vmem:[%s471 + $0xae0] sm:$0xff]
        %v2793 = vld [vmem:[%s471 + $0xae8] sm:$0xff]
        %v2794 = vld [vmem:[%s471 + $0xaf0] sm:$0xff]
        %v2795 = vld [vmem:[%s471 + $0xaf8] sm:$0xff]
        %v2796 = vld [vmem:[%s471 + $0xb00] sm:$0xff]
        %v2797 = vld [vmem:[%s471 + $0xb08] sm:$0xff]
        %v2798 = vld [vmem:[%s471 + $0xb10] sm:$0xff]
        %v2799 = vld [vmem:[%s471 + $0xb18] sm:$0xff]
        %v2800 = vld [vmem:[%s471 + $0xb20] sm:$0xff]
        %v2801 = vld [vmem:[%s471 + $0xb28] sm:$0xff]
        %v2802 = vld [vmem:[%s471 + $0xb30] sm:$0xff]
        %v2803 = vld [vmem:[%s471 + $0xb38] sm:$0xff]
        %v2804 = vld [vmem:[%s471 + $0xb40] sm:$0xff]
        %v2805 = vld [vmem:[%s471 + $0xb48] sm:$0xff]
        %v2806 = vld [vmem:[%s471 + $0xb50] sm:$0xff]
        %v2807 = vld [vmem:[%s471 + $0xb58] sm:$0xff]
        %v2808 = vld [vmem:[%s471 + $0xb60] sm:$0xff]
        %v2809 = vld [vmem:[%s471 + $0xb68] sm:$0xff]
        %v2810 = vld [vmem:[%s471 + $0xb70] sm:$0xff]
        %v2811 = vld [vmem:[%s471 + $0xb78] sm:$0xff]
        %v2812 = vld [vmem:[%s471 + $0xb80] sm:$0xff]
        %v2813 = vld [vmem:[%s471 + $0xb88] sm:$0xff]
        %v2814 = vld [vmem:[%s471 + $0xb90] sm:$0xff]
        %v2815 = vld [vmem:[%s471 + $0xb98] sm:$0xff]
        %v2816 = vld [vmem:[%s471 + $0xba0] sm:$0xff]
        %v2817 = vld [vmem:[%s471 + $0xba8] sm:$0xff]
        %v2818 = vld [vmem:[%s471 + $0xbb0] sm:$0xff]
        %v2819 = vld [vmem:[%s471 + $0xbb8] sm:$0xff]
        %v2820 = vld [vmem:[%s471 + $0xbc0] sm:$0xff]
        %v2821 = vld [vmem:[%s471 + $0xbc8] sm:$0xff]
        %v2822 = vld [vmem:[%s471 + $0xbd0] sm:$0xff]
        %v2823 = vld [vmem:[%s471 + $0xbd8] sm:$0xff]
        %v2824 = vld [vmem:[%s471 + $0xbe0] sm:$0xff]
        %v2825 = vld [vmem:[%s471 + $0xbe8] sm:$0xff]
        %v2826 = vld [vmem:[%s471 + $0xbf0] sm:$0xff]
        %v2827 = vld [vmem:[%s471 + $0xbf8] sm:$0xff]
        %v2956 = vunpack.c.l.b16 %v2700
        %v2957 = vunpack.c.h.b16 %v2700
        %v2958 = vunpack.c.l.b16 %v2701
        %v2959 = vunpack.c.h.b16 %v2701
        %v2960 = vunpack.c.l.b16 %v2702
        %v2961 = vunpack.c.h.b16 %v2702
        %v2962 = vunpack.c.l.b16 %v2703
        %v2963 = vunpack.c.h.b16 %v2703
        %v2964 = vunpack.c.l.b16 %v2704
        %v2965 = vunpack.c.h.b16 %v2704
        %v2966 = vunpack.c.l.b16 %v2705
        %v2967 = vunpack.c.h.b16 %v2705
        %v2968 = vunpack.c.l.b16 %v2706
        %v2969 = vunpack.c.h.b16 %v2706
        %v2970 = vunpack.c.l.b16 %v2707
        %v2971 = vunpack.c.h.b16 %v2707
        %v2972 = vunpack.c.l.b16 %v2708
        %v2973 = vunpack.c.h.b16 %v2708
        %v2974 = vunpack.c.l.b16 %v2709
        %v2975 = vunpack.c.h.b16 %v2709
        %v2976 = vunpack.c.l.b16 %v2710
        %v2977 = vunpack.c.h.b16 %v2710
        %v2978 = vunpack.c.l.b16 %v2711
        %v2979 = vunpack.c.h.b16 %v2711
        %v2980 = vunpack.c.l.b16 %v2712
        %v2981 = vunpack.c.h.b16 %v2712
        %v2982 = vunpack.c.l.b16 %v2713
        %v2983 = vunpack.c.h.b16 %v2713
        %v2984 = vunpack.c.l.b16 %v2714
        %v2985 = vunpack.c.h.b16 %v2714
        %v2986 = vunpack.c.l.b16 %v2715
        %v2987 = vunpack.c.h.b16 %v2715
        %v2988 = vunpack.c.l.b16 %v2716
        %v2989 = vunpack.c.h.b16 %v2716
        %v2990 = vunpack.c.l.b16 %v2717
        %v2991 = vunpack.c.h.b16 %v2717
        %v2992 = vunpack.c.l.b16 %v2718
        %v2993 = vunpack.c.h.b16 %v2718
        %v2994 = vunpack.c.l.b16 %v2719
        %v2995 = vunpack.c.h.b16 %v2719
        %v2996 = vunpack.c.l.b16 %v2720
        %v2997 = vunpack.c.h.b16 %v2720
        %v2998 = vunpack.c.l.b16 %v2721
        %v2999 = vunpack.c.h.b16 %v2721
        %v3000 = vunpack.c.l.b16 %v2722
        %v3001 = vunpack.c.h.b16 %v2722
        %v3002 = vunpack.c.l.b16 %v2723
        %v3003 = vunpack.c.h.b16 %v2723
        %v3004 = vunpack.c.l.b16 %v2724
        %v3005 = vunpack.c.h.b16 %v2724
        %v3006 = vunpack.c.l.b16 %v2725
        %v3007 = vunpack.c.h.b16 %v2725
        %v3008 = vunpack.c.l.b16 %v2726
        %v3009 = vunpack.c.h.b16 %v2726
        %v3010 = vunpack.c.l.b16 %v2727
        %v3011 = vunpack.c.h.b16 %v2727
        %v3012 = vunpack.c.l.b16 %v2728
        %v3013 = vunpack.c.h.b16 %v2728
        %v3014 = vunpack.c.l.b16 %v2729
        %v3015 = vunpack.c.h.b16 %v2729
        %v3016 = vunpack.c.l.b16 %v2730
        %v3017 = vunpack.c.h.b16 %v2730
        %v3018 = vunpack.c.l.b16 %v2731
        %v3019 = vunpack.c.h.b16 %v2731
        %v3020 = vunpack.c.l.b16 %v2732
        %v3021 = vunpack.c.h.b16 %v2732
        %v3022 = vunpack.c.l.b16 %v2733
        %v3023 = vunpack.c.h.b16 %v2733
        %v3024 = vunpack.c.l.b16 %v2734
        %v3025 = vunpack.c.h.b16 %v2734
        %v3026 = vunpack.c.l.b16 %v2735
        %v3027 = vunpack.c.h.b16 %v2735
        %v3028 = vunpack.c.l.b16 %v2736
        %v3029 = vunpack.c.h.b16 %v2736
        %v3030 = vunpack.c.l.b16 %v2737
        %v3031 = vunpack.c.h.b16 %v2737
        %v3032 = vunpack.c.l.b16 %v2738
        %v3033 = vunpack.c.h.b16 %v2738
        %v3034 = vunpack.c.l.b16 %v2739
        %v3035 = vunpack.c.h.b16 %v2739
        %v3036 = vunpack.c.l.b16 %v2740
        %v3037 = vunpack.c.h.b16 %v2740
        %v3038 = vunpack.c.l.b16 %v2741
        %v3039 = vunpack.c.h.b16 %v2741
        %v3040 = vunpack.c.l.b16 %v2742
        %v3041 = vunpack.c.h.b16 %v2742
        %v3042 = vunpack.c.l.b16 %v2743
        %v3043 = vunpack.c.h.b16 %v2743
        %v3044 = vunpack.c.l.b16 %v2744
        %v3045 = vunpack.c.h.b16 %v2744
        %v3046 = vunpack.c.l.b16 %v2745
        %v3047 = vunpack.c.h.b16 %v2745
        %v3048 = vunpack.c.l.b16 %v2746
        %v3049 = vunpack.c.h.b16 %v2746
        %v3050 = vunpack.c.l.b16 %v2747
        %v3051 = vunpack.c.h.b16 %v2747
        %v3052 = vunpack.c.l.b16 %v2748
        %v3053 = vunpack.c.h.b16 %v2748
        %v3054 = vunpack.c.l.b16 %v2749
        %v3055 = vunpack.c.h.b16 %v2749
        %v3056 = vunpack.c.l.b16 %v2750
        %v3057 = vunpack.c.h.b16 %v2750
        %v3058 = vunpack.c.l.b16 %v2751
        %v3059 = vunpack.c.h.b16 %v2751
        %v3060 = vunpack.c.l.b16 %v2752
        %v3061 = vunpack.c.h.b16 %v2752
        %v3062 = vunpack.c.l.b16 %v2753
        %v3063 = vunpack.c.h.b16 %v2753
        %v3064 = vunpack.c.l.b16 %v2754
        %v3065 = vunpack.c.h.b16 %v2754
        %v3066 = vunpack.c.l.b16 %v2755
        %v3067 = vunpack.c.h.b16 %v2755
        %v3068 = vunpack.c.l.b16 %v2756
        %v3069 = vunpack.c.h.b16 %v2756
        %v3070 = vunpack.c.l.b16 %v2757
        %v3071 = vunpack.c.h.b16 %v2757
        %v3072 = vunpack.c.l.b16 %v2758
        %v3073 = vunpack.c.h.b16 %v2758
        %v3074 = vunpack.c.l.b16 %v2759
        %v3075 = vunpack.c.h.b16 %v2759
        %v3076 = vunpack.c.l.b16 %v2760
        %v3077 = vunpack.c.h.b16 %v2760
        %v3078 = vunpack.c.l.b16 %v2761
        %v3079 = vunpack.c.h.b16 %v2761
        %v3080 = vunpack.c.l.b16 %v2762
        %v3081 = vunpack.c.h.b16 %v2762
        %v3082 = vunpack.c.l.b16 %v2763
        %v3083 = vunpack.c.h.b16 %v2763
        %v3084 = vunpack.c.l.b16 %v2764
        %v3085 = vunpack.c.h.b16 %v2764
        %v3086 = vunpack.c.l.b16 %v2765
        %v3087 = vunpack.c.h.b16 %v2765
        %v3088 = vunpack.c.l.b16 %v2766
        %v3089 = vunpack.c.h.b16 %v2766
        %v3090 = vunpack.c.l.b16 %v2767
        %v3091 = vunpack.c.h.b16 %v2767
        %v3092 = vunpack.c.l.b16 %v2768
        %v3093 = vunpack.c.h.b16 %v2768
        %v3094 = vunpack.c.l.b16 %v2769
        %v3095 = vunpack.c.h.b16 %v2769
        %v3096 = vunpack.c.l.b16 %v2770
        %v3097 = vunpack.c.h.b16 %v2770
        %v3098 = vunpack.c.l.b16 %v2771
        %v3099 = vunpack.c.h.b16 %v2771
        %v3100 = vunpack.c.l.b16 %v2772
        %v3101 = vunpack.c.h.b16 %v2772
        %v3102 = vunpack.c.l.b16 %v2773
        %v3103 = vunpack.c.h.b16 %v2773
        %v3104 = vunpack.c.l.b16 %v2774
        %v3105 = vunpack.c.h.b16 %v2774
        %v3106 = vunpack.c.l.b16 %v2775
        %v3107 = vunpack.c.h.b16 %v2775
        %v3108 = vunpack.c.l.b16 %v2776
        %v3109 = vunpack.c.h.b16 %v2776
        %v3110 = vunpack.c.l.b16 %v2777
        %v3111 = vunpack.c.h.b16 %v2777
        %v3112 = vunpack.c.l.b16 %v2778
        %v3113 = vunpack.c.h.b16 %v2778
        %v3114 = vunpack.c.l.b16 %v2779
        %v3115 = vunpack.c.h.b16 %v2779
        %v3116 = vunpack.c.l.b16 %v2780
        %v3117 = vunpack.c.h.b16 %v2780
        %v3118 = vunpack.c.l.b16 %v2781
        %v3119 = vunpack.c.h.b16 %v2781
        %v3120 = vunpack.c.l.b16 %v2782
        %v3121 = vunpack.c.h.b16 %v2782
        %v3122 = vunpack.c.l.b16 %v2783
        %v3123 = vunpack.c.h.b16 %v2783
        %v3124 = vunpack.c.l.b16 %v2784
        %v3125 = vunpack.c.h.b16 %v2784
        %v3126 = vunpack.c.l.b16 %v2785
        %v3127 = vunpack.c.h.b16 %v2785
        %v3128 = vunpack.c.l.b16 %v2786
        %v3129 = vunpack.c.h.b16 %v2786
        %v3130 = vunpack.c.l.b16 %v2787
        %v3131 = vunpack.c.h.b16 %v2787
        %v3132 = vunpack.c.l.b16 %v2788
        %v3133 = vunpack.c.h.b16 %v2788
        %v3134 = vunpack.c.l.b16 %v2789
        %v3135 = vunpack.c.h.b16 %v2789
        %v3136 = vunpack.c.l.b16 %v2790
        %v3137 = vunpack.c.h.b16 %v2790
        %v3138 = vunpack.c.l.b16 %v2791
        %v3139 = vunpack.c.h.b16 %v2791
        %v3140 = vunpack.c.l.b16 %v2792
        %v3141 = vunpack.c.h.b16 %v2792
        %v3142 = vunpack.c.l.b16 %v2793
        %v3143 = vunpack.c.h.b16 %v2793
        %v3144 = vunpack.c.l.b16 %v2794
        %v3145 = vunpack.c.h.b16 %v2794
        %v3146 = vunpack.c.l.b16 %v2795
        %v3147 = vunpack.c.h.b16 %v2795
        %v3148 = vunpack.c.l.b16 %v2796
        %v3149 = vunpack.c.h.b16 %v2796
        %v3150 = vunpack.c.l.b16 %v2797
        %v3151 = vunpack.c.h.b16 %v2797
        %v3152 = vunpack.c.l.b16 %v2798
        %v3153 = vunpack.c.h.b16 %v2798
        %v3154 = vunpack.c.l.b16 %v2799
        %v3155 = vunpack.c.h.b16 %v2799
        %v3156 = vunpack.c.l.b16 %v2800
        %v3157 = vunpack.c.h.b16 %v2800
        %v3158 = vunpack.c.l.b16 %v2801
        %v3159 = vunpack.c.h.b16 %v2801
        %v3160 = vunpack.c.l.b16 %v2802
        %v3161 = vunpack.c.h.b16 %v2802
        %v3162 = vunpack.c.l.b16 %v2803
        %v3163 = vunpack.c.h.b16 %v2803
        %v3164 = vunpack.c.l.b16 %v2804
        %v3165 = vunpack.c.h.b16 %v2804
        %v3166 = vunpack.c.l.b16 %v2805
        %v3167 = vunpack.c.h.b16 %v2805
        %v3168 = vunpack.c.l.b16 %v2806
        %v3169 = vunpack.c.h.b16 %v2806
        %v3170 = vunpack.c.l.b16 %v2807
        %v3171 = vunpack.c.h.b16 %v2807
        %v3172 = vunpack.c.l.b16 %v2808
        %v3173 = vunpack.c.h.b16 %v2808
        %v3174 = vunpack.c.l.b16 %v2809
        %v3175 = vunpack.c.h.b16 %v2809
        %v3176 = vunpack.c.l.b16 %v2810
        %v3177 = vunpack.c.h.b16 %v2810
        %v3178 = vunpack.c.l.b16 %v2811
        %v3179 = vunpack.c.h.b16 %v2811
        %v3180 = vunpack.c.l.b16 %v2812
        %v3181 = vunpack.c.h.b16 %v2812
        %v3182 = vunpack.c.l.b16 %v2813
        %v3183 = vunpack.c.h.b16 %v2813
        %v3184 = vunpack.c.l.b16 %v2814
        %v3185 = vunpack.c.h.b16 %v2814
        %v3186 = vunpack.c.l.b16 %v2815
        %v3187 = vunpack.c.h.b16 %v2815
        %v3188 = vunpack.c.l.b16 %v2816
        %v3189 = vunpack.c.h.b16 %v2816
        %v3190 = vunpack.c.l.b16 %v2817
        %v3191 = vunpack.c.h.b16 %v2817
        %v3192 = vunpack.c.l.b16 %v2818
        %v3193 = vunpack.c.h.b16 %v2818
        %v3194 = vunpack.c.l.b16 %v2819
        %v3195 = vunpack.c.h.b16 %v2819
        %v3196 = vunpack.c.l.b16 %v2820
        %v3197 = vunpack.c.h.b16 %v2820
        %v3198 = vunpack.c.l.b16 %v2821
        %v3199 = vunpack.c.h.b16 %v2821
        %v3200 = vunpack.c.l.b16 %v2822
        %v3201 = vunpack.c.h.b16 %v2822
        %v3202 = vunpack.c.l.b16 %v2823
        %v3203 = vunpack.c.h.b16 %v2823
        %v3204 = vunpack.c.l.b16 %v2824
        %v3205 = vunpack.c.h.b16 %v2824
        %v3206 = vunpack.c.l.b16 %v2825
        %v3207 = vunpack.c.h.b16 %v2825
        %v3208 = vunpack.c.l.b16 %v2826
        %v3209 = vunpack.c.h.b16 %v2826
        %v3210 = vunpack.c.l.b16 %v2827
        %v3211 = vunpack.c.h.b16 %v2827
        %v3212 = vpack.c.b16 %v2958, %v2956
        %v3213 = vpack.c.b16 %v2959, %v2957
        %v3214 = vpack.c.b16 %v2962, %v2960
        %v3215 = vpack.c.b16 %v2963, %v2961
        %v3216 = vpack.c.b16 %v2966, %v2964
        %v3217 = vpack.c.b16 %v2967, %v2965
        %v3218 = vpack.c.b16 %v2970, %v2968
        %v3219 = vpack.c.b16 %v2971, %v2969
        %v3220 = vpack.c.b16 %v2974, %v2972
        %v3221 = vpack.c.b16 %v2975, %v2973
        %v3222 = vpack.c.b16 %v2978, %v2976
        %v3223 = vpack.c.b16 %v2979, %v2977
        %v3224 = vpack.c.b16 %v2982, %v2980
        %v3225 = vpack.c.b16 %v2983, %v2981
        %v3226 = vpack.c.b16 %v2986, %v2984
        %v3227 = vpack.c.b16 %v2987, %v2985
        %v3228 = vpack.c.b16 %v2990, %v2988
        %v3229 = vpack.c.b16 %v2991, %v2989
        %v3230 = vpack.c.b16 %v2994, %v2992
        %v3231 = vpack.c.b16 %v2995, %v2993
        %v3232 = vpack.c.b16 %v2998, %v2996
        %v3233 = vpack.c.b16 %v2999, %v2997
        %v3234 = vpack.c.b16 %v3002, %v3000
        %v3235 = vpack.c.b16 %v3003, %v3001
        %v3236 = vpack.c.b16 %v3006, %v3004
        %v3237 = vpack.c.b16 %v3007, %v3005
        %v3238 = vpack.c.b16 %v3010, %v3008
        %v3239 = vpack.c.b16 %v3011, %v3009
        %v3240 = vpack.c.b16 %v3014, %v3012
        %v3241 = vpack.c.b16 %v3015, %v3013
        %v3242 = vpack.c.b16 %v3018, %v3016
        %v3243 = vpack.c.b16 %v3019, %v3017
        %v3244 = vpack.c.b16 %v3022, %v3020
        %v3245 = vpack.c.b16 %v3023, %v3021
        %v3246 = vpack.c.b16 %v3026, %v3024
        %v3247 = vpack.c.b16 %v3027, %v3025
        %v3248 = vpack.c.b16 %v3030, %v3028
        %v3249 = vpack.c.b16 %v3031, %v3029
        %v3250 = vpack.c.b16 %v3034, %v3032
        %v3251 = vpack.c.b16 %v3035, %v3033
        %v3252 = vpack.c.b16 %v3038, %v3036
        %v3253 = vpack.c.b16 %v3039, %v3037
        %v3254 = vpack.c.b16 %v3042, %v3040
        %v3255 = vpack.c.b16 %v3043, %v3041
        %v3256 = vpack.c.b16 %v3046, %v3044
        %v3257 = vpack.c.b16 %v3047, %v3045
        %v3258 = vpack.c.b16 %v3050, %v3048
        %v3259 = vpack.c.b16 %v3051, %v3049
        %v3260 = vpack.c.b16 %v3054, %v3052
        %v3261 = vpack.c.b16 %v3055, %v3053
        %v3262 = vpack.c.b16 %v3058, %v3056
        %v3263 = vpack.c.b16 %v3059, %v3057
        %v3264 = vpack.c.b16 %v3062, %v3060
        %v3265 = vpack.c.b16 %v3063, %v3061
        %v3266 = vpack.c.b16 %v3066, %v3064
        %v3267 = vpack.c.b16 %v3067, %v3065
        %v3268 = vpack.c.b16 %v3070, %v3068
        %v3269 = vpack.c.b16 %v3071, %v3069
        %v3270 = vpack.c.b16 %v3074, %v3072
        %v3271 = vpack.c.b16 %v3075, %v3073
        %v3272 = vpack.c.b16 %v3078, %v3076
        %v3273 = vpack.c.b16 %v3079, %v3077
        %v3274 = vpack.c.b16 %v3082, %v3080
        %v3275 = vpack.c.b16 %v3083, %v3081
        %v3276 = vpack.c.b16 %v3086, %v3084
        %v3277 = vpack.c.b16 %v3087, %v3085
        %v3278 = vpack.c.b16 %v3090, %v3088
        %v3279 = vpack.c.b16 %v3091, %v3089
        %v3280 = vpack.c.b16 %v3094, %v3092
        %v3281 = vpack.c.b16 %v3095, %v3093
        %v3282 = vpack.c.b16 %v3098, %v3096
        %v3283 = vpack.c.b16 %v3099, %v3097
        %v3284 = vpack.c.b16 %v3102, %v3100
        %v3285 = vpack.c.b16 %v3103, %v3101
        %v3286 = vpack.c.b16 %v3106, %v3104
        %v3287 = vpack.c.b16 %v3107, %v3105
        %v3288 = vpack.c.b16 %v3110, %v3108
        %v3289 = vpack.c.b16 %v3111, %v3109
        %v3290 = vpack.c.b16 %v3114, %v3112
        %v3291 = vpack.c.b16 %v3115, %v3113
        %v3292 = vpack.c.b16 %v3118, %v3116
        %v3293 = vpack.c.b16 %v3119, %v3117
        %v3294 = vpack.c.b16 %v3122, %v3120
        %v3295 = vpack.c.b16 %v3123, %v3121
        %v3296 = vpack.c.b16 %v3126, %v3124
        %v3297 = vpack.c.b16 %v3127, %v3125
        %v3298 = vpack.c.b16 %v3130, %v3128
        %v3299 = vpack.c.b16 %v3131, %v3129
        %v3300 = vpack.c.b16 %v3134, %v3132
        %v3301 = vpack.c.b16 %v3135, %v3133
        %v3302 = vpack.c.b16 %v3138, %v3136
        %v3303 = vpack.c.b16 %v3139, %v3137
        %v3304 = vpack.c.b16 %v3142, %v3140
        %v3305 = vpack.c.b16 %v3143, %v3141
        %v3306 = vpack.c.b16 %v3146, %v3144
        %v3307 = vpack.c.b16 %v3147, %v3145
        %v3308 = vpack.c.b16 %v3150, %v3148
        %v3309 = vpack.c.b16 %v3151, %v3149
        %v3310 = vpack.c.b16 %v3154, %v3152
        %v3311 = vpack.c.b16 %v3155, %v3153
        %v3312 = vpack.c.b16 %v3158, %v3156
        %v3313 = vpack.c.b16 %v3159, %v3157
        %v3314 = vpack.c.b16 %v3162, %v3160
        %v3315 = vpack.c.b16 %v3163, %v3161
        %v3316 = vpack.c.b16 %v3166, %v3164
        %v3317 = vpack.c.b16 %v3167, %v3165
        %v3318 = vpack.c.b16 %v3170, %v3168
        %v3319 = vpack.c.b16 %v3171, %v3169
        %v3320 = vpack.c.b16 %v3174, %v3172
        %v3321 = vpack.c.b16 %v3175, %v3173
        %v3322 = vpack.c.b16 %v3178, %v3176
        %v3323 = vpack.c.b16 %v3179, %v3177
        %v3324 = vpack.c.b16 %v3182, %v3180
        %v3325 = vpack.c.b16 %v3183, %v3181
        %v3326 = vpack.c.b16 %v3186, %v3184
        %v3327 = vpack.c.b16 %v3187, %v3185
        %v3328 = vpack.c.b16 %v3190, %v3188
        %v3329 = vpack.c.b16 %v3191, %v3189
        %v3330 = vpack.c.b16 %v3194, %v3192
        %v3331 = vpack.c.b16 %v3195, %v3193
        %v3332 = vpack.c.b16 %v3198, %v3196
        %v3333 = vpack.c.b16 %v3199, %v3197
        %v3334 = vpack.c.b16 %v3202, %v3200
        %v3335 = vpack.c.b16 %v3203, %v3201
        %v3336 = vpack.c.b16 %v3206, %v3204
        %v3337 = vpack.c.b16 %v3207, %v3205
        %v3338 = vpack.c.b16 %v3210, %v3208
        %v3339 = vpack.c.b16 %v3211, %v3209
        %3468 = vmatprep.subr.bf16.mxu0 %v3213
        %3469 = vmatpush1.bf16.msra.mxu0 %v3212
        %3470 = vmatprep.subr.bf16.mxu0 %v3215
        %3471 = vmatpush1.bf16.msra.mxu0 %v3214
        %3472 = vmatprep.subr.bf16.mxu0 %v3217
        %3473 = vmatpush1.bf16.msra.mxu0 %v3216
        %3474 = vmatprep.subr.bf16.mxu0 %v3219
        %3475 = vmatpush1.bf16.msra.mxu0 %v3218
        %3476 = vmatprep.subr.bf16.mxu0 %v3221
        %3477 = vmatpush1.bf16.msra.mxu0 %v3220
        %3478 = vmatprep.subr.bf16.mxu0 %v3223
        %3479 = vmatpush1.bf16.msra.mxu0 %v3222
        %3480 = vmatprep.subr.bf16.mxu0 %v3225
        %3481 = vmatpush1.bf16.msra.mxu0 %v3224
        %3482 = vmatprep.subr.bf16.mxu0 %v3227
        %3483 = vmatpush1.bf16.msra.mxu0 %v3226
        %3484 = vmatprep.subr.bf16.mxu0 %v3229
        %3485 = vmatpush1.bf16.msra.mxu0 %v3228
        %3486 = vmatprep.subr.bf16.mxu0 %v3231
        %3487 = vmatpush1.bf16.msra.mxu0 %v3230
        %3488 = vmatprep.subr.bf16.mxu0 %v3233
        %3489 = vmatpush1.bf16.msra.mxu0 %v3232
        %3490 = vmatprep.subr.bf16.mxu0 %v3235
        %3491 = vmatpush1.bf16.msra.mxu0 %v3234
        %3492 = vmatprep.subr.bf16.mxu0 %v3237
        %3493 = vmatpush1.bf16.msra.mxu0 %v3236
        %3494 = vmatprep.subr.bf16.mxu0 %v3239
        %3495 = vmatpush1.bf16.msra.mxu0 %v3238
        %3496 = vmatprep.subr.bf16.mxu0 %v3241
        %3497 = vmatpush1.bf16.msra.mxu0 %v3240
        %3498 = vmatprep.subr.bf16.mxu0 %v3243
        %3499 = vmatpush1.bf16.msra.mxu0 %v3242
        %3500 = vmatprep.mubr.bf16.mxu0 %v788
        %3501 = vmatmul.mubr.bf16.gmra.mrb[0].mxu0 %v787
        %v3502 = vpop.f32.mrb[0].mxu0
        %v3503 = vadd.f32 0.0, %v3502
        %v3504 = vpop.f32.mrb[0].mxu0
        %v3505 = vadd.f32 0.0, %v3504
        %v3506 = vpop.f32.mrb[0].mxu0
        %v3507 = vadd.f32 0.0, %v3506
        %v3508 = vpop.f32.mrb[0].mxu0
        %v3509 = vadd.f32 0.0, %v3508
        %3510 = vmatprep.mubr.bf16.mxu0 %v796
        %3511 = vmatmul.mubr.bf16.gmra.mrb[0].mxu0 %v795
        %v3512 = vpop.f32.mrb[0].mxu0
        %v3513 = vadd.f32 0.0, %v3512
        %v3514 = vpop.f32.mrb[0].mxu0
        %v3515 = vadd.f32 0.0, %v3514
        %v3516 = vpop.f32.mrb[0].mxu0
        %v3517 = vadd.f32 0.0, %v3516
        %v3518 = vpop.f32.mrb[0].mxu0
        %v3519 = vadd.f32 0.0, %v3518
        %3520 = vdwg.mxu0
        %3521 = vmatprep.subr.bf16.mxu0 %v3245
        %3522 = vmatpush1.bf16.msra.mxu0 %v3244
        %3523 = vmatprep.subr.bf16.mxu0 %v3247
        %3524 = vmatpush1.bf16.msra.mxu0 %v3246
        %3525 = vmatprep.subr.bf16.mxu0 %v3249
        %3526 = vmatpush1.bf16.msra.mxu0 %v3248
        %3527 = vmatprep.subr.bf16.mxu0 %v3251
        %3528 = vmatpush1.bf16.msra.mxu0 %v3250
        %3529 = vmatprep.subr.bf16.mxu0 %v3253
        %3530 = vmatpush1.bf16.msra.mxu0 %v3252
        %3531 = vmatprep.subr.bf16.mxu0 %v3255
        %3532 = vmatpush1.bf16.msra.mxu0 %v3254
        %3533 = vmatprep.subr.bf16.mxu0 %v3257
        %3534 = vmatpush1.bf16.msra.mxu0 %v3256
        %3535 = vmatprep.subr.bf16.mxu0 %v3259
        %3536 = vmatpush1.bf16.msra.mxu0 %v3258
        %3537 = vmatprep.subr.bf16.mxu0 %v3261
        %3538 = vmatpush1.bf16.msra.mxu0 %v3260
        %3539 = vmatprep.subr.bf16.mxu0 %v3263
        %3540 = vmatpush1.bf16.msra.mxu0 %v3262
        %3541 = vmatprep.subr.bf16.mxu0 %v3265
        %3542 = vmatpush1.bf16.msra.mxu0 %v3264
        %3543 = vmatprep.subr.bf16.mxu0 %v3267
        %3544 = vmatpush1.bf16.msra.mxu0 %v3266
        %3545 = vmatprep.subr.bf16.mxu0 %v3269
        %3546 = vmatpush1.bf16.msra.mxu0 %v3268
        %3547 = vmatprep.subr.bf16.mxu0 %v3271
        %3548 = vmatpush1.bf16.msra.mxu0 %v3270
        %3549 = vmatprep.subr.bf16.mxu0 %v3273
        %3550 = vmatpush1.bf16.msra.mxu0 %v3272
        %3551 = vmatprep.subr.bf16.mxu0 %v3275
        %3552 = vmatpush1.bf16.msra.mxu0 %v3274
        %3553 = vmatprep.mubr.bf16.mxu0 %v790
        %3554 = vmatmul.mubr.bf16.gmra.mrb[0].mxu0 %v789
        %v3555 = vpop.f32.mrb[0].mxu0
        %v3556 = vadd.f32 %v3503, %v3555
        %v3557 = vpop.f32.mrb[0].mxu0
        %v3558 = vadd.f32 %v3505, %v3557
        %v3559 = vpop.f32.mrb[0].mxu0
        %v3560 = vadd.f32 %v3507, %v3559
        %v3561 = vpop.f32.mrb[0].mxu0
        %v3562 = vadd.f32 %v3509, %v3561
        %3563 = vmatprep.mubr.bf16.mxu0 %v798
        %3564 = vmatmul.mubr.bf16.gmra.mrb[0].mxu0 %v797
        %v3565 = vpop.f32.mrb[0].mxu0
        %v3566 = vadd.f32 %v3513, %v3565
        %v3567 = vpop.f32.mrb[0].mxu0
        %v3568 = vadd.f32 %v3515, %v3567
        %v3569 = vpop.f32.mrb[0].mxu0
        %v3570 = vadd.f32 %v3517, %v3569
        %v3571 = vpop.f32.mrb[0].mxu0
        %v3572 = vadd.f32 %v3519, %v3571
        %3573 = vdwg.mxu0
        %3574 = vmatprep.subr.bf16.mxu0 %v3277
        %3575 = vmatpush1.bf16.msra.mxu0 %v3276
        %3576 = vmatprep.subr.bf16.mxu0 %v3279
        %3577 = vmatpush1.bf16.msra.mxu0 %v3278
        %3578 = vmatprep.subr.bf16.mxu0 %v3281
        %3579 = vmatpush1.bf16.msra.mxu0 %v3280
        %3580 = vmatprep.subr.bf16.mxu0 %v3283
        %3581 = vmatpush1.bf16.msra.mxu0 %v3282
        %3582 = vmatprep.subr.bf16.mxu0 %v3285
        %3583 = vmatpush1.bf16.msra.mxu0 %v3284
        %3584 = vmatprep.subr.bf16.mxu0 %v3287
        %3585 = vmatpush1.bf16.msra.mxu0 %v3286
        %3586 = vmatprep.subr.bf16.mxu0 %v3289
        %3587 = vmatpush1.bf16.msra.mxu0 %v3288
        %3588 = vmatprep.subr.bf16.mxu0 %v3291
        %3589 = vmatpush1.bf16.msra.mxu0 %v3290
        %3590 = vmatprep.subr.bf16.mxu0 %v3293
        %3591 = vmatpush1.bf16.msra.mxu0 %v3292
        %3592 = vmatprep.subr.bf16.mxu0 %v3295
        %3593 = vmatpush1.bf16.msra.mxu0 %v3294
        %3594 = vmatprep.subr.bf16.mxu0 %v3297
        %3595 = vmatpush1.bf16.msra.mxu0 %v3296
        %3596 = vmatprep.subr.bf16.mxu0 %v3299
        %3597 = vmatpush1.bf16.msra.mxu0 %v3298
        %3598 = vmatprep.subr.bf16.mxu0 %v3301
        %3599 = vmatpush1.bf16.msra.mxu0 %v3300
        %3600 = vmatprep.subr.bf16.mxu0 %v3303
        %3601 = vmatpush1.bf16.msra.mxu0 %v3302
        %3602 = vmatprep.subr.bf16.mxu0 %v3305
        %3603 = vmatpush1.bf16.msra.mxu0 %v3304
        %3604 = vmatprep.subr.bf16.mxu0 %v3307
        %3605 = vmatpush1.bf16.msra.mxu0 %v3306
        %3606 = vmatprep.mubr.bf16.mxu0 %v792
        %3607 = vmatmul.mubr.bf16.gmra.mrb[0].mxu0 %v791
        %v3608 = vpop.f32.mrb[0].mxu0
        %v3609 = vadd.f32 %v3556, %v3608
        %v3610 = vpop.f32.mrb[0].mxu0
        %v3611 = vadd.f32 %v3558, %v3610
        %v3612 = vpop.f32.mrb[0].mxu0
        %v3613 = vadd.f32 %v3560, %v3612
        %v3614 = vpop.f32.mrb[0].mxu0
        %v3615 = vadd.f32 %v3562, %v3614
        %3616 = vmatprep.mubr.bf16.mxu0 %v800
        %3617 = vmatmul.mubr.bf16.gmra.mrb[0].mxu0 %v799
        %v3618 = vpop.f32.mrb[0].mxu0
        %v3619 = vadd.f32 %v3566, %v3618
        %v3620 = vpop.f32.mrb[0].mxu0
        %v3621 = vadd.f32 %v3568, %v3620
        %v3622 = vpop.f32.mrb[0].mxu0
        %v3623 = vadd.f32 %v3570, %v3622
        %v3624 = vpop.f32.mrb[0].mxu0
        %v3625 = vadd.f32 %v3572, %v3624
        %3626 = vdwg.mxu0
        %3627 = vmatprep.subr.bf16.mxu0 %v3309
        %3628 = vmatpush1.bf16.msra.mxu0 %v3308
        %3629 = vmatprep.subr.bf16.mxu0 %v3311
        %3630 = vmatpush1.bf16.msra.mxu0 %v3310
        %3631 = vmatprep.subr.bf16.mxu0 %v3313
        %3632 = vmatpush1.bf16.msra.mxu0 %v3312
        %3633 = vmatprep.subr.bf16.mxu0 %v3315
        %3634 = vmatpush1.bf16.msra.mxu0 %v3314
        %3635 = vmatprep.subr.bf16.mxu0 %v3317
        %3636 = vmatpush1.bf16.msra.mxu0 %v3316
        %3637 = vmatprep.subr.bf16.mxu0 %v3319
        %3638 = vmatpush1.bf16.msra.mxu0 %v3318
        %3639 = vmatprep.subr.bf16.mxu0 %v3321
        %3640 = vmatpush1.bf16.msra.mxu0 %v3320
        %3641 = vmatprep.subr.bf16.mxu0 %v3323
        %3642 = vmatpush1.bf16.msra.mxu0 %v3322
        %3643 = vmatprep.subr.bf16.mxu0 %v3325
        %3644 = vmatpush1.bf16.msra.mxu0 %v3324
        %3645 = vmatprep.subr.bf16.mxu0 %v3327
        %3646 = vmatpush1.bf16.msra.mxu0 %v3326
        %3647 = vmatprep.subr.bf16.mxu0 %v3329
        %3648 = vmatpush1.bf16.msra.mxu0 %v3328
        %3649 = vmatprep.subr.bf16.mxu0 %v3331
        %3650 = vmatpush1.bf16.msra.mxu0 %v3330
        %3651 = vmatprep.subr.bf16.mxu0 %v3333
        %3652 = vmatpush1.bf16.msra.mxu0 %v3332
        %3653 = vmatprep.subr.bf16.mxu0 %v3335
        %3654 = vmatpush1.bf16.msra.mxu0 %v3334
        %3655 = vmatprep.subr.bf16.mxu0 %v3337
        %3656 = vmatpush1.bf16.msra.mxu0 %v3336
        %3657 = vmatprep.subr.bf16.mxu0 %v3339
        %3658 = vmatpush1.bf16.msra.mxu0 %v3338
        %3659 = vmatprep.mubr.bf16.mxu0 %v794
        %3660 = vmatmul.mubr.bf16.gmra.mrb[0].mxu0 %v793
        %v3661 = vpop.f32.mrb[0].mxu0
        %v3662 = vadd.f32 %v3609, %v3661
        %v3663 = vpop.f32.mrb[0].mxu0
        %v3664 = vadd.f32 %v3611, %v3663
        %v3665 = vpop.f32.mrb[0].mxu0
        %v3666 = vadd.f32 %v3613, %v3665
        %v3667 = vpop.f32.mrb[0].mxu0
        %v3668 = vadd.f32 %v3615, %v3667
        %3669 = vmatprep.mubr.bf16.mxu0 %v802
        %3670 = vmatmul.mubr.bf16.gmra.mrb[0].mxu0 %v801
        %v3671 = vpop.f32.mrb[0].mxu0
        %v3672 = vadd.f32 %v3619, %v3671
        %v3673 = vpop.f32.mrb[0].mxu0
        %v3674 = vadd.f32 %v3621, %v3673
        %v3675 = vpop.f32.mrb[0].mxu0
        %v3676 = vadd.f32 %v3623, %v3675
        %v3677 = vpop.f32.mrb[0].mxu0
        %v3678 = vadd.f32 %v3625, %v3677
        %3679 = vdwg.mxu0
        %vm3688 = vcmask 1046528
        %v3689 = vrot.slane %v3662, 1
        %v3690 = vrot.slane %v3666, 1
        %v3691 = vsel %vm3688, %v3689, %v3690
        %v3692 = vrot.slane %v3664, 1
        %v3693 = vrot.slane %v3668, 1
        %v3694 = vsel %vm3688, %v3692, %v3693
        %v3695 = vrot.slane %v3672, 1
        %v3696 = vrot.slane %v3676, 1
        %v3697 = vsel %vm3688, %v3695, %v3696
        %v3698 = vrot.slane %v3674, 1
        %v3699 = vrot.slane %v3678, 1
        %v3700 = vsel %vm3688, %v3698, %v3699
        %v3709 = vsel %vm3688, %v3690, 0.0
        %v3710 = vsel %vm3688, %v3693, 0.0
        %v3711 = vsel %vm3688, %v3696, 0.0
        %v3712 = vsel %vm3688, %v3699, 0.0
        %v3713 = vadd.f32 %v2692, %v3691
        %v3714 = vadd.f32 %v2693, %v3694
        %v3715 = vadd.f32 %v2694, %v3709
        %v3716 = vadd.f32 %v2695, %v3710
        %v3717 = vadd.f32 %v2696, %v3697
        %v3718 = vadd.f32 %v2697, %v3700
        %v3719 = vadd.f32 %v2698, %v3711
        %v3720 = vadd.f32 %v2699, %v3712
        %v3722 = vlaneseq
        %v3723 = vshrl.u32 %v3722, 7
        %v3724 = vsub.s32 0, %v3723
        %v3725 = vrot.slane %v610, %v3724
        %v3726 = vlaneseq
        %v3727 = vshrl.u32 %v3726, 7
        %v3728 = vsub.s32 1, %v3727
        %v3729 = vrot.slane %v610, %v3728
        %v3732 = vadd.f32 %v3713, %v3725
        %v3733 = vadd.f32 %v3714, %v3729
        %v3734 = vadd.f32 %v3715, %v3725
        %v3735 = vadd.f32 %v3716, %v3729
        %v3736 = vadd.f32 %v3717, %v3725
        %v3737 = vadd.f32 %v3718, %v3729
        %v3738 = vadd.f32 %v3719, %v3725
        %v3739 = vadd.f32 %v3720, %v3729
        %v3740 = vmax.f32 %v3732, 0.0
        %v3741 = vmax.f32 %v3733, 0.0
        %v3742 = vmax.f32 %v3734, 0.0
        %v3743 = vmax.f32 %v3735, 0.0
        %v3744 = vmax.f32 %v3736, 0.0
        %v3745 = vmax.f32 %v3737, 0.0
        %v3746 = vmax.f32 %v3738, 0.0
        %v3747 = vmax.f32 %v3739, 0.0
        %v3748 = vpack.c.bf16 %v3742, %v3740
        %v3749 = vpack.c.bf16 %v3743, %v3741
        %v3750 = vpack.c.bf16 %v3746, %v3744
        %v3751 = vpack.c.bf16 %v3747, %v3745
        %v3752 = vld [vmem:[%s480] sm:$0xf]
        %v3753 = vld [vmem:[%s480 + $0x4] sm:$0xf]
        %v3754 = vld [vmem:[%s480 + $0x8] sm:$0xf]
        %v3755 = vld [vmem:[%s480 + $0xc] sm:$0xf]
        %v3756 = vld [vmem:[%s480 + $0x10] sm:$0xf]
        %v3757 = vld [vmem:[%s480 + $0x14] sm:$0xf]
        %v3758 = vld [vmem:[%s480 + $0x18] sm:$0xf]
        %v3759 = vld [vmem:[%s480 + $0x1c] sm:$0xf]
        %v3760 = vld [vmem:[%s480 + $0x20] sm:$0xf]
        %v3761 = vld [vmem:[%s480 + $0x24] sm:$0xf]
        %v3762 = vld [vmem:[%s480 + $0x28] sm:$0xf]
        %v3763 = vld [vmem:[%s480 + $0x2c] sm:$0xf]
        %v3764 = vld [vmem:[%s480 + $0x30] sm:$0xf]
        %v3765 = vld [vmem:[%s480 + $0x34] sm:$0xf]
        %v3766 = vld [vmem:[%s480 + $0x38] sm:$0xf]
        %v3767 = vld [vmem:[%s480 + $0x3c] sm:$0xf]
        %v3768 = vld [vmem:[%s480 + $0x40] sm:$0xf]
        %v3769 = vld [vmem:[%s480 + $0x44] sm:$0xf]
        %v3770 = vld [vmem:[%s480 + $0x48] sm:$0xf]
        %v3771 = vld [vmem:[%s480 + $0x4c] sm:$0xf]
        %v3772 = vld [vmem:[%s480 + $0x50] sm:$0xf]
        %v3773 = vld [vmem:[%s480 + $0x54] sm:$0xf]
        %v3774 = vld [vmem:[%s480 + $0x58] sm:$0xf]
        %v3775 = vld [vmem:[%s480 + $0x5c] sm:$0xf]
        %v3776 = vld [vmem:[%s480 + $0x60] sm:$0xf]
        %v3777 = vld [vmem:[%s480 + $0x64] sm:$0xf]
        %v3778 = vld [vmem:[%s480 + $0x68] sm:$0xf]
        %v3779 = vld [vmem:[%s480 + $0x6c] sm:$0xf]
        %v3780 = vld [vmem:[%s480 + $0x70] sm:$0xf]
        %v3781 = vld [vmem:[%s480 + $0x74] sm:$0xf]
        %v3782 = vld [vmem:[%s480 + $0x78] sm:$0xf]
        %v3783 = vld [vmem:[%s480 + $0x7c] sm:$0xf]
        %v3816 = vunpack.c.l.b16 %v3752
        %v3817 = vunpack.c.l.b16 %v3753
        %v3818 = vunpack.c.l.b16 %v3754
        %v3819 = vunpack.c.l.b16 %v3755
        %v3820 = vunpack.c.l.b16 %v3756
        %v3821 = vunpack.c.l.b16 %v3757
        %v3822 = vunpack.c.l.b16 %v3758
        %v3823 = vunpack.c.l.b16 %v3759
        %v3824 = vunpack.c.l.b16 %v3760
        %v3825 = vunpack.c.l.b16 %v3761
        %v3826 = vunpack.c.l.b16 %v3762
        %v3827 = vunpack.c.l.b16 %v3763
        %v3828 = vunpack.c.l.b16 %v3764
        %v3829 = vunpack.c.l.b16 %v3765
        %v3830 = vunpack.c.l.b16 %v3766
        %v3831 = vunpack.c.l.b16 %v3767
        %v3832 = vunpack.c.l.b16 %v3768
        %v3833 = vunpack.c.l.b16 %v3769
        %v3834 = vunpack.c.l.b16 %v3770
        %v3835 = vunpack.c.l.b16 %v3771
        %v3836 = vunpack.c.l.b16 %v3772
        %v3837 = vunpack.c.l.b16 %v3773
        %v3838 = vunpack.c.l.b16 %v3774
        %v3839 = vunpack.c.l.b16 %v3775
        %v3840 = vunpack.c.l.b16 %v3776
        %v3841 = vunpack.c.l.b16 %v3777
        %v3842 = vunpack.c.l.b16 %v3778
        %v3843 = vunpack.c.l.b16 %v3779
        %v3844 = vunpack.c.l.b16 %v3780
        %v3845 = vunpack.c.l.b16 %v3781
        %v3846 = vunpack.c.l.b16 %v3782
        %v3847 = vunpack.c.l.b16 %v3783
        %v3848 = vpack.c.b16 %v3817, %v3816
        %v3849 = vpack.c.b16 %v3819, %v3818
        %v3850 = vpack.c.b16 %v3821, %v3820
        %v3851 = vpack.c.b16 %v3823, %v3822
        %v3852 = vpack.c.b16 %v3825, %v3824
        %v3853 = vpack.c.b16 %v3827, %v3826
        %v3854 = vpack.c.b16 %v3829, %v3828
        %v3855 = vpack.c.b16 %v3831, %v3830
        %v3856 = vpack.c.b16 %v3833, %v3832
        %v3857 = vpack.c.b16 %v3835, %v3834
        %v3858 = vpack.c.b16 %v3837, %v3836
        %v3859 = vpack.c.b16 %v3839, %v3838
        %v3860 = vpack.c.b16 %v3841, %v3840
        %v3861 = vpack.c.b16 %v3843, %v3842
        %v3862 = vpack.c.b16 %v3845, %v3844
        %v3863 = vpack.c.b16 %v3847, %v3846
        %3880 = vmatprep.subr.bf16.mxu0 0
        %3881 = vmatpush1.bf16.msra.mxu0 %v3848
        %3882 = vmatprep.subr.bf16.mxu0 0
        %3883 = vmatpush1.bf16.msra.mxu0 %v3849
        %3884 = vmatprep.subr.bf16.mxu0 0
        %3885 = vmatpush1.bf16.msra.mxu0 %v3850
        %3886 = vmatprep.subr.bf16.mxu0 0
        %3887 = vmatpush1.bf16.msra.mxu0 %v3851
        %3888 = vmatprep.subr.bf16.mxu0 0
        %3889 = vmatpush1.bf16.msra.mxu0 %v3852
        %3890 = vmatprep.subr.bf16.mxu0 0
        %3891 = vmatpush1.bf16.msra.mxu0 %v3853
        %3892 = vmatprep.subr.bf16.mxu0 0
        %3893 = vmatpush1.bf16.msra.mxu0 %v3854
        %3894 = vmatprep.subr.bf16.mxu0 0
        %3895 = vmatpush1.bf16.msra.mxu0 %v3855
        %3896 = vmatprep.subr.bf16.mxu0 0
        %3897 = vmatpush1.bf16.msra.mxu0 %v3856
        %3898 = vmatprep.subr.bf16.mxu0 0
        %3899 = vmatpush1.bf16.msra.mxu0 %v3857
        %3900 = vmatprep.subr.bf16.mxu0 0
        %3901 = vmatpush1.bf16.msra.mxu0 %v3858
        %3902 = vmatprep.subr.bf16.mxu0 0
        %3903 = vmatpush1.bf16.msra.mxu0 %v3859
        %3904 = vmatprep.subr.bf16.mxu0 0
        %3905 = vmatpush1.bf16.msra.mxu0 %v3860
        %3906 = vmatprep.subr.bf16.mxu0 0
        %3907 = vmatpush1.bf16.msra.mxu0 %v3861
        %3908 = vmatprep.subr.bf16.mxu0 0
        %3909 = vmatpush1.bf16.msra.mxu0 %v3862
        %3910 = vmatprep.subr.bf16.mxu0 0
        %3911 = vmatpush1.bf16.msra.mxu0 %v3863
        %3912 = vmatprep.mubr.bf16.mxu0 %v3749
        %3913 = vmatmul.mubr.bf16.gmra.mrb[0].mxu0 %v3748
        %v3914 = vpop.f32.mrb[0].mxu0
        %v3915 = vadd.f32 0.0, %v3914
        %v3916 = vpop.f32.mrb[0].mxu0
        %v3917 = vpop.f32.mrb[0].mxu0
        %v3918 = vadd.f32 0.0, %v3917
        %v3919 = vpop.f32.mrb[0].mxu0
        %3920 = vmatprep.mubr.bf16.mxu0 %v3751
        %3921 = vmatmul.mubr.bf16.gmra.mrb[0].mxu0 %v3750
        %v3922 = vpop.f32.mrb[0].mxu0
        %v3923 = vadd.f32 0.0, %v3922
        %v3924 = vpop.f32.mrb[0].mxu0
        %v3925 = vpop.f32.mrb[0].mxu0
        %v3926 = vadd.f32 0.0, %v3925
        %v3927 = vpop.f32.mrb[0].mxu0
        %3928 = vdwg.mxu0
        %v3933 = vrot.slane %v3915, 7
        %v3934 = vrot.slane %v3918, 7
        %v3935 = vsel %vm1679, %v3933, %v3934
        %v3936 = vrot.slane %v3923, 7
        %v3937 = vrot.slane %v3926, 7
        %v3938 = vsel %vm1679, %v3936, %v3937
        %v3943 = vsel %vm1679, 0.0, %v3933
        %v3944 = vsel %vm1679, 0.0, %v3936
        %v3945 = vadd.f32 %v3943, 0.0
        %v3946 = vadd.f32 %v3935, 0.0
        %v3947 = vadd.f32 %v3944, 0.0
        %v3948 = vadd.f32 %v3938, 0.0
        %v3949 = vld [vmem:[%s480 + $0x80] sm:$0xf]
        %v3950 = vld [vmem:[%s480 + $0x84] sm:$0xf]
        %v3951 = vld [vmem:[%s480 + $0x88] sm:$0xf]
        %v3952 = vld [vmem:[%s480 + $0x8c] sm:$0xf]
        %v3953 = vld [vmem:[%s480 + $0x90] sm:$0xf]
        %v3954 = vld [vmem:[%s480 + $0x94] sm:$0xf]
        %v3955 = vld [vmem:[%s480 + $0x98] sm:$0xf]
        %v3956 = vld [vmem:[%s480 + $0x9c] sm:$0xf]
        %v3957 = vld [vmem:[%s480 + $0xa0] sm:$0xf]
        %v3958 = vld [vmem:[%s480 + $0xa4] sm:$0xf]
        %v3959 = vld [vmem:[%s480 + $0xa8] sm:$0xf]
        %v3960 = vld [vmem:[%s480 + $0xac] sm:$0xf]
        %v3961 = vld [vmem:[%s480 + $0xb0] sm:$0xf]
        %v3962 = vld [vmem:[%s480 + $0xb4] sm:$0xf]
        %v3963 = vld [vmem:[%s480 + $0xb8] sm:$0xf]
        %v3964 = vld [vmem:[%s480 + $0xbc] sm:$0xf]
        %v3965 = vld [vmem:[%s480 + $0xc0] sm:$0xf]
        %v3966 = vld [vmem:[%s480 + $0xc4] sm:$0xf]
        %v3967 = vld [vmem:[%s480 + $0xc8] sm:$0xf]
        %v3968 = vld [vmem:[%s480 + $0xcc] sm:$0xf]
        %v3969 = vld [vmem:[%s480 + $0xd0] sm:$0xf]
        %v3970 = vld [vmem:[%s480 + $0xd4] sm:$0xf]
        %v3971 = vld [vmem:[%s480 + $0xd8] sm:$0xf]
        %v3972 = vld [vmem:[%s480 + $0xdc] sm:$0xf]
        %v3973 = vld [vmem:[%s480 + $0xe0] sm:$0xf]
        %v3974 = vld [vmem:[%s480 + $0xe4] sm:$0xf]
        %v3975 = vld [vmem:[%s480 + $0xe8] sm:$0xf]
        %v3976 = vld [vmem:[%s480 + $0xec] sm:$0xf]
        %v3977 = vld [vmem:[%s480 + $0xf0] sm:$0xf]
        %v3978 = vld [vmem:[%s480 + $0xf4] sm:$0xf]
        %v3979 = vld [vmem:[%s480 + $0xf8] sm:$0xf]
        %v3980 = vld [vmem:[%s480 + $0xfc] sm:$0xf]
        %v4013 = vunpack.c.l.b16 %v3949
        %v4014 = vunpack.c.l.b16 %v3950
        %v4015 = vunpack.c.l.b16 %v3951
        %v4016 = vunpack.c.l.b16 %v3952
        %v4017 = vunpack.c.l.b16 %v3953
        %v4018 = vunpack.c.l.b16 %v3954
        %v4019 = vunpack.c.l.b16 %v3955
        %v4020 = vunpack.c.l.b16 %v3956
        %v4021 = vunpack.c.l.b16 %v3957
        %v4022 = vunpack.c.l.b16 %v3958
        %v4023 = vunpack.c.l.b16 %v3959
        %v4024 = vunpack.c.l.b16 %v3960
        %v4025 = vunpack.c.l.b16 %v3961
        %v4026 = vunpack.c.l.b16 %v3962
        %v4027 = vunpack.c.l.b16 %v3963
        %v4028 = vunpack.c.l.b16 %v3964
        %v4029 = vunpack.c.l.b16 %v3965
        %v4030 = vunpack.c.l.b16 %v3966
        %v4031 = vunpack.c.l.b16 %v3967
        %v4032 = vunpack.c.l.b16 %v3968
        %v4033 = vunpack.c.l.b16 %v3969
        %v4034 = vunpack.c.l.b16 %v3970
        %v4035 = vunpack.c.l.b16 %v3971
        %v4036 = vunpack.c.l.b16 %v3972
        %v4037 = vunpack.c.l.b16 %v3973
        %v4038 = vunpack.c.l.b16 %v3974
        %v4039 = vunpack.c.l.b16 %v3975
        %v4040 = vunpack.c.l.b16 %v3976
        %v4041 = vunpack.c.l.b16 %v3977
        %v4042 = vunpack.c.l.b16 %v3978
        %v4043 = vunpack.c.l.b16 %v3979
        %v4044 = vunpack.c.l.b16 %v3980
        %v4045 = vpack.c.b16 %v4014, %v4013
        %v4046 = vpack.c.b16 %v4016, %v4015
        %v4047 = vpack.c.b16 %v4018, %v4017
        %v4048 = vpack.c.b16 %v4020, %v4019
        %v4049 = vpack.c.b16 %v4022, %v4021
        %v4050 = vpack.c.b16 %v4024, %v4023
        %v4051 = vpack.c.b16 %v4026, %v4025
        %v4052 = vpack.c.b16 %v4028, %v4027
        %v4053 = vpack.c.b16 %v4030, %v4029
        %v4054 = vpack.c.b16 %v4032, %v4031
        %v4055 = vpack.c.b16 %v4034, %v4033
        %v4056 = vpack.c.b16 %v4036, %v4035
        %v4057 = vpack.c.b16 %v4038, %v4037
        %v4058 = vpack.c.b16 %v4040, %v4039
        %v4059 = vpack.c.b16 %v4042, %v4041
        %v4060 = vpack.c.b16 %v4044, %v4043
        %4077 = vmatprep.subr.bf16.mxu0 0
        %4078 = vmatpush1.bf16.msra.mxu0 %v4045
        %4079 = vmatprep.subr.bf16.mxu0 0
        %4080 = vmatpush1.bf16.msra.mxu0 %v4046
        %4081 = vmatprep.subr.bf16.mxu0 0
        %4082 = vmatpush1.bf16.msra.mxu0 %v4047
        %4083 = vmatprep.subr.bf16.mxu0 0
        %4084 = vmatpush1.bf16.msra.mxu0 %v4048
        %4085 = vmatprep.subr.bf16.mxu0 0
        %4086 = vmatpush1.bf16.msra.mxu0 %v4049
        %4087 = vmatprep.subr.bf16.mxu0 0
        %4088 = vmatpush1.bf16.msra.mxu0 %v4050
        %4089 = vmatprep.subr.bf16.mxu0 0
        %4090 = vmatpush1.bf16.msra.mxu0 %v4051
        %4091 = vmatprep.subr.bf16.mxu0 0
        %4092 = vmatpush1.bf16.msra.mxu0 %v4052
        %4093 = vmatprep.subr.bf16.mxu0 0
        %4094 = vmatpush1.bf16.msra.mxu0 %v4053
        %4095 = vmatprep.subr.bf16.mxu0 0
        %4096 = vmatpush1.bf16.msra.mxu0 %v4054
        %4097 = vmatprep.subr.bf16.mxu0 0
        %4098 = vmatpush1.bf16.msra.mxu0 %v4055
        %4099 = vmatprep.subr.bf16.mxu0 0
        %4100 = vmatpush1.bf16.msra.mxu0 %v4056
        %4101 = vmatprep.subr.bf16.mxu0 0
        %4102 = vmatpush1.bf16.msra.mxu0 %v4057
        %4103 = vmatprep.subr.bf16.mxu0 0
        %4104 = vmatpush1.bf16.msra.mxu0 %v4058
        %4105 = vmatprep.subr.bf16.mxu0 0
        %4106 = vmatpush1.bf16.msra.mxu0 %v4059
        %4107 = vmatprep.subr.bf16.mxu0 0
        %4108 = vmatpush1.bf16.msra.mxu0 %v4060
        %4109 = vmatprep.mubr.bf16.mxu0 %v3749
        %4110 = vmatmul.mubr.bf16.gmra.mrb[0].mxu0 %v3748
        %v4111 = vpop.f32.mrb[0].mxu0
        %v4112 = vadd.f32 0.0, %v4111
        %v4113 = vpop.f32.mrb[0].mxu0
        %v4114 = vpop.f32.mrb[0].mxu0
        %v4115 = vadd.f32 0.0, %v4114
        %v4116 = vpop.f32.mrb[0].mxu0
        %4117 = vmatprep.mubr.bf16.mxu0 %v3751
        %4118 = vmatmul.mubr.bf16.gmra.mrb[0].mxu0 %v3750
        %v4119 = vpop.f32.mrb[0].mxu0
        %v4120 = vadd.f32 0.0, %v4119
        %v4121 = vpop.f32.mrb[0].mxu0
        %v4122 = vpop.f32.mrb[0].mxu0
        %v4123 = vadd.f32 0.0, %v4122
        %v4124 = vpop.f32.mrb[0].mxu0
        %4125 = vdwg.mxu0
        %v4126 = vadd.f32 %v3945, %v4112
        %v4127 = vadd.f32 %v3946, %v4115
        %v4128 = vadd.f32 %v3947, %v4120
        %v4129 = vadd.f32 %v3948, %v4123
        %v4130 = vld [vmem:[%s480 + $0x100] sm:$0xf]
        %v4131 = vld [vmem:[%s480 + $0x104] sm:$0xf]
        %v4132 = vld [vmem:[%s480 + $0x108] sm:$0xf]
        %v4133 = vld [vmem:[%s480 + $0x10c] sm:$0xf]
        %v4134 = vld [vmem:[%s480 + $0x110] sm:$0xf]
        %v4135 = vld [vmem:[%s480 + $0x114] sm:$0xf]
        %v4136 = vld [vmem:[%s480 + $0x118] sm:$0xf]
        %v4137 = vld [vmem:[%s480 + $0x11c] sm:$0xf]
        %v4138 = vld [vmem:[%s480 + $0x120] sm:$0xf]
        %v4139 = vld [vmem:[%s480 + $0x124] sm:$0xf]
        %v4140 = vld [vmem:[%s480 + $0x128] sm:$0xf]
        %v4141 = vld [vmem:[%s480 + $0x12c] sm:$0xf]
        %v4142 = vld [vmem:[%s480 + $0x130] sm:$0xf]
        %v4143 = vld [vmem:[%s480 + $0x134] sm:$0xf]
        %v4144 = vld [vmem:[%s480 + $0x138] sm:$0xf]
        %v4145 = vld [vmem:[%s480 + $0x13c] sm:$0xf]
        %v4146 = vld [vmem:[%s480 + $0x140] sm:$0xf]
        %v4147 = vld [vmem:[%s480 + $0x144] sm:$0xf]
        %v4148 = vld [vmem:[%s480 + $0x148] sm:$0xf]
        %v4149 = vld [vmem:[%s480 + $0x14c] sm:$0xf]
        %v4150 = vld [vmem:[%s480 + $0x150] sm:$0xf]
        %v4151 = vld [vmem:[%s480 + $0x154] sm:$0xf]
        %v4152 = vld [vmem:[%s480 + $0x158] sm:$0xf]
        %v4153 = vld [vmem:[%s480 + $0x15c] sm:$0xf]
        %v4154 = vld [vmem:[%s480 + $0x160] sm:$0xf]
        %v4155 = vld [vmem:[%s480 + $0x164] sm:$0xf]
        %v4156 = vld [vmem:[%s480 + $0x168] sm:$0xf]
        %v4157 = vld [vmem:[%s480 + $0x16c] sm:$0xf]
        %v4158 = vld [vmem:[%s480 + $0x170] sm:$0xf]
        %v4159 = vld [vmem:[%s480 + $0x174] sm:$0xf]
        %v4160 = vld [vmem:[%s480 + $0x178] sm:$0xf]
        %v4161 = vld [vmem:[%s480 + $0x17c] sm:$0xf]
        %v4194 = vunpack.c.l.b16 %v4130
        %v4195 = vunpack.c.l.b16 %v4131
        %v4196 = vunpack.c.l.b16 %v4132
        %v4197 = vunpack.c.l.b16 %v4133
        %v4198 = vunpack.c.l.b16 %v4134
        %v4199 = vunpack.c.l.b16 %v4135
        %v4200 = vunpack.c.l.b16 %v4136
        %v4201 = vunpack.c.l.b16 %v4137
        %v4202 = vunpack.c.l.b16 %v4138
        %v4203 = vunpack.c.l.b16 %v4139
        %v4204 = vunpack.c.l.b16 %v4140
        %v4205 = vunpack.c.l.b16 %v4141
        %v4206 = vunpack.c.l.b16 %v4142
        %v4207 = vunpack.c.l.b16 %v4143
        %v4208 = vunpack.c.l.b16 %v4144
        %v4209 = vunpack.c.l.b16 %v4145
        %v4210 = vunpack.c.l.b16 %v4146
        %v4211 = vunpack.c.l.b16 %v4147
        %v4212 = vunpack.c.l.b16 %v4148
        %v4213 = vunpack.c.l.b16 %v4149
        %v4214 = vunpack.c.l.b16 %v4150
        %v4215 = vunpack.c.l.b16 %v4151
        %v4216 = vunpack.c.l.b16 %v4152
        %v4217 = vunpack.c.l.b16 %v4153
        %v4218 = vunpack.c.l.b16 %v4154
        %v4219 = vunpack.c.l.b16 %v4155
        %v4220 = vunpack.c.l.b16 %v4156
        %v4221 = vunpack.c.l.b16 %v4157
        %v4222 = vunpack.c.l.b16 %v4158
        %v4223 = vunpack.c.l.b16 %v4159
        %v4224 = vunpack.c.l.b16 %v4160
        %v4225 = vunpack.c.l.b16 %v4161
        %v4226 = vpack.c.b16 %v4195, %v4194
        %v4227 = vpack.c.b16 %v4197, %v4196
        %v4228 = vpack.c.b16 %v4199, %v4198
        %v4229 = vpack.c.b16 %v4201, %v4200
        %v4230 = vpack.c.b16 %v4203, %v4202
        %v4231 = vpack.c.b16 %v4205, %v4204
        %v4232 = vpack.c.b16 %v4207, %v4206
        %v4233 = vpack.c.b16 %v4209, %v4208
        %v4234 = vpack.c.b16 %v4211, %v4210
        %v4235 = vpack.c.b16 %v4213, %v4212
        %v4236 = vpack.c.b16 %v4215, %v4214
        %v4237 = vpack.c.b16 %v4217, %v4216
        %v4238 = vpack.c.b16 %v4219, %v4218
        %v4239 = vpack.c.b16 %v4221, %v4220
        %v4240 = vpack.c.b16 %v4223, %v4222
        %v4241 = vpack.c.b16 %v4225, %v4224
        %4258 = vmatprep.subr.bf16.mxu0 0
        %4259 = vmatpush1.bf16.msra.mxu0 %v4226
        %4260 = vmatprep.subr.bf16.mxu0 0
        %4261 = vmatpush1.bf16.msra.mxu0 %v4227
        %4262 = vmatprep.subr.bf16.mxu0 0
        %4263 = vmatpush1.bf16.msra.mxu0 %v4228
        %4264 = vmatprep.subr.bf16.mxu0 0
        %4265 = vmatpush1.bf16.msra.mxu0 %v4229
        %4266 = vmatprep.subr.bf16.mxu0 0
        %4267 = vmatpush1.bf16.msra.mxu0 %v4230
        %4268 = vmatprep.subr.bf16.mxu0 0
        %4269 = vmatpush1.bf16.msra.mxu0 %v4231
        %4270 = vmatprep.subr.bf16.mxu0 0
        %4271 = vmatpush1.bf16.msra.mxu0 %v4232
        %4272 = vmatprep.subr.bf16.mxu0 0
        %4273 = vmatpush1.bf16.msra.mxu0 %v4233
        %4274 = vmatprep.subr.bf16.mxu0 0
        %4275 = vmatpush1.bf16.msra.mxu0 %v4234
        %4276 = vmatprep.subr.bf16.mxu0 0
        %4277 = vmatpush1.bf16.msra.mxu0 %v4235
        %4278 = vmatprep.subr.bf16.mxu0 0
        %4279 = vmatpush1.bf16.msra.mxu0 %v4236
        %4280 = vmatprep.subr.bf16.mxu0 0
        %4281 = vmatpush1.bf16.msra.mxu0 %v4237
        %4282 = vmatprep.subr.bf16.mxu0 0
        %4283 = vmatpush1.bf16.msra.mxu0 %v4238
        %4284 = vmatprep.subr.bf16.mxu0 0
        %4285 = vmatpush1.bf16.msra.mxu0 %v4239
        %4286 = vmatprep.subr.bf16.mxu0 0
        %4287 = vmatpush1.bf16.msra.mxu0 %v4240
        %4288 = vmatprep.subr.bf16.mxu0 0
        %4289 = vmatpush1.bf16.msra.mxu0 %v4241
        %4290 = vmatprep.mubr.bf16.mxu0 %v3749
        %4291 = vmatmul.mubr.bf16.gmra.mrb[0].mxu0 %v3748
        %v4292 = vpop.f32.mrb[0].mxu0
        %v4293 = vadd.f32 0.0, %v4292
        %v4294 = vpop.f32.mrb[0].mxu0
        %v4295 = vpop.f32.mrb[0].mxu0
        %v4296 = vadd.f32 0.0, %v4295
        %v4297 = vpop.f32.mrb[0].mxu0
        %4298 = vmatprep.mubr.bf16.mxu0 %v3751
        %4299 = vmatmul.mubr.bf16.gmra.mrb[0].mxu0 %v3750
        %v4300 = vpop.f32.mrb[0].mxu0
        %v4301 = vadd.f32 0.0, %v4300
        %v4302 = vpop.f32.mrb[0].mxu0
        %v4303 = vpop.f32.mrb[0].mxu0
        %v4304 = vadd.f32 0.0, %v4303
        %v4305 = vpop.f32.mrb[0].mxu0
        %4306 = vdwg.mxu0
        %v4311 = vrot.slane %v4293, 1
        %v4312 = vrot.slane %v4296, 1
        %v4313 = vsel %vm3688, %v4311, %v4312
        %v4314 = vrot.slane %v4301, 1
        %v4315 = vrot.slane %v4304, 1
        %v4316 = vsel %vm3688, %v4314, %v4315
        %v4321 = vsel %vm3688, %v4312, 0.0
        %v4322 = vsel %vm3688, %v4315, 0.0
        %v4323 = vadd.f32 %v4126, %v4313
        %v4324 = vadd.f32 %v4127, %v4321
        %v4325 = vadd.f32 %v4128, %v4316
        %v4326 = vadd.f32 %v4129, %v4322
        %v4327 = vrot.slane %v610, 2
        %v4328 = vlaneseq
        %v4329 = vshrl.u32 %v4328, 7
        %v4330 = vsub.s32 0, %v4329
        %v4331 = vrot.slane %v4327, %v4330
        %v4333 = vadd.f32 %v4323, %v4331
        %v4334 = vadd.f32 %v4324, %v4331
        %v4335 = vadd.f32 %v4325, %v4331
        %v4336 = vadd.f32 %v4326, %v4331
        %v4337 = vmax.f32 %v4333, 0.0
        %v4338 = vmax.f32 %v4334, 0.0
        %v4339 = vmax.f32 %v4335, 0.0
        %v4340 = vmax.f32 %v4336, 0.0
        %v4341 = vpack.c.bf16 %v4338, %v4337
        %v4342 = vpack.c.bf16 %v4340, %v4339
        %v4343 = vld [vmem:[%s489] sm:$0xf]
        %v4344 = vld [vmem:[%s489 + $0x4] sm:$0xf]
        %v4345 = vld [vmem:[%s489 + $0x8] sm:$0xf]
        %v4346 = vld [vmem:[%s489 + $0xc] sm:$0xf]
        %v4347 = vld [vmem:[%s489 + $0x10] sm:$0xf]
        %v4348 = vld [vmem:[%s489 + $0x14] sm:$0xf]
        %v4349 = vld [vmem:[%s489 + $0x18] sm:$0xf]
        %v4350 = vld [vmem:[%s489 + $0x1c] sm:$0xf]
        %v4359 = vunpack.c.l.b16 %v4343
        %v4360 = vunpack.c.l.b16 %v4344
        %v4361 = vunpack.c.l.b16 %v4345
        %v4362 = vunpack.c.l.b16 %v4346
        %v4363 = vunpack.c.l.b16 %v4347
        %v4364 = vunpack.c.l.b16 %v4348
        %v4365 = vunpack.c.l.b16 %v4349
        %v4366 = vunpack.c.l.b16 %v4350
        %v4367 = vpack.c.b16 %v4360, %v4359
        %v4368 = vpack.c.b16 %v4362, %v4361
        %v4369 = vpack.c.b16 %v4364, %v4363
        %v4370 = vpack.c.b16 %v4366, %v4365
        %vm4375 = vcmask 523264
        %v4377 = vsel %vm4375, %v4341, 0
        %v4380 = vsel %vm4375, %v4342, 0
        %4382 = vmatprep.subr.bf16.mxu0 0
        %4383 = vmatpush1.bf16.msra.mxu0 %v4367
        %4384 = vmatprep.subr.bf16.mxu0 0
        %4385 = vmatpush1.bf16.msra.mxu0 %v4368
        %4386 = vmatprep.subr.bf16.mxu0 0
        %4387 = vmatpush1.bf16.msra.mxu0 %v4369
        %4388 = vmatprep.subr.bf16.mxu0 0
        %4389 = vmatpush1.bf16.msra.mxu0 %v4370
        %4390 = vmatprep.subr.bf16.mxu0 0
        %4391 = vmatpush1.bf16.msra.mxu0 0
        %4392 = vmatprep.subr.bf16.mxu0 0
        %4393 = vmatpush1.bf16.msra.mxu0 0
        %4394 = vmatprep.subr.bf16.mxu0 0
        %4395 = vmatpush1.bf16.msra.mxu0 0
        %4396 = vmatprep.subr.bf16.mxu0 0
        %4397 = vmatpush1.bf16.msra.mxu0 0
        %4398 = vmatprep.subr.bf16.mxu0 0
        %4399 = vmatpush1.bf16.msra.mxu0 0
        %4400 = vmatprep.subr.bf16.mxu0 0
        %4401 = vmatpush1.bf16.msra.mxu0 0
        %4402 = vmatprep.subr.bf16.mxu0 0
        %4403 = vmatpush1.bf16.msra.mxu0 0
        %4404 = vmatprep.subr.bf16.mxu0 0
        %4405 = vmatpush1.bf16.msra.mxu0 0
        %4406 = vmatprep.subr.bf16.mxu0 0
        %4407 = vmatpush1.bf16.msra.mxu0 0
        %4408 = vmatprep.subr.bf16.mxu0 0
        %4409 = vmatpush1.bf16.msra.mxu0 0
        %4410 = vmatprep.subr.bf16.mxu0 0
        %4411 = vmatpush1.bf16.msra.mxu0 0
        %4412 = vmatprep.subr.bf16.mxu0 0
        %4413 = vmatpush1.bf16.msra.mxu0 0
        %4414 = vmatprep.mubr.bf16.mxu0 0
        %4415 = vmatmul.mubr.bf16.gmra.mrb[0].mxu0 %v4377
        %v4416 = vpop.f32.mrb[0].mxu0
        %v4417 = vadd.f32 0.0, %v4416
        %v4418 = vpop.f32.mrb[0].mxu0
        %v4419 = vpop.f32.mrb[0].mxu0
        %v4420 = vadd.f32 0.0, %v4419
        %v4421 = vpop.f32.mrb[0].mxu0
        %4422 = vmatprep.mubr.bf16.mxu0 0
        %4423 = vmatmul.mubr.bf16.gmra.mrb[0].mxu0 %v4380
        %v4424 = vpop.f32.mrb[0].mxu0
        %v4425 = vadd.f32 0.0, %v4424
        %v4426 = vpop.f32.mrb[0].mxu0
        %v4427 = vpop.f32.mrb[0].mxu0
        %v4428 = vadd.f32 0.0, %v4427
        %v4429 = vpop.f32.mrb[0].mxu0
        %4430 = vdwg.mxu0
        %4431 = vrot.lane.b32.xlu0 %v610, 64
        %v4432 = vpop.permute.xlu0 %4431
        %v4433 = vrot.slane %v4432, 2
        %v4434 = vlaneseq
        %v4435 = vshrl.u32 %v4434, 7
        %v4436 = vsub.s32 0, %v4435
        %v4437 = vrot.slane %v4433, %v4436
        %v4439 = vadd.f32 %v4417, %v4437
        %v4440 = vadd.f32 %v4420, %v4437
        %v4441 = vadd.f32 %v4425, %v4437
        %v4442 = vadd.f32 %v4428, %v4437
        %v4443 = vmax.f32 %v4439, 0.0
        %v4444 = vmax.f32 %v4440, 0.0
        %v4445 = vmax.f32 %v4441, 0.0
        %v4446 = vmax.f32 %v4442, 0.0
        %v4451 = vrot.slane %v4443, 7
        %v4452 = vrot.slane %v4444, 7
        %v4453 = vsel %vm1679, %v4451, %v4452
        %v4454 = vrot.slane %v4445, 7
        %v4455 = vrot.slane %v4446, 7
        %v4456 = vsel %vm1679, %v4454, %v4455
        %4457 = vrot.lane.b32.xlu0 %v4451, 112
        %v4458 = vpop.permute.xlu0 %4457
        %4459 = vrot.lane.b32.xlu0 %v4453, 112
        %v4460 = vpop.permute.xlu0 %4459
        %4461 = vrot.lane.b32.xlu0 %v4454, 112
        %v4462 = vpop.permute.xlu0 %4461
        %4463 = vrot.lane.b32.xlu0 %v4456, 112
        %v4464 = vpop.permute.xlu0 %4463
        %v4469 = vsel %vm1679, 0.0, %v4458
        %v4470 = vsel %vm1679, 0.0, %v4462
        %v4471 = vrot.slane %v4443, 1
        %v4472 = vrot.slane %v4444, 1
        %v4473 = vsel %vm3688, %v4471, %v4472
        %v4474 = vrot.slane %v4445, 1
        %v4475 = vrot.slane %v4446, 1
        %v4476 = vsel %vm3688, %v4474, %v4475
        %v4479 = vsel %vm3688, %v4472, 0.0
        %v4480 = vsel %vm3688, %v4475, 0.0
        %vm4481 = vcmask 1041408
        %v4482 = vrot.slane %v4443, 6
        %v4483 = vrot.slane %v4444, 6
        %v4484 = vsel %vm4481, %v4482, %v4483
        %v4485 = vrot.slane %v4445, 6
        %v4486 = vrot.slane %v4446, 6
        %v4487 = vsel %vm4481, %v4485, %v4486
        %4488 = vrot.lane.b32.xlu0 %v4482, 96
        %v4489 = vpop.permute.xlu0 %4488
        %4490 = vrot.lane.b32.xlu0 %v4484, 96
        %v4491 = vpop.permute.xlu0 %4490
        %4492 = vrot.lane.b32.xlu0 %v4485, 96
        %v4493 = vpop.permute.xlu0 %4492
        %4494 = vrot.lane.b32.xlu0 %v4487, 96
        %v4495 = vpop.permute.xlu0 %4494
        %v4498 = vsel %vm4481, 0.0, %v4489
        %v4499 = vsel %vm4481, 0.0, %v4493
        %4500 = vrot.lane.b32.xlu0 %v4451, 96
        %v4501 = vpop.permute.xlu0 %4500
        %4502 = vrot.lane.b32.xlu0 %v4453, 96
        %v4503 = vpop.permute.xlu0 %4502
        %4504 = vrot.lane.b32.xlu0 %v4454, 96
        %v4505 = vpop.permute.xlu0 %4504
        %4506 = vrot.lane.b32.xlu0 %v4456, 96
        %v4507 = vpop.permute.xlu0 %4506
        %v4510 = vsel %vm1679, 0.0, %v4501
        %v4511 = vsel %vm1679, 0.0, %v4505
        %vm4512 = vcmask 1045504
        %v4513 = vrot.slane %v4443, 2
        %v4514 = vrot.slane %v4444, 2
        %v4515 = vsel %vm4512, %v4513, %v4514
        %v4516 = vrot.slane %v4445, 2
        %v4517 = vrot.slane %v4446, 2
        %v4518 = vsel %vm4512, %v4516, %v4517
        %v4521 = vsel %vm4512, %v4514, 0.0
        %v4522 = vsel %vm4512, %v4517, 0.0
        %vm4523 = vcmask 1042432
        %v4524 = vrot.slane %v4443, 5
        %v4525 = vrot.slane %v4444, 5
        %v4526 = vsel %vm4523, %v4524, %v4525
        %v4527 = vrot.slane %v4445, 5
        %v4528 = vrot.slane %v4446, 5
        %v4529 = vsel %vm4523, %v4527, %v4528
        %4530 = vrot.lane.b32.xlu0 %v4524, 80
        %v4531 = vpop.permute.xlu0 %4530
        %4532 = vrot.lane.b32.xlu0 %v4526, 80
        %v4533 = vpop.permute.xlu0 %4532
        %4534 = vrot.lane.b32.xlu0 %v4527, 80
        %v4535 = vpop.permute.xlu0 %4534
        %4536 = vrot.lane.b32.xlu0 %v4529, 80
        %v4537 = vpop.permute.xlu0 %4536
        %v4542 = vsel %vm4523, 0.0, %v4531
        %v4543 = vsel %vm4523, 0.0, %v4535
        %4544 = vrot.lane.b32.xlu0 %v4482, 80
        %v4545 = vpop.permute.xlu0 %4544
        %4546 = vrot.lane.b32.xlu0 %v4484, 80
        %v4547 = vpop.permute.xlu0 %4546
        %4548 = vrot.lane.b32.xlu0 %v4485, 80
        %v4549 = vpop.permute.xlu0 %4548
        %4550 = vrot.lane.b32.xlu0 %v4487, 80
        %v4551 = vpop.permute.xlu0 %4550
        %v4554 = vsel %vm4481, 0.0, %v4545
        %v4555 = vsel %vm4481, 0.0, %v4549
        %4556 = vrot.lane.b32.xlu0 %v4451, 80
        %v4557 = vpop.permute.xlu0 %4556
        %4558 = vrot.lane.b32.xlu0 %v4453, 80
        %v4559 = vpop.permute.xlu0 %4558
        %4560 = vrot.lane.b32.xlu0 %v4454, 80
        %v4561 = vpop.permute.xlu0 %4560
        %4562 = vrot.lane.b32.xlu0 %v4456, 80
        %v4563 = vpop.permute.xlu0 %4562
        %v4566 = vsel %vm1679, 0.0, %v4557
        %v4567 = vsel %vm1679, 0.0, %v4561
        %vm4568 = vcmask 1044480
        %v4569 = vrot.slane %v4443, 3
        %v4570 = vrot.slane %v4444, 3
        %v4571 = vsel %vm4568, %v4569, %v4570
        %v4572 = vrot.slane %v4445, 3
        %v4573 = vrot.slane %v4446, 3
        %v4574 = vsel %vm4568, %v4572, %v4573
        %v4577 = vsel %vm4568, %v4570, 0.0
        %v4578 = vsel %vm4568, %v4573, 0.0
        %4581 = vrot.lane.b32.xlu0 %v4473, 16
        %v4582 = vpop.permute.xlu0 %4581
        %4583 = vrot.lane.b32.xlu0 %v4479, 16
        %v4584 = vpop.permute.xlu0 %4583
        %4585 = vrot.lane.b32.xlu0 %v4476, 16
        %v4586 = vpop.permute.xlu0 %4585
        %4587 = vrot.lane.b32.xlu0 %v4480, 16
        %v4588 = vpop.permute.xlu0 %4587
        %4595 = vrot.lane.b32.xlu0 %v4498, 48
        %v4596 = vpop.permute.xlu0 %4595
        %4597 = vrot.lane.b32.xlu0 %v4491, 48
        %v4598 = vpop.permute.xlu0 %4597
        %4599 = vrot.lane.b32.xlu0 %v4499, 48
        %v4600 = vpop.permute.xlu0 %4599
        %4601 = vrot.lane.b32.xlu0 %v4495, 48
        %v4602 = vpop.permute.xlu0 %4601
        %4609 = vrot.lane.b32.xlu0 %v4510, 64
        %v4610 = vpop.permute.xlu0 %4609
        %4611 = vrot.lane.b32.xlu0 %v4503, 64
        %v4612 = vpop.permute.xlu0 %4611
        %4613 = vrot.lane.b32.xlu0 %v4511, 64
        %v4614 = vpop.permute.xlu0 %4613
        %4615 = vrot.lane.b32.xlu0 %v4507, 64
        %v4616 = vpop.permute.xlu0 %4615
        %4621 = vrot.lane.b32.xlu0 %v4443, 48
        %v4622 = vpop.permute.xlu0 %4621
        %4623 = vrot.lane.b32.xlu0 %v4444, 48
        %v4624 = vpop.permute.xlu0 %4623
        %4625 = vrot.lane.b32.xlu0 %v4445, 48
        %v4626 = vpop.permute.xlu0 %4625
        %4627 = vrot.lane.b32.xlu0 %v4446, 48
        %v4628 = vpop.permute.xlu0 %4627
        %4633 = vrot.lane.b32.xlu0 %v4473, 64
        %v4634 = vpop.permute.xlu0 %4633
        %4635 = vrot.lane.b32.xlu0 %v4479, 64
        %v4636 = vpop.permute.xlu0 %4635
        %4637 = vrot.lane.b32.xlu0 %v4476, 64
        %v4638 = vpop.permute.xlu0 %4637
        %4639 = vrot.lane.b32.xlu0 %v4480, 64
        %v4640 = vpop.permute.xlu0 %4639
        %4647 = vrot.lane.b32.xlu0 %v4515, 80
        %v4648 = vpop.permute.xlu0 %4647
        %4649 = vrot.lane.b32.xlu0 %v4521, 80
        %v4650 = vpop.permute.xlu0 %4649
        %4651 = vrot.lane.b32.xlu0 %v4518, 80
        %v4652 = vpop.permute.xlu0 %4651
        %4653 = vrot.lane.b32.xlu0 %v4522, 80
        %v4654 = vpop.permute.xlu0 %4653
        %4661 = vrot.lane.b32.xlu0 %v4554, 16
        %v4662 = vpop.permute.xlu0 %4661
        %4663 = vrot.lane.b32.xlu0 %v4547, 16
        %v4664 = vpop.permute.xlu0 %4663
        %4665 = vrot.lane.b32.xlu0 %v4555, 16
        %v4666 = vpop.permute.xlu0 %4665
        %4667 = vrot.lane.b32.xlu0 %v4551, 16
        %v4668 = vpop.permute.xlu0 %4667
        %4675 = vrot.lane.b32.xlu0 %v4566, 32
        %v4676 = vpop.permute.xlu0 %4675
        %4677 = vrot.lane.b32.xlu0 %v4559, 32
        %v4678 = vpop.permute.xlu0 %4677
        %4679 = vrot.lane.b32.xlu0 %v4567, 32
        %v4680 = vpop.permute.xlu0 %4679
        %4681 = vrot.lane.b32.xlu0 %v4563, 32
        %v4682 = vpop.permute.xlu0 %4681
        %4687 = vrot.lane.b32.xlu0 %v4515, 32
        %v4688 = vpop.permute.xlu0 %4687
        %4689 = vrot.lane.b32.xlu0 %v4521, 32
        %v4690 = vpop.permute.xlu0 %4689
        %4691 = vrot.lane.b32.xlu0 %v4518, 32
        %v4692 = vpop.permute.xlu0 %4691
        %4693 = vrot.lane.b32.xlu0 %v4522, 32
        %v4694 = vpop.permute.xlu0 %4693
        %4701 = vrot.lane.b32.xlu0 %v4571, 48
        %v4702 = vpop.permute.xlu0 %4701
        %4703 = vrot.lane.b32.xlu0 %v4577, 48
        %v4704 = vpop.permute.xlu0 %4703
        %4705 = vrot.lane.b32.xlu0 %v4574, 48
        %v4706 = vpop.permute.xlu0 %4705
        %4707 = vrot.lane.b32.xlu0 %v4578, 48
        %v4708 = vpop.permute.xlu0 %4707
        %vm4713 = vcmask 130048
        %v4714 = vsel %vm4713, %v4469, %v4443
        %v4715 = vsel %vm4713, %v4460, %v4444
        %v4716 = vsel %vm4713, %v4470, %v4445
        %v4717 = vsel %vm4713, %v4464, %v4446
        %vm4718 = vcmask 261120
        %v4719 = vsel %vm4718, %v4714, %v4582
        %v4720 = vsel %vm4718, %v4715, %v4584
        %v4721 = vsel %vm4718, %v4716, %v4586
        %v4722 = vsel %vm4718, %v4717, %v4588
        %vm4723 = vcmask 392192
        %v4724 = vsel %vm4723, %v4719, %v4596
        %v4725 = vsel %vm4723, %v4720, %v4598
        %v4726 = vsel %vm4723, %v4721, %v4600
        %v4727 = vsel %vm4723, %v4722, %v4602
        %v4728 = vsel %vm4375, %v4724, %v4610
        %v4729 = vsel %vm4375, %v4725, %v4612
        %v4730 = vsel %vm4375, %v4726, %v4614
        %v4731 = vsel %vm4375, %v4727, %v4616
        %vm4732 = vcmask 654336
        %v4733 = vsel %vm4732, %v4728, %v4622
        %v4734 = vsel %vm4732, %v4729, %v4624
        %v4735 = vsel %vm4732, %v4730, %v4626
        %v4736 = vsel %vm4732, %v4731, %v4628
        %vm4737 = vcmask 785408
        %v4738 = vsel %vm4737, %v4733, %v4634
        %v4739 = vsel %vm4737, %v4734, %v4636
        %v4740 = vsel %vm4737, %v4735, %v4638
        %v4741 = vsel %vm4737, %v4736, %v4640
        %vm4742 = vcmask 916480
        %v4743 = vsel %vm4742, %v4738, %v4648
        %v4744 = vsel %vm4742, %v4739, %v4650
        %v4745 = vsel %vm4742, %v4740, %v4652
        %v4746 = vsel %vm4742, %v4741, %v4654
        %v4747 = vsel %vm4713, %v4542, %v4662
        %v4748 = vsel %vm4713, %v4533, %v4664
        %v4749 = vsel %vm4713, %v4543, %v4666
        %v4750 = vsel %vm4713, %v4537, %v4668
        %v4751 = vsel %vm4718, %v4747, %v4676
        %v4752 = vsel %vm4718, %v4748, %v4678
        %v4753 = vsel %vm4718, %v4749, %v4680
        %v4754 = vsel %vm4718, %v4750, %v4682
        %v4755 = vsel %vm4723, %v4751, %v4443
        %v4756 = vsel %vm4723, %v4752, %v4444
        %v4757 = vsel %vm4723, %v4753, %v4445
        %v4758 = vsel %vm4723, %v4754, %v4446
        %v4759 = vsel %vm4375, %v4755, %v4582
        %v4760 = vsel %vm4375, %v4756, %v4584
        %v4761 = vsel %vm4375, %v4757, %v4586
        %v4762 = vsel %vm4375, %v4758, %v4588
        %v4763 = vsel %vm4732, %v4759, %v4688
        %v4764 = vsel %vm4732, %v4760, %v4690
        %v4765 = vsel %vm4732, %v4761, %v4692
        %v4766 = vsel %vm4732, %v4762, %v4694
        %v4767 = vsel %vm4737, %v4763, %v4702
        %v4768 = vsel %vm4737, %v4764, %v4704
        %v4769 = vsel %vm4737, %v4765, %v4706
        %v4770 = vsel %vm4737, %v4766, %v4708
        %v4771 = vpack.c.bf16 %v4744, %v4743
        %v4772 = vpack.c.bf16 %v4768, %v4767
        %v4773 = vpack.c.bf16 %v4746, %v4745
        %v4774 = vpack.c.bf16 %v4770, %v4769
        %v4775 = vld [vmem:[%s498] sm:$0xf]
        %v4776 = vld [vmem:[%s498 + $0x4] sm:$0xf]
        %v4777 = vld [vmem:[%s498 + $0x8] sm:$0xf]
        %v4778 = vld [vmem:[%s498 + $0xc] sm:$0xf]
        %v4779 = vld [vmem:[%s498 + $0x10] sm:$0xf]
        %v4780 = vld [vmem:[%s498 + $0x14] sm:$0xf]
        %v4781 = vld [vmem:[%s498 + $0x18] sm:$0xf]
        %v4782 = vld [vmem:[%s498 + $0x1c] sm:$0xf]
        %v4783 = vld [vmem:[%s498 + $0x20] sm:$0xf]
        %v4784 = vld [vmem:[%s498 + $0x24] sm:$0xf]
        %v4785 = vld [vmem:[%s498 + $0x28] sm:$0xf]
        %v4786 = vld [vmem:[%s498 + $0x2c] sm:$0xf]
        %v4787 = vld [vmem:[%s498 + $0x30] sm:$0xf]
        %v4788 = vld [vmem:[%s498 + $0x34] sm:$0xf]
        %v4789 = vld [vmem:[%s498 + $0x38] sm:$0xf]
        %v4790 = vld [vmem:[%s498 + $0x3c] sm:$0xf]
        %v4791 = vld [vmem:[%s498 + $0x40] sm:$0xf]
        %v4792 = vld [vmem:[%s498 + $0x44] sm:$0xf]
        %v4793 = vld [vmem:[%s498 + $0x48] sm:$0xf]
        %v4794 = vld [vmem:[%s498 + $0x4c] sm:$0xf]
        %v4795 = vld [vmem:[%s498 + $0x50] sm:$0xf]
        %v4796 = vld [vmem:[%s498 + $0x54] sm:$0xf]
        %v4797 = vld [vmem:[%s498 + $0x58] sm:$0xf]
        %v4798 = vld [vmem:[%s498 + $0x5c] sm:$0xf]
        %v4799 = vld [vmem:[%s498 + $0x60] sm:$0xf]
        %v4800 = vld [vmem:[%s498 + $0x64] sm:$0xf]
        %v4801 = vld [vmem:[%s498 + $0x68] sm:$0xf]
        %v4802 = vld [vmem:[%s498 + $0x6c] sm:$0xf]
        %v4803 = vld [vmem:[%s498 + $0x70] sm:$0xf]
        %v4804 = vld [vmem:[%s498 + $0x74] sm:$0xf]
        %v4835 = vunpack.c.l.b16 %v4775
        %v4836 = vunpack.c.l.b16 %v4776
        %v4837 = vunpack.c.l.b16 %v4777
        %v4838 = vunpack.c.l.b16 %v4778
        %v4839 = vunpack.c.l.b16 %v4779
        %v4840 = vunpack.c.l.b16 %v4780
        %v4841 = vunpack.c.l.b16 %v4781
        %v4842 = vunpack.c.l.b16 %v4782
        %v4843 = vunpack.c.l.b16 %v4783
        %v4844 = vunpack.c.l.b16 %v4784
        %v4845 = vunpack.c.l.b16 %v4785
        %v4846 = vunpack.c.l.b16 %v4786
        %v4847 = vunpack.c.l.b16 %v4787
        %v4848 = vunpack.c.l.b16 %v4788
        %v4849 = vunpack.c.l.b16 %v4789
        %v4850 = vunpack.c.l.b16 %v4790
        %v4851 = vunpack.c.l.b16 %v4791
        %v4852 = vunpack.c.l.b16 %v4792
        %v4853 = vunpack.c.l.b16 %v4793
        %v4854 = vunpack.c.l.b16 %v4794
        %v4855 = vunpack.c.l.b16 %v4795
        %v4856 = vunpack.c.l.b16 %v4796
        %v4857 = vunpack.c.l.b16 %v4797
        %v4858 = vunpack.c.l.b16 %v4798
        %v4859 = vunpack.c.l.b16 %v4799
        %v4860 = vunpack.c.l.b16 %v4800
        %v4861 = vunpack.c.l.b16 %v4801
        %v4862 = vunpack.c.l.b16 %v4802
        %v4863 = vunpack.c.l.b16 %v4803
        %v4864 = vunpack.c.l.b16 %v4804
        %v4865 = vpack.c.b16 %v4836, %v4835
        %v4866 = vpack.c.b16 %v4838, %v4837
        %v4867 = vpack.c.b16 %v4840, %v4839
        %v4868 = vpack.c.b16 %v4842, %v4841
        %v4869 = vpack.c.b16 %v4844, %v4843
        %v4870 = vpack.c.b16 %v4846, %v4845
        %v4871 = vpack.c.b16 %v4848, %v4847
        %v4872 = vpack.c.b16 %v4850, %v4849
        %v4873 = vpack.c.b16 %v4852, %v4851
        %v4874 = vpack.c.b16 %v4854, %v4853
        %v4875 = vpack.c.b16 %v4856, %v4855
        %v4876 = vpack.c.b16 %v4858, %v4857
        %v4877 = vpack.c.b16 %v4860, %v4859
        %v4878 = vpack.c.b16 %v4862, %v4861
        %v4879 = vpack.c.b16 %v4864, %v4863
        %v4896 = vsel %vm4742, %v4772, 0
        %v4899 = vsel %vm4742, %v4774, 0
        %4901 = vmatprep.subr.bf16.mxu0 0
        %4902 = vmatpush1.bf16.msra.mxu0 %v4865
        %4903 = vmatprep.subr.bf16.mxu0 0
        %4904 = vmatpush1.bf16.msra.mxu0 %v4866
        %4905 = vmatprep.subr.bf16.mxu0 0
        %4906 = vmatpush1.bf16.msra.mxu0 %v4867
        %4907 = vmatprep.subr.bf16.mxu0 0
        %4908 = vmatpush1.bf16.msra.mxu0 %v4868
        %4909 = vmatprep.subr.bf16.mxu0 0
        %4910 = vmatpush1.bf16.msra.mxu0 %v4869
        %4911 = vmatprep.subr.bf16.mxu0 0
        %4912 = vmatpush1.bf16.msra.mxu0 %v4870
        %4913 = vmatprep.subr.bf16.mxu0 0
        %4914 = vmatpush1.bf16.msra.mxu0 %v4871
        %4915 = vmatprep.subr.bf16.mxu0 0
        %4916 = vmatpush1.bf16.msra.mxu0 %v4872
        %4917 = vmatprep.subr.bf16.mxu0 0
        %4918 = vmatpush1.bf16.msra.mxu0 %v4873
        %4919 = vmatprep.subr.bf16.mxu0 0
        %4920 = vmatpush1.bf16.msra.mxu0 %v4874
        %4921 = vmatprep.subr.bf16.mxu0 0
        %4922 = vmatpush1.bf16.msra.mxu0 %v4875
        %4923 = vmatprep.subr.bf16.mxu0 0
        %4924 = vmatpush1.bf16.msra.mxu0 %v4876
        %4925 = vmatprep.subr.bf16.mxu0 0
        %4926 = vmatpush1.bf16.msra.mxu0 %v4877
        %4927 = vmatprep.subr.bf16.mxu0 0
        %4928 = vmatpush1.bf16.msra.mxu0 %v4878
        %4929 = vmatprep.subr.bf16.mxu0 0
        %4930 = vmatpush1.bf16.msra.mxu0 %v4879
        %4931 = vmatprep.subr.bf16.mxu0 0
        %4932 = vmatpush1.bf16.msra.mxu0 0
        %4933 = vmatprep.mubr.bf16.mxu0 %v4896
        %4934 = vmatmul.mubr.bf16.gmra.mrb[0].mxu0 %v4771
        %v4935 = vpop.f32.mrb[0].mxu0
        %v4936 = vadd.f32 0.0, %v4935
        %v4937 = vpop.f32.mrb[0].mxu0
        %v4938 = vpop.f32.mrb[0].mxu0
        %v4939 = vadd.f32 0.0, %v4938
        %v4940 = vpop.f32.mrb[0].mxu0
        %4941 = vmatprep.mubr.bf16.mxu0 %v4899
        %4942 = vmatmul.mubr.bf16.gmra.mrb[0].mxu0 %v4773
        %v4943 = vpop.f32.mrb[0].mxu0
        %v4944 = vadd.f32 0.0, %v4943
        %v4945 = vpop.f32.mrb[0].mxu0
        %v4946 = vpop.f32.mrb[0].mxu0
        %v4947 = vadd.f32 0.0, %v4946
        %v4948 = vpop.f32.mrb[0].mxu0
        %4949 = vdwg.mxu0
        %v4950 = vrot.slane %v610, 3
        %v4951 = vlaneseq
        %v4952 = vshrl.u32 %v4951, 7
        %v4953 = vsub.s32 0, %v4952
        %v4954 = vrot.slane %v4950, %v4953
        %v4956 = vadd.f32 %v4936, %v4954
        %v4957 = vadd.f32 %v4939, %v4954
        %v4958 = vadd.f32 %v4944, %v4954
        %v4959 = vadd.f32 %v4947, %v4954
        %v4960 = vmax.f32 %v4956, 0.0
        %v4961 = vmax.f32 %v4957, 0.0
        %v4962 = vmax.f32 %v4958, 0.0
        %v4963 = vmax.f32 %v4959, 0.0
        %v4968 = vrot.slane %v4960, 6
        %v4969 = vrot.slane %v4961, 6
        %v4970 = vsel %vm4481, %v4968, %v4969
        %v4971 = vrot.slane %v4962, 6
        %v4972 = vrot.slane %v4963, 6
        %v4973 = vsel %vm4481, %v4971, %v4972
        %4974 = vrot.lane.b32.xlu0 %v4968, 112
        %v4975 = vpop.permute.xlu0 %4974
        %4976 = vrot.lane.b32.xlu0 %v4970, 112
        %v4977 = vpop.permute.xlu0 %4976
        %4978 = vrot.lane.b32.xlu0 %v4971, 112
        %v4979 = vpop.permute.xlu0 %4978
        %4980 = vrot.lane.b32.xlu0 %v4973, 112
        %v4981 = vpop.permute.xlu0 %4980
        %v4986 = vsel %vm4481, 0.0, %v4975
        %v4987 = vsel %vm4481, 0.0, %v4979
        %v4988 = vrot.slane %v4960, 7
        %v4989 = vrot.slane %v4961, 7
        %v4990 = vsel %vm1679, %v4988, %v4989
        %v4991 = vrot.slane %v4962, 7
        %v4992 = vrot.slane %v4963, 7
        %v4993 = vsel %vm1679, %v4991, %v4992
        %4994 = vrot.lane.b32.xlu0 %v4988, 112
        %v4995 = vpop.permute.xlu0 %4994
        %4996 = vrot.lane.b32.xlu0 %v4990, 112
        %v4997 = vpop.permute.xlu0 %4996
        %4998 = vrot.lane.b32.xlu0 %v4991, 112
        %v4999 = vpop.permute.xlu0 %4998
        %5000 = vrot.lane.b32.xlu0 %v4993, 112
        %v5001 = vpop.permute.xlu0 %5000
        %v5004 = vsel %vm1679, 0.0, %v4995
        %v5005 = vsel %vm1679, 0.0, %v4999
        %v5006 = vrot.slane %v4960, 1
        %v5007 = vrot.slane %v4961, 1
        %v5008 = vsel %vm3688, %v5006, %v5007
        %v5009 = vrot.slane %v4962, 1
        %v5010 = vrot.slane %v4963, 1
        %v5011 = vsel %vm3688, %v5009, %v5010
        %v5014 = vsel %vm3688, %v5007, 0.0
        %v5015 = vsel %vm3688, %v5010, 0.0
        %v5016 = vrot.slane %v4960, 2
        %v5017 = vrot.slane %v4961, 2
        %v5018 = vsel %vm4512, %v5016, %v5017
        %v5019 = vrot.slane %v4962, 2
        %v5020 = vrot.slane %v4963, 2
        %v5021 = vsel %vm4512, %v5019, %v5020
        %v5024 = vsel %vm4512, %v5017, 0.0
        %v5025 = vsel %vm4512, %v5020, 0.0
        %v5026 = vrot.slane %v4960, 5
        %v5027 = vrot.slane %v4961, 5
        %v5028 = vsel %vm4523, %v5026, %v5027
        %v5029 = vrot.slane %v4962, 5
        %v5030 = vrot.slane %v4963, 5
        %v5031 = vsel %vm4523, %v5029, %v5030
        %5032 = vrot.lane.b32.xlu0 %v5026, 96
        %v5033 = vpop.permute.xlu0 %5032
        %5034 = vrot.lane.b32.xlu0 %v5028, 96
        %v5035 = vpop.permute.xlu0 %5034
        %5036 = vrot.lane.b32.xlu0 %v5029, 96
        %v5037 = vpop.permute.xlu0 %5036
        %5038 = vrot.lane.b32.xlu0 %v5031, 96
        %v5039 = vpop.permute.xlu0 %5038
        %v5042 = vsel %vm4523, 0.0, %v5033
        %v5043 = vsel %vm4523, 0.0, %v5037
        %5044 = vrot.lane.b32.xlu0 %v4968, 96
        %v5045 = vpop.permute.xlu0 %5044
        %5046 = vrot.lane.b32.xlu0 %v4970, 96
        %v5047 = vpop.permute.xlu0 %5046
        %5048 = vrot.lane.b32.xlu0 %v4971, 96
        %v5049 = vpop.permute.xlu0 %5048
        %5050 = vrot.lane.b32.xlu0 %v4973, 96
        %v5051 = vpop.permute.xlu0 %5050
        %v5054 = vsel %vm4481, 0.0, %v5045
        %v5055 = vsel %vm4481, 0.0, %v5049
        %5056 = vrot.lane.b32.xlu0 %v4988, 96
        %v5057 = vpop.permute.xlu0 %5056
        %5058 = vrot.lane.b32.xlu0 %v4990, 96
        %v5059 = vpop.permute.xlu0 %5058
        %5060 = vrot.lane.b32.xlu0 %v4991, 96
        %v5061 = vpop.permute.xlu0 %5060
        %5062 = vrot.lane.b32.xlu0 %v4993, 96
        %v5063 = vpop.permute.xlu0 %5062
        %v5066 = vsel %vm1679, 0.0, %v5057
        %v5067 = vsel %vm1679, 0.0, %v5061
        %v5070 = vrot.slane %v4960, 3
        %v5071 = vrot.slane %v4961, 3
        %v5072 = vsel %vm4568, %v5070, %v5071
        %v5073 = vrot.slane %v4962, 3
        %v5074 = vrot.slane %v4963, 3
        %v5075 = vsel %vm4568, %v5073, %v5074
        %v5078 = vsel %vm4568, %v5071, 0.0
        %v5079 = vsel %vm4568, %v5074, 0.0
        %5082 = vrot.lane.b32.xlu0 %v5004, 16
        %v5083 = vpop.permute.xlu0 %5082
        %5084 = vrot.lane.b32.xlu0 %v4997, 16
        %v5085 = vpop.permute.xlu0 %5084
        %5086 = vrot.lane.b32.xlu0 %v5005, 16
        %v5087 = vpop.permute.xlu0 %5086
        %5088 = vrot.lane.b32.xlu0 %v5001, 16
        %v5089 = vpop.permute.xlu0 %5088
        %5094 = vrot.lane.b32.xlu0 %v4960, 16
        %v5095 = vpop.permute.xlu0 %5094
        %5096 = vrot.lane.b32.xlu0 %v4961, 16
        %v5097 = vpop.permute.xlu0 %5096
        %5098 = vrot.lane.b32.xlu0 %v4962, 16
        %v5099 = vpop.permute.xlu0 %5098
        %5100 = vrot.lane.b32.xlu0 %v4963, 16
        %v5101 = vpop.permute.xlu0 %5100
        %5108 = vrot.lane.b32.xlu0 %v5008, 32
        %v5109 = vpop.permute.xlu0 %5108
        %5110 = vrot.lane.b32.xlu0 %v5014, 32
        %v5111 = vpop.permute.xlu0 %5110
        %5112 = vrot.lane.b32.xlu0 %v5011, 32
        %v5113 = vpop.permute.xlu0 %5112
        %5114 = vrot.lane.b32.xlu0 %v5015, 32
        %v5115 = vpop.permute.xlu0 %5114
        %5122 = vrot.lane.b32.xlu0 %v5018, 48
        %v5123 = vpop.permute.xlu0 %5122
        %5124 = vrot.lane.b32.xlu0 %v5024, 48
        %v5125 = vpop.permute.xlu0 %5124
        %5126 = vrot.lane.b32.xlu0 %v5021, 48
        %v5127 = vpop.permute.xlu0 %5126
        %5128 = vrot.lane.b32.xlu0 %v5025, 48
        %v5129 = vpop.permute.xlu0 %5128
        %5136 = vrot.lane.b32.xlu0 %v5042, 80
        %v5137 = vpop.permute.xlu0 %5136
        %5138 = vrot.lane.b32.xlu0 %v5035, 80
        %v5139 = vpop.permute.xlu0 %5138
        %5140 = vrot.lane.b32.xlu0 %v5043, 80
        %v5141 = vpop.permute.xlu0 %5140
        %5142 = vrot.lane.b32.xlu0 %v5039, 80
        %v5143 = vpop.permute.xlu0 %5142
        %5150 = vrot.lane.b32.xlu0 %v5054, 96
        %v5151 = vpop.permute.xlu0 %5150
        %5152 = vrot.lane.b32.xlu0 %v5047, 96
        %v5153 = vpop.permute.xlu0 %5152
        %5154 = vrot.lane.b32.xlu0 %v5055, 96
        %v5155 = vpop.permute.xlu0 %5154
        %5156 = vrot.lane.b32.xlu0 %v5051, 96
        %v5157 = vpop.permute.xlu0 %5156
        %5164 = vrot.lane.b32.xlu0 %v5066, 112
        %v5165 = vpop.permute.xlu0 %5164
        %5166 = vrot.lane.b32.xlu0 %v5059, 112
        %v5167 = vpop.permute.xlu0 %5166
        %5168 = vrot.lane.b32.xlu0 %v5067, 112
        %v5169 = vpop.permute.xlu0 %5168
        %5170 = vrot.lane.b32.xlu0 %v5063, 112
        %v5171 = vpop.permute.xlu0 %5170
        %5176 = vrot.lane.b32.xlu0 %v4960, 96
        %v5177 = vpop.permute.xlu0 %5176
        %5178 = vrot.lane.b32.xlu0 %v4961, 96
        %v5179 = vpop.permute.xlu0 %5178
        %5180 = vrot.lane.b32.xlu0 %v4962, 96
        %v5181 = vpop.permute.xlu0 %5180
        %5182 = vrot.lane.b32.xlu0 %v4963, 96
        %v5183 = vpop.permute.xlu0 %5182
        %5188 = vrot.lane.b32.xlu0 %v5008, 112
        %v5189 = vpop.permute.xlu0 %5188
        %5190 = vrot.lane.b32.xlu0 %v5014, 112
        %v5191 = vpop.permute.xlu0 %5190
        %5192 = vrot.lane.b32.xlu0 %v5011, 112
        %v5193 = vpop.permute.xlu0 %5192
        %5194 = vrot.lane.b32.xlu0 %v5015, 112
        %v5195 = vpop.permute.xlu0 %5194
        %5202 = vrot.lane.b32.xlu0 %v5072, 16
        %v5203 = vpop.permute.xlu0 %5202
        %5204 = vrot.lane.b32.xlu0 %v5078, 16
        %v5205 = vpop.permute.xlu0 %5204
        %5206 = vrot.lane.b32.xlu0 %v5075, 16
        %v5207 = vpop.permute.xlu0 %5206
        %5208 = vrot.lane.b32.xlu0 %v5079, 16
        %v5209 = vpop.permute.xlu0 %5208
        %v5214 = vsel %vm4713, %v4986, %v5083
        %v5215 = vsel %vm4713, %v4977, %v5085
        %v5216 = vsel %vm4713, %v4987, %v5087
        %v5217 = vsel %vm4713, %v4981, %v5089
        %v5218 = vsel %vm4718, %v5214, %v5095
        %v5219 = vsel %vm4718, %v5215, %v5097
        %v5220 = vsel %vm4718, %v5216, %v5099
        %v5221 = vsel %vm4718, %v5217, %v5101
        %v5222 = vsel %vm4723, %v5218, %v5109
        %v5223 = vsel %vm4723, %v5219, %v5111
        %v5224 = vsel %vm4723, %v5220, %v5113
        %v5225 = vsel %vm4723, %v5221, %v5115
        %v5226 = vsel %vm4375, %v5222, %v5123
        %v5227 = vsel %vm4375, %v5223, %v5125
        %v5228 = vsel %vm4375, %v5224, %v5127
        %v5229 = vsel %vm4375, %v5225, %v5129
        %v5230 = vsel %vm4732, %v5226, %v5137
        %v5231 = vsel %vm4732, %v5227, %v5139
        %v5232 = vsel %vm4732, %v5228, %v5141
        %v5233 = vsel %vm4732, %v5229, %v5143
        %v5234 = vsel %vm4737, %v5230, %v5151
        %v5235 = vsel %vm4737, %v5231, %v5153
        %v5236 = vsel %vm4737, %v5232, %v5155
        %v5237 = vsel %vm4737, %v5233, %v5157
        %v5238 = vsel %vm4742, %v5234, %v5165
        %v5239 = vsel %vm4742, %v5235, %v5167
        %v5240 = vsel %vm4742, %v5236, %v5169
        %v5241 = vsel %vm4742, %v5237, %v5171
        %v5242 = vsel %vm4713, %v5177, %v5189
        %v5243 = vsel %vm4713, %v5179, %v5191
        %v5244 = vsel %vm4713, %v5181, %v5193
        %v5245 = vsel %vm4713, %v5183, %v5195
        %v5246 = vsel %vm4718, %v5242, %v5018
        %v5247 = vsel %vm4718, %v5243, %v5024
        %v5248 = vsel %vm4718, %v5244, %v5021
        %v5249 = vsel %vm4718, %v5245, %v5025
        %v5250 = vsel %vm4723, %v5246, %v5203
        %v5251 = vsel %vm4723, %v5247, %v5205
        %v5252 = vsel %vm4723, %v5248, %v5207
        %v5253 = vsel %vm4723, %v5249, %v5209
        %v5254 = vpack.c.bf16 %v5239, %v5238
        %v5255 = vpack.c.bf16 %v5251, %v5250
        %v5256 = vpack.c.bf16 %v5241, %v5240
        %v5257 = vpack.c.bf16 %v5253, %v5252
        %v5258 = vld [vmem:[%s507] sm:$0xf]
        %v5259 = vld [vmem:[%s507 + $0x4] sm:$0xf]
        %v5260 = vld [vmem:[%s507 + $0x8] sm:$0xf]
        %v5261 = vld [vmem:[%s507 + $0xc] sm:$0xf]
        %v5262 = vld [vmem:[%s507 + $0x10] sm:$0xf]
        %v5263 = vld [vmem:[%s507 + $0x14] sm:$0xf]
        %v5264 = vld [vmem:[%s507 + $0x18] sm:$0xf]
        %v5265 = vld [vmem:[%s507 + $0x1c] sm:$0xf]
        %v5266 = vld [vmem:[%s507 + $0x20] sm:$0xf]
        %v5267 = vld [vmem:[%s507 + $0x24] sm:$0xf]
        %v5268 = vld [vmem:[%s507 + $0x28] sm:$0xf]
        %v5269 = vld [vmem:[%s507 + $0x2c] sm:$0xf]
        %v5270 = vld [vmem:[%s507 + $0x30] sm:$0xf]
        %v5271 = vld [vmem:[%s507 + $0x34] sm:$0xf]
        %v5272 = vld [vmem:[%s507 + $0x38] sm:$0xf]
        %v5273 = vld [vmem:[%s507 + $0x3c] sm:$0xf]
        %v5274 = vld [vmem:[%s507 + $0x40] sm:$0xf]
        %v5275 = vld [vmem:[%s507 + $0x44] sm:$0xf]
        %v5276 = vld [vmem:[%s507 + $0x48] sm:$0xf]
        %v5277 = vld [vmem:[%s507 + $0x4c] sm:$0xf]
        %v5278 = vld [vmem:[%s507 + $0x50] sm:$0xf]
        %v5279 = vld [vmem:[%s507 + $0x54] sm:$0xf]
        %v5280 = vld [vmem:[%s507 + $0x58] sm:$0xf]
        %v5281 = vld [vmem:[%s507 + $0x5c] sm:$0xf]
        %v5306 = vunpack.c.l.b16 %v5258
        %v5307 = vunpack.c.l.b16 %v5259
        %v5308 = vunpack.c.l.b16 %v5260
        %v5309 = vunpack.c.l.b16 %v5261
        %v5310 = vunpack.c.l.b16 %v5262
        %v5311 = vunpack.c.l.b16 %v5263
        %v5312 = vunpack.c.l.b16 %v5264
        %v5313 = vunpack.c.l.b16 %v5265
        %v5314 = vunpack.c.l.b16 %v5266
        %v5315 = vunpack.c.l.b16 %v5267
        %v5316 = vunpack.c.l.b16 %v5268
        %v5317 = vunpack.c.l.b16 %v5269
        %v5318 = vunpack.c.l.b16 %v5270
        %v5319 = vunpack.c.l.b16 %v5271
        %v5320 = vunpack.c.l.b16 %v5272
        %v5321 = vunpack.c.l.b16 %v5273
        %v5322 = vunpack.c.l.b16 %v5274
        %v5323 = vunpack.c.l.b16 %v5275
        %v5324 = vunpack.c.l.b16 %v5276
        %v5325 = vunpack.c.l.b16 %v5277
        %v5326 = vunpack.c.l.b16 %v5278
        %v5327 = vunpack.c.l.b16 %v5279
        %v5328 = vunpack.c.l.b16 %v5280
        %v5329 = vunpack.c.l.b16 %v5281
        %v5330 = vpack.c.b16 %v5307, %v5306
        %v5331 = vpack.c.b16 %v5309, %v5308
        %v5332 = vpack.c.b16 %v5311, %v5310
        %v5333 = vpack.c.b16 %v5313, %v5312
        %v5334 = vpack.c.b16 %v5315, %v5314
        %v5335 = vpack.c.b16 %v5317, %v5316
        %v5336 = vpack.c.b16 %v5319, %v5318
        %v5337 = vpack.c.b16 %v5321, %v5320
        %v5338 = vpack.c.b16 %v5323, %v5322
        %v5339 = vpack.c.b16 %v5325, %v5324
        %v5340 = vpack.c.b16 %v5327, %v5326
        %v5341 = vpack.c.b16 %v5329, %v5328
        %v5355 = vsel %vm4375, %v5255, 0
        %v5358 = vsel %vm4375, %v5257, 0
        %5360 = vmatprep.subr.bf16.mxu0 0
        %5361 = vmatpush1.bf16.msra.mxu0 %v5330
        %5362 = vmatprep.subr.bf16.mxu0 0
        %5363 = vmatpush1.bf16.msra.mxu0 %v5331
        %5364 = vmatprep.subr.bf16.mxu0 0
        %5365 = vmatpush1.bf16.msra.mxu0 %v5332
        %5366 = vmatprep.subr.bf16.mxu0 0
        %5367 = vmatpush1.bf16.msra.mxu0 %v5333
        %5368 = vmatprep.subr.bf16.mxu0 0
        %5369 = vmatpush1.bf16.msra.mxu0 %v5334
        %5370 = vmatprep.subr.bf16.mxu0 0
        %5371 = vmatpush1.bf16.msra.mxu0 %v5335
        %5372 = vmatprep.subr.bf16.mxu0 0
        %5373 = vmatpush1.bf16.msra.mxu0 %v5336
        %5374 = vmatprep.subr.bf16.mxu0 0
        %5375 = vmatpush1.bf16.msra.mxu0 %v5337
        %5376 = vmatprep.subr.bf16.mxu0 0
        %5377 = vmatpush1.bf16.msra.mxu0 %v5338
        %5378 = vmatprep.subr.bf16.mxu0 0
        %5379 = vmatpush1.bf16.msra.mxu0 %v5339
        %5380 = vmatprep.subr.bf16.mxu0 0
        %5381 = vmatpush1.bf16.msra.mxu0 %v5340
        %5382 = vmatprep.subr.bf16.mxu0 0
        %5383 = vmatpush1.bf16.msra.mxu0 %v5341
        %5384 = vmatprep.subr.bf16.mxu0 0
        %5385 = vmatpush1.bf16.msra.mxu0 0
        %5386 = vmatprep.subr.bf16.mxu0 0
        %5387 = vmatpush1.bf16.msra.mxu0 0
        %5388 = vmatprep.subr.bf16.mxu0 0
        %5389 = vmatpush1.bf16.msra.mxu0 0
        %5390 = vmatprep.subr.bf16.mxu0 0
        %5391 = vmatpush1.bf16.msra.mxu0 0
        %5392 = vmatprep.mubr.bf16.mxu0 %v5355
        %5393 = vmatmul.mubr.bf16.gmra.mrb[0].mxu0 %v5254
        %v5394 = vpop.f32.mrb[0].mxu0
        %v5395 = vadd.f32 0.0, %v5394
        %v5396 = vpop.f32.mrb[0].mxu0
        %v5397 = vpop.f32.mrb[0].mxu0
        %v5398 = vadd.f32 0.0, %v5397
        %v5399 = vpop.f32.mrb[0].mxu0
        %5400 = vmatprep.mubr.bf16.mxu0 %v5358
        %5401 = vmatmul.mubr.bf16.gmra.mrb[0].mxu0 %v5256
        %v5402 = vpop.f32.mrb[0].mxu0
        %v5403 = vadd.f32 0.0, %v5402
        %v5404 = vpop.f32.mrb[0].mxu0
        %v5405 = vpop.f32.mrb[0].mxu0
        %v5406 = vadd.f32 0.0, %v5405
        %v5407 = vpop.f32.mrb[0].mxu0
        %5408 = vdwg.mxu0
        %5409 = vrot.lane.b32.xlu0 %v610, 80
        %v5410 = vpop.permute.xlu0 %5409
        %v5411 = vrot.slane %v5410, 3
        %v5412 = vlaneseq
        %v5413 = vshrl.u32 %v5412, 7
        %v5414 = vsub.s32 0, %v5413
        %v5415 = vrot.slane %v5411, %v5414
        %v5417 = vadd.f32 %v5395, %v5415
        %v5418 = vadd.f32 %v5398, %v5415
        %v5419 = vadd.f32 %v5403, %v5415
        %v5420 = vadd.f32 %v5406, %v5415
        %v5421 = vmax.f32 %v5417, 0.0
        %v5422 = vmax.f32 %v5418, 0.0
        %v5423 = vmax.f32 %v5419, 0.0
        %v5424 = vmax.f32 %v5420, 0.0
        %v5429 = vrot.slane %v5421, 5
        %v5430 = vrot.slane %v5422, 5
        %v5431 = vsel %vm4523, %v5429, %v5430
        %v5432 = vrot.slane %v5423, 5
        %v5433 = vrot.slane %v5424, 5
        %v5434 = vsel %vm4523, %v5432, %v5433
        %5435 = vrot.lane.b32.xlu0 %v5429, 112
        %v5436 = vpop.permute.xlu0 %5435
        %5437 = vrot.lane.b32.xlu0 %v5431, 112
        %v5438 = vpop.permute.xlu0 %5437
        %5439 = vrot.lane.b32.xlu0 %v5432, 112
        %v5440 = vpop.permute.xlu0 %5439
        %5441 = vrot.lane.b32.xlu0 %v5434, 112
        %v5442 = vpop.permute.xlu0 %5441
        %v5447 = vsel %vm4523, 0.0, %v5436
        %v5448 = vsel %vm4523, 0.0, %v5440
        %v5449 = vrot.slane %v5421, 6
        %v5450 = vrot.slane %v5422, 6
        %v5451 = vsel %vm4481, %v5449, %v5450
        %v5452 = vrot.slane %v5423, 6
        %v5453 = vrot.slane %v5424, 6
        %v5454 = vsel %vm4481, %v5452, %v5453
        %5455 = vrot.lane.b32.xlu0 %v5449, 112
        %v5456 = vpop.permute.xlu0 %5455
        %5457 = vrot.lane.b32.xlu0 %v5451, 112
        %v5458 = vpop.permute.xlu0 %5457
        %5459 = vrot.lane.b32.xlu0 %v5452, 112
        %v5460 = vpop.permute.xlu0 %5459
        %5461 = vrot.lane.b32.xlu0 %v5454, 112
        %v5462 = vpop.permute.xlu0 %5461
        %v5465 = vsel %vm4481, 0.0, %v5456
        %v5466 = vsel %vm4481, 0.0, %v5460
        %v5467 = vrot.slane %v5421, 7
        %v5468 = vrot.slane %v5422, 7
        %v5469 = vsel %vm1679, %v5467, %v5468
        %v5470 = vrot.slane %v5423, 7
        %v5471 = vrot.slane %v5424, 7
        %v5472 = vsel %vm1679, %v5470, %v5471
        %5473 = vrot.lane.b32.xlu0 %v5467, 112
        %v5474 = vpop.permute.xlu0 %5473
        %5475 = vrot.lane.b32.xlu0 %v5469, 112
        %v5476 = vpop.permute.xlu0 %5475
        %5477 = vrot.lane.b32.xlu0 %v5470, 112
        %v5478 = vpop.permute.xlu0 %5477
        %5479 = vrot.lane.b32.xlu0 %v5472, 112
        %v5480 = vpop.permute.xlu0 %5479
        %v5483 = vsel %vm1679, 0.0, %v5474
        %v5484 = vsel %vm1679, 0.0, %v5478
        %v5485 = vrot.slane %v5421, 1
        %v5486 = vrot.slane %v5422, 1
        %v5487 = vsel %vm3688, %v5485, %v5486
        %v5488 = vrot.slane %v5423, 1
        %v5489 = vrot.slane %v5424, 1
        %v5490 = vsel %vm3688, %v5488, %v5489
        %v5493 = vsel %vm3688, %v5486, 0.0
        %v5494 = vsel %vm3688, %v5489, 0.0
        %v5495 = vrot.slane %v5421, 2
        %v5496 = vrot.slane %v5422, 2
        %v5497 = vsel %vm4512, %v5495, %v5496
        %v5498 = vrot.slane %v5423, 2
        %v5499 = vrot.slane %v5424, 2
        %v5500 = vsel %vm4512, %v5498, %v5499
        %v5503 = vsel %vm4512, %v5496, 0.0
        %v5504 = vsel %vm4512, %v5499, 0.0
        %v5505 = vrot.slane %v5421, 3
        %v5506 = vrot.slane %v5422, 3
        %v5507 = vsel %vm4568, %v5505, %v5506
        %v5508 = vrot.slane %v5423, 3
        %v5509 = vrot.slane %v5424, 3
        %v5510 = vsel %vm4568, %v5508, %v5509
        %v5513 = vsel %vm4568, %v5506, 0.0
        %v5514 = vsel %vm4568, %v5509, 0.0
        %5517 = vrot.lane.b32.xlu0 %v5465, 16
        %v5518 = vpop.permute.xlu0 %5517
        %5519 = vrot.lane.b32.xlu0 %v5458, 16
        %v5520 = vpop.permute.xlu0 %5519
        %5521 = vrot.lane.b32.xlu0 %v5466, 16
        %v5522 = vpop.permute.xlu0 %5521
        %5523 = vrot.lane.b32.xlu0 %v5462, 16
        %v5524 = vpop.permute.xlu0 %5523
        %5531 = vrot.lane.b32.xlu0 %v5483, 32
        %v5532 = vpop.permute.xlu0 %5531
        %5533 = vrot.lane.b32.xlu0 %v5476, 32
        %v5534 = vpop.permute.xlu0 %5533
        %5535 = vrot.lane.b32.xlu0 %v5484, 32
        %v5536 = vpop.permute.xlu0 %5535
        %5537 = vrot.lane.b32.xlu0 %v5480, 32
        %v5538 = vpop.permute.xlu0 %5537
        %5543 = vrot.lane.b32.xlu0 %v5421, 32
        %v5544 = vpop.permute.xlu0 %5543
        %5545 = vrot.lane.b32.xlu0 %v5422, 32
        %v5546 = vpop.permute.xlu0 %5545
        %5547 = vrot.lane.b32.xlu0 %v5423, 32
        %v5548 = vpop.permute.xlu0 %5547
        %5549 = vrot.lane.b32.xlu0 %v5424, 32
        %v5550 = vpop.permute.xlu0 %5549
        %5557 = vrot.lane.b32.xlu0 %v5487, 48
        %v5558 = vpop.permute.xlu0 %5557
        %5559 = vrot.lane.b32.xlu0 %v5493, 48
        %v5560 = vpop.permute.xlu0 %5559
        %5561 = vrot.lane.b32.xlu0 %v5490, 48
        %v5562 = vpop.permute.xlu0 %5561
        %5563 = vrot.lane.b32.xlu0 %v5494, 48
        %v5564 = vpop.permute.xlu0 %5563
        %5571 = vrot.lane.b32.xlu0 %v5497, 64
        %v5572 = vpop.permute.xlu0 %5571
        %5573 = vrot.lane.b32.xlu0 %v5503, 64
        %v5574 = vpop.permute.xlu0 %5573
        %5575 = vrot.lane.b32.xlu0 %v5500, 64
        %v5576 = vpop.permute.xlu0 %5575
        %5577 = vrot.lane.b32.xlu0 %v5504, 64
        %v5578 = vpop.permute.xlu0 %5577
        %5585 = vrot.lane.b32.xlu0 %v5507, 80
        %v5586 = vpop.permute.xlu0 %5585
        %5587 = vrot.lane.b32.xlu0 %v5513, 80
        %v5588 = vpop.permute.xlu0 %5587
        %5589 = vrot.lane.b32.xlu0 %v5510, 80
        %v5590 = vpop.permute.xlu0 %5589
        %5591 = vrot.lane.b32.xlu0 %v5514, 80
        %v5592 = vpop.permute.xlu0 %5591
        %v5597 = vsel %vm4713, %v5447, %v5518
        %v5598 = vsel %vm4713, %v5438, %v5520
        %v5599 = vsel %vm4713, %v5448, %v5522
        %v5600 = vsel %vm4713, %v5442, %v5524
        %v5601 = vsel %vm4718, %v5597, %v5532
        %v5602 = vsel %vm4718, %v5598, %v5534
        %v5603 = vsel %vm4718, %v5599, %v5536
        %v5604 = vsel %vm4718, %v5600, %v5538
        %v5605 = vsel %vm4723, %v5601, %v5544
        %v5606 = vsel %vm4723, %v5602, %v5546
        %v5607 = vsel %vm4723, %v5603, %v5548
        %v5608 = vsel %vm4723, %v5604, %v5550
        %v5609 = vsel %vm4375, %v5605, %v5558
        %v5610 = vsel %vm4375, %v5606, %v5560
        %v5611 = vsel %vm4375, %v5607, %v5562
        %v5612 = vsel %vm4375, %v5608, %v5564
        %v5613 = vsel %vm4732, %v5609, %v5572
        %v5614 = vsel %vm4732, %v5610, %v5574
        %v5615 = vsel %vm4732, %v5611, %v5576
        %v5616 = vsel %vm4732, %v5612, %v5578
        %v5617 = vsel %vm4737, %v5613, %v5586
        %v5618 = vsel %vm4737, %v5614, %v5588
        %v5619 = vsel %vm4737, %v5615, %v5590
        %v5620 = vsel %vm4737, %v5616, %v5592
        %v5621 = vpack.c.bf16 %v5618, %v5617
        %v5622 = vpack.c.bf16 %v5620, %v5619
        %v5623 = vld [vmem:[%s516] sm:$0xf]
        %v5624 = vld [vmem:[%s516 + $0x4] sm:$0xf]
        %v5625 = vld [vmem:[%s516 + $0x8] sm:$0xf]
        %v5626 = vld [vmem:[%s516 + $0xc] sm:$0xf]
        %v5627 = vld [vmem:[%s516 + $0x10] sm:$0xf]
        %v5628 = vld [vmem:[%s516 + $0x14] sm:$0xf]
        %v5629 = vld [vmem:[%s516 + $0x18] sm:$0xf]
        %v5630 = vld [vmem:[%s516 + $0x1c] sm:$0xf]
        %v5631 = vld [vmem:[%s516 + $0x20] sm:$0xf]
        %v5632 = vld [vmem:[%s516 + $0x24] sm:$0xf]
        %v5633 = vld [vmem:[%s516 + $0x28] sm:$0xf]
        %v5634 = vld [vmem:[%s516 + $0x2c] sm:$0xf]
        %v5635 = vld [vmem:[%s516 + $0x30] sm:$0xf]
        %v5636 = vld [vmem:[%s516 + $0x34] sm:$0xf]
        %v5651 = vunpack.c.l.b16 %v5623
        %v5652 = vunpack.c.l.b16 %v5624
        %v5653 = vunpack.c.l.b16 %v5625
        %v5654 = vunpack.c.l.b16 %v5626
        %v5655 = vunpack.c.l.b16 %v5627
        %v5656 = vunpack.c.l.b16 %v5628
        %v5657 = vunpack.c.l.b16 %v5629
        %v5658 = vunpack.c.l.b16 %v5630
        %v5659 = vunpack.c.l.b16 %v5631
        %v5660 = vunpack.c.l.b16 %v5632
        %v5661 = vunpack.c.l.b16 %v5633
        %v5662 = vunpack.c.l.b16 %v5634
        %v5663 = vunpack.c.l.b16 %v5635
        %v5664 = vunpack.c.l.b16 %v5636
        %v5665 = vpack.c.b16 %v5652, %v5651
        %v5666 = vpack.c.b16 %v5654, %v5653
        %v5667 = vpack.c.b16 %v5656, %v5655
        %v5668 = vpack.c.b16 %v5658, %v5657
        %v5669 = vpack.c.b16 %v5660, %v5659
        %v5670 = vpack.c.b16 %v5662, %v5661
        %v5671 = vpack.c.b16 %v5664, %v5663
        %v5680 = vsel %vm4742, %v5621, 0
        %v5683 = vsel %vm4742, %v5622, 0
        %5685 = vmatprep.subr.bf16.mxu0 0
        %5686 = vmatpush1.bf16.msra.mxu0 %v5665
        %5687 = vmatprep.subr.bf16.mxu0 0
        %5688 = vmatpush1.bf16.msra.mxu0 %v5666
        %5689 = vmatprep.subr.bf16.mxu0 0
        %5690 = vmatpush1.bf16.msra.mxu0 %v5667
        %5691 = vmatprep.subr.bf16.mxu0 0
        %5692 = vmatpush1.bf16.msra.mxu0 %v5668
        %5693 = vmatprep.subr.bf16.mxu0 0
        %5694 = vmatpush1.bf16.msra.mxu0 %v5669
        %5695 = vmatprep.subr.bf16.mxu0 0
        %5696 = vmatpush1.bf16.msra.mxu0 %v5670
        %5697 = vmatprep.subr.bf16.mxu0 0
        %5698 = vmatpush1.bf16.msra.mxu0 %v5671
        %5699 = vmatprep.subr.bf16.mxu0 0
        %5700 = vmatpush1.bf16.msra.mxu0 0
        %5701 = vmatprep.subr.bf16.mxu0 0
        %5702 = vmatpush1.bf16.msra.mxu0 0
        %5703 = vmatprep.subr.bf16.mxu0 0
        %5704 = vmatpush1.bf16.msra.mxu0 0
        %5705 = vmatprep.subr.bf16.mxu0 0
        %5706 = vmatpush1.bf16.msra.mxu0 0
        %5707 = vmatprep.subr.bf16.mxu0 0
        %5708 = vmatpush1.bf16.msra.mxu0 0
        %5709 = vmatprep.subr.bf16.mxu0 0
        %5710 = vmatpush1.bf16.msra.mxu0 0
        %5711 = vmatprep.subr.bf16.mxu0 0
        %5712 = vmatpush1.bf16.msra.mxu0 0
        %5713 = vmatprep.subr.bf16.mxu0 0
        %5714 = vmatpush1.bf16.msra.mxu0 0
        %5715 = vmatprep.subr.bf16.mxu0 0
        %5716 = vmatpush1.bf16.msra.mxu0 0
        %5717 = vmatprep.mubr.bf16.mxu0 0
        %5718 = vmatmul.mubr.bf16.gmra.mrb[0].mxu0 %v5680
        %v5719 = vpop.f32.mrb[0].mxu0
        %v5720 = vadd.f32 0.0, %v5719
        %v5721 = vpop.f32.mrb[0].mxu0
        %v5722 = vpop.f32.mrb[0].mxu0
        %v5723 = vadd.f32 0.0, %v5722
        %v5724 = vpop.f32.mrb[0].mxu0
        %5725 = vmatprep.mubr.bf16.mxu0 0
        %5726 = vmatmul.mubr.bf16.gmra.mrb[0].mxu0 %v5683
        %v5727 = vpop.f32.mrb[0].mxu0
        %v5728 = vadd.f32 0.0, %v5727
        %v5729 = vpop.f32.mrb[0].mxu0
        %v5730 = vpop.f32.mrb[0].mxu0
        %v5731 = vadd.f32 0.0, %v5730
        %v5732 = vpop.f32.mrb[0].mxu0
        %5733 = vdwg.mxu0
        %5734 = vrot.lane.b32.xlu0 %v610, 48
        %v5735 = vpop.permute.xlu0 %5734
        %v5736 = vrot.slane %v5735, 3
        %v5737 = vlaneseq
        %v5738 = vshrl.u32 %v5737, 7
        %v5739 = vsub.s32 0, %v5738
        %v5740 = vrot.slane %v5736, %v5739
        %v5742 = vadd.f32 %v5720, %v5740
        %v5743 = vadd.f32 %v5723, %v5740
        %v5744 = vadd.f32 %v5728, %v5740
        %v5745 = vadd.f32 %v5731, %v5740
        %v5746 = vmax.f32 %v5742, 0.0
        %v5747 = vmax.f32 %v5743, 0.0
        %v5748 = vmax.f32 %v5744, 0.0
        %v5749 = vmax.f32 %v5745, 0.0
        %5754 = vrot.lane.b32.xlu0 %v5746, 48
        %v5755 = vpop.permute.xlu0 %5754
        %5756 = vrot.lane.b32.xlu0 %v5747, 48
        %v5757 = vpop.permute.xlu0 %5756
        %5758 = vrot.lane.b32.xlu0 %v5748, 48
        %v5759 = vpop.permute.xlu0 %5758
        %5760 = vrot.lane.b32.xlu0 %v5749, 48
        %v5761 = vpop.permute.xlu0 %5760
        %v5766 = vsel %vm4713, %v4443, %v5095
        %v5767 = vsel %vm4713, %v4444, %v5097
        %v5768 = vsel %vm4713, %v4445, %v5099
        %v5769 = vsel %vm4713, %v4446, %v5101
        %v5770 = vsel %vm4718, %v5766, %v5544
        %v5771 = vsel %vm4718, %v5767, %v5546
        %v5772 = vsel %vm4718, %v5768, %v5548
        %v5773 = vsel %vm4718, %v5769, %v5550
        %v5774 = vsel %vm4723, %v5770, %v5755
        %v5775 = vsel %vm4723, %v5771, %v5757
        %v5776 = vsel %vm4723, %v5772, %v5759
        %v5777 = vsel %vm4723, %v5773, %v5761
        %v5778 = vadd.f32 %v5774, %v4337
        %v5779 = vadd.f32 %v5775, %v4338
        %v5780 = vadd.f32 %v5776, %v4339
        %v5781 = vadd.f32 %v5777, %v4340
        %5782 = vst.msk [vmem:[%s592] sm:$0xff] %vm4375, %v5778
        %5783 = vst.msk [vmem:[%s592 + $0x8] sm:$0xff] %vm4375, %v5779
        %5784 = vst.msk [vmem:[%s592 + $0x10] sm:$0xff] %vm4375, %v5780
        %5785 = vst.msk [vmem:[%s592 + $0x18] sm:$0xff] %vm4375, %v5781
        %s5786 = sand.u32 %s253, 1
        %s5787 = scalar_lea.sflag [#allocation4], %s5786
        %s5788 = sand.u32 %s253, 1
        %s5789 = smul.addr %s5788, 32
        %s5790 = scalar_lea.vmem [#allocation16], %s5789
        // Predicated region
        $region85: #{net3_forward.1} parent=51 // pred_check
          %p5791 = pneg %p263
        $region86: #{net3_forward.1} parent=51 // pred_check_branch
          %5793 = sbr.rel (%p5791) target = $region88
        $region87: #{net3_forward.1} parent=51 // pred_region
          %s5795 = ssub.s32 512, 512
          %5796 = vsyncadd %s5787, %s5795
          %s5797 = smul.addr %s37, 4
          %s5798 = smul.addr %s5797, 128
          %s5799 = scalar_lea.hbm %s8, %s5798
          %s5800 = sshll.u32 %s5790, 4
          %s5801 = int_to_ptr.vmem [resolvable:$true] %s5800
          %5806 = dma.vmem_to_hbm [thread:$0]  %s5801, 512, %s5799, %s5787, 128, 128, 8
        $region88: #{net3_forward.1} parent=51 // pred_fallthru
          _
      $region52: #{net3_forward.1} parent=5 // pred_fallthru
        _
      %p5807 = scmp.le.s32.totalorder 2, %s32
      // Predicated region
      $region89: #{net3_forward.1} parent=5 // pred_check
        %p5808 = pneg %p5807
      $region90: #{net3_forward.1} parent=5 // pred_check_branch
        %5810 = sbr.rel (%p5808) target = $region92
      $region91: #{net3_forward.1} parent=5 // pred_region
        %s5811 = ssub.s32 %s32, 2
        // Predicated region
        $region93: #{net3_forward.1} parent=91 // pred_check
          %p5812 = pneg %p269
        $region94: #{net3_forward.1} parent=91 // pred_check_branch
          %5814 = sbr.rel (%p5812) target = $region96
        $region95: #{net3_forward.1} parent=91 // pred_region
          %s5815 = sand.u32 %s254, 1
          %s5816 = scalar_lea.sflag [#allocation4], %s5815
          %s5817 = sand.u32 %s254, 1
          %s5818 = smul.addr %s5817, 32
          %s5819 = scalar_lea.vmem [#allocation16], %s5818
          %5820 = dma.done %s5816, 512
        $region96: #{net3_forward.1} parent=91 // pred_fallthru
          _
      $region92: #{net3_forward.1} parent=5 // pred_fallthru
        _
    $region6: #{net3_forward.1} parent=1 // loop_footer
      %s36 = sadd.s32 1, %s32
    $region7: #{net3_forward.1} parent=1 // loop_footer_branch
      %31 = sbr.rel target = $region3
    $region8: #{net3_forward.1} parent=1 // loop_exit
      _
    %5821 = vsyncpa [#allocation3], 1
    %s5822 = scalar_lea.sflag [#allocation3], 1
    %5823 = vsyncpa %s5822, 1
    %5824 = vsyncpa [#allocation6], 1
    %s5825 = scalar_lea.sflag [#allocation6], 1
    %5826 = vsyncpa %s5825, 1
    %5827 = vsyncpa [#allocation9], 1
    %s5828 = scalar_lea.sflag [#allocation9], 1
    %5829 = vsyncpa %s5828, 1
    %5830 = vsyncpa [#allocation12], 1
    %s5831 = scalar_lea.sflag [#allocation12], 1
    %5832 = vsyncpa %s5831, 1
    %5833 = vsyncpa [#allocation15], 1
    %s5834 = scalar_lea.sflag [#allocation15], 1
    %5835 = vsyncpa %s5834, 1
    %5836 = vsyncpa [#allocation4], 1
    %s5837 = scalar_lea.sflag [#allocation4], 1
    %5838 = vsyncpa %s5837, 1

</llo_original>
